<compile_context>
chip_gen: v7x
topology: tpu7x:2x2x1
jax: 0.10.0
libtpu: 0.0.40
codegen_flags: <defaults>
</compile_context>

<pallas_src>
import functools

import jax
import jax.numpy as jnp
from jax import lax
from jax.experimental import pallas as pl
from jax.experimental.pallas import tpu as pltpu


def _round_up(x, m):
    return ((x + m - 1) // m) * m


# Probe whether this jax build supports BlockSpec(pipeline_mode=...) so the grid-invariant
# weight/bias operands can be single-buffered.
try:
    pl.BlockSpec((8, 128), lambda i: (0, 0), pipeline_mode=pl.Buffered(1))
    _HAS_PIPELINE_MODE = True
except Exception:  # pragma: no cover
    _HAS_PIPELINE_MODE = False


def _const_spec(block_shape, index_map):
    """BlockSpec for grid-invariant operands (constant index map): single buffer if supported."""
    if _HAS_PIPELINE_MODE:
        return pl.BlockSpec(block_shape, index_map, pipeline_mode=pl.Buffered(1))
    return pl.BlockSpec(block_shape, index_map)


def _vmem_budget_bytes():
    """~65% of capacity on 64 MiB parts (v7x), ~75% on 128 MiB parts (v5e/v6e)."""
    try:
        cap = int(pltpu.get_tpu_info().vmem_capacity_bytes)
    except Exception:  # pragma: no cover - fall back to smallest (v7x per-core) VMEM
        cap = 64 * 1024 * 1024
    frac = 0.65 if cap <= 64 * 1024 * 1024 else 0.75
    return int(cap * frac)


def _vmem_usage_bytes(th, W, Cin, Coutp, out_elem_bytes, weight_buffers):
    """Accurate per-step VMEM model (review fix)."""
    main_in = 2 * th * W * Cin * 2                     # bf16 main input block, double buffered
    halos = 2 * 2 * W * Cin * 2                        # two 1-row halo blocks, double buffered
    weights = weight_buffers * 9 * Cin * Coutp * 2     # folded bf16 weights
    bias = weight_buffers * Coutp * 4
    out = 2 * th * W * Coutp * out_elem_bytes          # output block, double buffered
    slab = th * W * 9 * Cin * 2                        # bf16 im2col scratch
    acc = th * W * Coutp * 4                           # live f32 matmul result / epilogue
    return main_in + halos + weights + bias + out + slab + acc


def _choose_strip_height(H, W, Cin, Coutp, out_elem_bytes, budget_bytes,
                         min_strips, weight_buffers):
    """Largest divisor of H that fits the VMEM model; honor min_strips when possible."""
    margin = 2 * 1024 * 1024                           # compiler / internal scratch headroom
    divisors = [d for d in range(1, H + 1) if H % d == 0]
    fitting = [d for d in divisors
               if _vmem_usage_bytes(d, W, Cin, Coutp, out_elem_bytes, weight_buffers)
               + margin <= budget_bytes]
    if not fitting:
        return 1
    if min_strips > 1:
        multi = [d for d in fitting if H // d >= min_strips]
        if multi:
            return max(multi)
    return max(fitting)


def _make_kernel(TH, W, Cin, Coutp, activation):
    """One grid step = one (TH, W) output row strip of one image."""
    C9 = 9 * Cin
    zdt = jnp.bfloat16

    def kernel(main_ref, top_ref, bot_ref, wk_ref, bias_ref, o_ref, slab_ref):
        h = pl.program_id(1)
        last = pl.num_programs(1) - 1

        # im2col: slab[r, c, tap*Cin + ci] = x[strip_row r + ky - 1, c + kx - 1, ci]
        # (zeros outside the image); written directly from the pipelined blocks, no staging copy.
        def put(dst_row, n_rows, tap, src):            # src: (n_rows, W, Cin) bf16
            kx = tap % 3
            c0 = tap * Cin
            if kx == 1:
                slab_ref[pl.ds(dst_row, n_rows), :, pl.ds(c0, Cin)] = src
            elif kx == 0 and W > 1:                    # dest col c <- src col c-1
                slab_ref[pl.ds(dst_row, n_rows), pl.ds(1, W - 1), pl.ds(c0, Cin)] = src[:, :W - 1, :]
            elif kx == 2 and W > 1:                    # dest col c <- src col c+1
                slab_ref[pl.ds(dst_row, n_rows), pl.ds(0, W - 1), pl.ds(c0, Cin)] = src[:, 1:, :]

        for ky in range(3):
            n_main = TH - abs(ky - 1)                  # strip rows fed from the main block
            src_row0 = max(0, ky - 1)
            dst_row0 = max(0, 1 - ky)
            for kx in range(3):
                tap = ky * 3 + kx
                if n_main > 0:
                    put(dst_row0, n_main, tap,
                        main_ref[0, pl.ds(src_row0, n_main), :, :])
                if ky == 0:                            # row 0 needs the row above the strip
                    put(0, 1, tap, top_ref[0])
                if ky == 2:                            # row TH-1 needs the row below the strip
                    put(TH - 1, 1, tap, bot_ref[0])

        # "SAME" left/right border columns of the kx=0 / kx=2 taps are zero.
        zero_col = jnp.zeros((TH, 1, Cin), zdt)
        for ky in range(3):
            slab_ref[:, pl.ds(0, 1), pl.ds((ky * 3 + 0) * Cin, Cin)] = zero_col
            slab_ref[:, pl.ds(W - 1, 1), pl.ds((ky * 3 + 2) * Cin, Cin)] = zero_col

        # "SAME" top/bottom border rows: zero the ky=0 taps on the first strip and the ky=2 taps
        # on the last strip (the clamped halo rows they were filled from are dummies there).
        @pl.when(h == 0)
        def _():
            slab_ref[pl.ds(0, 1), :, pl.ds(0, 3 * Cin)] = jnp.zeros((1, W, 3 * Cin), zdt)

        @pl.when(h == last)
        def _():
            slab_ref[pl.ds(TH - 1, 1), :, pl.ds(6 * Cin, 3 * Cin)] = jnp.zeros((1, W, 3 * Cin), zdt)

        # Single fused MXU matmul (K = 9*Cin), f32 accumulation, then folded bias/BN shift.
        y = jnp.dot(slab_ref[...].reshape(TH * W, C9), wk_ref[...],
                    preferred_element_type=jnp.float32)
        y = y + bias_ref[...]
        if activation:
            y = y * jax.nn.sigmoid(y)                  # Swish / SiLU
        o_ref[...] = y.reshape(1, TH, W, Coutp).astype(o_ref.dtype)

    return kernel


def separable_conv_block(x_nchw, params, *, activation=False, out_dtype=jnp.float32,
                         nhwc_output=False, vmem_budget_bytes=None):
    """Eval-mode SeparableConvBlock.  x_nchw: (N, Cin, H, W) f32 -> (N, Cout, H, W) out_dtype.

    Consumers that accept NHWC / bf16 can pass nhwc_output=True / out_dtype=jnp.bfloat16 to
    avoid the output slice + NCHW transpose HBM round trip (defaults keep module semantics).
    """
    w_dw, w_pw, b_pw = params["w_dw"], params["w_pw"], params["b_pw"]
    gamma, beta = params["gamma"], params["beta"]
    r_mean, r_var = params["r_mean"], params["r_var"]
    eps = 0.001

    N, Cin, H, W = x_nchw.shape
    Cout = w_pw.shape[0]
    Coutp = _round_up(Cout, 128)

    # ---- parameter folding, entirely in f32; one final cast to bf16 ----
    scale = gamma / jnp.sqrt(r_var + eps)                               # (Cout,)
    shift = beta - r_mean * scale
    wpw = jnp.transpose(w_pw[:, :, 0, 0], (1, 0)) * scale[None, :]      # (Cin, Cout): pw + BN scale
    wdw_taps = jnp.transpose(w_dw[:, 0, :, :].reshape(Cin, 9), (1, 0))  # (9, Cin)
    wk = wdw_taps[:, :, None] * wpw[None, :, :]                         # (9, Cin, Cout) f32
    wk = jnp.pad(wk, ((0, 0), (0, 0), (0, Coutp - Cout)))               # zero cols => exact
    wk = wk.reshape(9 * Cin, Coutp).astype(jnp.bfloat16)
    bias = jnp.pad(b_pw * scale + shift, (0, Coutp - Cout)).reshape(1, Coutp).astype(jnp.float32)

    # NCHW -> NHWC bf16; NO HBM pre-padding ("SAME" borders are produced in-kernel).
    x = jnp.transpose(x_nchw, (0, 2, 3, 1)).astype(jnp.bfloat16)        # (N, H, W, Cin)

    out_elem_bytes = jnp.dtype(out_dtype).itemsize
    budget = _vmem_budget_bytes() if vmem_budget_bytes is None else int(vmem_budget_bytes)
    weight_buffers = 1 if _HAS_PIPELINE_MODE else 2
    min_strips = 2 if N == 1 else 1            # keep both v7x TensorCores busy even at N == 1
    TH = _choose_strip_height(H, W, Cin, Coutp, out_elem_bytes, budget,
                              min_strips, weight_buffers)
    n_strips = H // TH

    kernel = _make_kernel(TH, W, Cin, Coutp, activation)

    cost = pl.CostEstimate(
        flops=2 * N * H * W * 9 * Cin * Coutp,
        transcendentals=(N * H * W * Coutp) if activation else 0,
        bytes_accessed=x.size * 2 + wk.size * 2 + bias.size * 4
                       + N * H * W * Coutp * out_elem_bytes,
    )

    out_padded = pl.pallas_call(
        kernel,
        out_shape=jax.ShapeDtypeStruct((N, H, W, Coutp), out_dtype),
        grid_spec=pltpu.PrefetchScalarGridSpec(
            num_scalar_prefetch=0,
            grid=(N, n_strips),
            in_specs=[
                # the TH input rows that coincide with this strip's output rows
                pl.BlockSpec((1, TH, W, Cin), lambda n, h: (n, h, 0, 0)),
                # row just above the strip (clamped at the top edge; zeroed in-kernel when h == 0)
                pl.BlockSpec((1, 1, W, Cin),
                             lambda n, h: (n, jnp.maximum(h * TH - 1, 0), 0, 0)),
                # row just below the strip (clamped at the bottom edge; zeroed when h == last)
                pl.BlockSpec((1, 1, W, Cin),
                             lambda n, h: (n, jnp.minimum((h + 1) * TH, H - 1), 0, 0)),
                # grid-invariant folded weights / bias: single-buffered
                _const_spec((9 * Cin, Coutp), lambda n, h: (0, 0)),
                _const_spec((1, Coutp), lambda n, h: (0, 0)),
            ],
            out_specs=pl.BlockSpec((1, TH, W, Coutp), lambda n, h: (n, h, 0, 0)),
            scratch_shapes=[pltpu.VMEM((TH, W, 9 * Cin), jnp.bfloat16)],
        ),
        compiler_params=pltpu.CompilerParams(
            dimension_semantics=("parallel", "parallel"),
            vmem_limit_bytes=budget,
        ),
        cost_estimate=cost,
    )(x, x, x, wk, bias)

    out = out_padded[..., :Cout] if Coutp != Cout else out_padded
    if nhwc_output:
        return out
    return jnp.transpose(out, (0, 3, 1, 2))              # back to NCHW (module semantics)


def _reference(x_nchw, params, *, activation=False):
    """Pure-JAX f32 reference (NCHW, mirrors the PyTorch module in eval mode)."""
    w_dw = params["w_dw"]
    w_pw = params["w_pw"]
    b_pw = params["b_pw"]
    eps = 0.001
    Cin = x_nchw.shape[1]
    dn = lax.conv_dimension_numbers(x_nchw.shape, w_dw.shape, ("NCHW", "OIHW", "NCHW"))
    y = lax.conv_general_dilated(x_nchw, w_dw, (1, 1), ((1, 1), (1, 1)),
                                 dimension_numbers=dn, feature_group_count=Cin)
    dn2 = lax.conv_dimension_numbers(y.shape, w_pw.shape, ("NCHW", "OIHW", "NCHW"))
    y = lax.conv_general_dilated(y, w_pw, (1, 1), ((0, 0), (0, 0)), dimension_numbers=dn2)
    y = y + b_pw[None, :, None, None]
    scale = params["gamma"] / jnp.sqrt(params["r_var"] + eps)
    shift = params["beta"] - params["r_mean"] * scale
    y = y * scale[None, :, None, None] + shift[None, :, None, None]
    if activation:
        y = y * jax.nn.sigmoid(y)
    return y


if __name__ == "__main__":
    def make_params(key, Cin, Cout):
        ks = jax.random.split(key, 7)
        return {
            "w_dw": 0.2 * jax.random.normal(ks[0], (Cin, 1, 3, 3), jnp.float32),
            "w_pw": 0.2 * jax.random.normal(ks[1], (Cout, Cin, 1, 1), jnp.float32),
            "b_pw": 0.1 * jax.random.normal(ks[2], (Cout,), jnp.float32),
            "gamma": 1.0 + 0.1 * jax.random.normal(ks[3], (Cout,), jnp.float32),
            "beta": 0.1 * jax.random.normal(ks[4], (Cout,), jnp.float32),
            "r_mean": 0.1 * jax.random.normal(ks[5], (Cout,), jnp.float32),
            "r_var": 1.0 + 0.1 * jnp.abs(jax.random.normal(ks[6], (Cout,), jnp.float32)),
        }

    key = jax.random.PRNGKey(0)
    k1, k2, k3, k4 = jax.random.split(key, 4)

    cases = [
        # (N, Cin, H, W, Cout, activation, (x_key, p_key))
        (2, 4, 16, 16, 8, False, (k1, k2)),   # single strip per image, swish off
        (1, 8, 32, 8, 16, True, (k3, k4)),    # N == 1 -> multi-strip (exercises halos), swish on
    ]
    for N, Cin, H, W, Cout, act, (kx_, kp_) in cases:
        x = jax.random.normal(kx_, (N, Cin, H, W), jnp.float32)
        params = make_params(kp_, Cin, Cout)
        fn = jax.jit(functools.partial(separable_conv_block, activation=act))
        out = jax.block_until_ready(fn(x, params))
        ref = _reference(x, params, activation=act)
        assert out.shape == (N, Cout, H, W), out.shape
        max_err = float(jnp.max(jnp.abs(out - ref)))
        # bf16 folded weights / bf16 activations with f32 accumulation vs. f32 reference.
        assert jnp.allclose(out, ref, atol=3e-2, rtol=3e-2), max_err

    print("KERNEL_OK")
</pallas_src>

<mosaic_0001>
module attributes {stable_mosaic.version = 11 : i64} {
  func.func @kernel(%arg0: i32, %arg1: i32, %arg2: memref<1x16x16x4xbf16, #tpu.memory_space<vmem>>, %arg3: memref<1x1x16x4xbf16, #tpu.memory_space<vmem>>, %arg4: memref<1x1x16x4xbf16, #tpu.memory_space<vmem>>, %arg5: memref<36x128xbf16, #tpu.memory_space<vmem>>, %arg6: memref<1x128xf32, #tpu.memory_space<vmem>>, %arg7: memref<1x16x16x128xf32, #tpu.memory_space<vmem>>, %arg8: memref<16x16x36xbf16, #tpu.memory_space<vmem>>) attributes {dimension_semantics = [#tpu.dimension_semantics<parallel>, #tpu.dimension_semantics<parallel>], iteration_bounds = array<i64: 2, 1>, scalar_prefetch = 0 : i64, scratch_operands = 1 : i64, tpu.core_type = #tpu.core_type<tc>, window_params = [{transform_indices = @transform_0, window_bounds = array<i64: 1, 16, 16, 4>}, {transform_indices = @transform_1, window_bounds = array<i64: 1, 1, 16, 4>}, {transform_indices = @transform_2, window_bounds = array<i64: 1, 1, 16, 4>}, {pipeline_mode = #tpu.pipeline_mode<synchronous>, transform_indices = @transform_3, window_bounds = array<i64: 36, 128>}, {pipeline_mode = #tpu.pipeline_mode<synchronous>, transform_indices = @transform_4, window_bounds = array<i64: 1, 128>}, {transform_indices = @transform_5, window_bounds = array<i64: 1, 16, 16, 128>}]} {
    %c0 = arith.constant 0 : index
    %c0_0 = arith.constant 0 : index
    %c0_1 = arith.constant 0 : index
    %c0_2 = arith.constant 0 : index
    %0 = vector.load %arg2[%c0, %c0_0, %c0_1, %c0_2] : memref<1x16x16x4xbf16, #tpu.memory_space<vmem>>, vector<1x15x16x4xbf16>
    %1 = vector.shape_cast %0 : vector<1x15x16x4xbf16> to vector<15x16x4xbf16>
    %2 = vector.extract_strided_slice %1 {offsets = [0, 0, 0], sizes = [15, 15, 4], strides = [1, 1, 1]} : vector<15x16x4xbf16> to vector<15x15x4xbf16>
    %c1 = arith.constant 1 : index
    %c1_3 = arith.constant 1 : index
    %c0_4 = arith.constant 0 : index
    %3 = vector.load %arg8[%c1, %c1_3, %c0_4] : memref<16x16x36xbf16, #tpu.memory_space<vmem>>, vector<15x15x4xbf16>
    tpu.vector_store %arg8[%c1, %c1_3, %c0_4], %2 {strides = array<i32>} : memref<16x16x36xbf16, #tpu.memory_space<vmem>>, vector<15x15x4xbf16>,
    %c0_5 = arith.constant 0 : index
    %c0_6 = arith.constant 0 : index
    %c0_7 = arith.constant 0 : index
    %c0_8 = arith.constant 0 : index
    %4 = vector.load %arg3[%c0_5, %c0_6, %c0_7, %c0_8] : memref<1x1x16x4xbf16, #tpu.memory_space<vmem>>, vector<1x1x16x4xbf16>
    %5 = vector.shape_cast %4 : vector<1x1x16x4xbf16> to vector<1x16x4xbf16>
    %6 = vector.extract_strided_slice %5 {offsets = [0, 0, 0], sizes = [1, 15, 4], strides = [1, 1, 1]} : vector<1x16x4xbf16> to vector<1x15x4xbf16>
    %c0_9 = arith.constant 0 : index
    %c1_10 = arith.constant 1 : index
    %c0_11 = arith.constant 0 : index
    %7 = vector.load %arg8[%c0_9, %c1_10, %c0_11] : memref<16x16x36xbf16, #tpu.memory_space<vmem>>, vector<1x15x4xbf16>
    tpu.vector_store %arg8[%c0_9, %c1_10, %c0_11], %6 {strides = array<i32>} : memref<16x16x36xbf16, #tpu.memory_space<vmem>>, vector<1x15x4xbf16>,
    %c0_12 = arith.constant 0 : index
    %c0_13 = arith.constant 0 : index
    %c0_14 = arith.constant 0 : index
    %c0_15 = arith.constant 0 : index
    %8 = vector.load %arg2[%c0_12, %c0_13, %c0_14, %c0_15] : memref<1x16x16x4xbf16, #tpu.memory_space<vmem>>, vector<1x15x16x4xbf16>
    %9 = vector.shape_cast %8 : vector<1x15x16x4xbf16> to vector<15x16x4xbf16>
    %c1_16 = arith.constant 1 : index
    %c0_17 = arith.constant 0 : index
    %c4 = arith.constant 4 : index
    %10 = vector.load %arg8[%c1_16, %c0_17, %c4] : memref<16x16x36xbf16, #tpu.memory_space<vmem>>, vector<15x16x4xbf16>
    tpu.vector_store %arg8[%c1_16, %c0_17, %c4], %9 {strides = array<i32>} : memref<16x16x36xbf16, #tpu.memory_space<vmem>>, vector<15x16x4xbf16>,
    %c0_18 = arith.constant 0 : index
    %c0_19 = arith.constant 0 : index
    %c0_20 = arith.constant 0 : index
    %c0_21 = arith.constant 0 : index
    %11 = vector.load %arg3[%c0_18, %c0_19, %c0_20, %c0_21] : memref<1x1x16x4xbf16, #tpu.memory_space<vmem>>, vector<1x1x16x4xbf16>
    %12 = vector.shape_cast %11 : vector<1x1x16x4xbf16> to vector<1x16x4xbf16>
    %c0_22 = arith.constant 0 : index
    %c0_23 = arith.constant 0 : index
    %c4_24 = arith.constant 4 : index
    %13 = vector.load %arg8[%c0_22, %c0_23, %c4_24] : memref<16x16x36xbf16, #tpu.memory_space<vmem>>, vector<1x16x4xbf16>
    tpu.vector_store %arg8[%c0_22, %c0_23, %c4_24], %12 {strides = array<i32>} : memref<16x16x36xbf16, #tpu.memory_space<vmem>>, vector<1x16x4xbf16>,
    %c0_25 = arith.constant 0 : index
    %c0_26 = arith.constant 0 : index
    %c0_27 = arith.constant 0 : index
    %c0_28 = arith.constant 0 : index
    %14 = vector.load %arg2[%c0_25, %c0_26, %c0_27, %c0_28] : memref<1x16x16x4xbf16, #tpu.memory_space<vmem>>, vector<1x15x16x4xbf16>
    %15 = vector.shape_cast %14 : vector<1x15x16x4xbf16> to vector<15x16x4xbf16>
    %16 = vector.extract_strided_slice %15 {offsets = [0, 1, 0], sizes = [15, 15, 4], strides = [1, 1, 1]} : vector<15x16x4xbf16> to vector<15x15x4xbf16>
    %c1_29 = arith.constant 1 : index
    %c0_30 = arith.constant 0 : index
    %c8 = arith.constant 8 : index
    %17 = vector.load %arg8[%c1_29, %c0_30, %c8] : memref<16x16x36xbf16, #tpu.memory_space<vmem>>, vector<15x15x4xbf16>
    tpu.vector_store %arg8[%c1_29, %c0_30, %c8], %16 {strides = array<i32>} : memref<16x16x36xbf16, #tpu.memory_space<vmem>>, vector<15x15x4xbf16>,
    %c0_31 = arith.constant 0 : index
    %c0_32 = arith.constant 0 : index
    %c0_33 = arith.constant 0 : index
    %c0_34 = arith.constant 0 : index
    %18 = vector.load %arg3[%c0_31, %c0_32, %c0_33, %c0_34] : memref<1x1x16x4xbf16, #tpu.memory_space<vmem>>, vector<1x1x16x4xbf16>
    %19 = vector.shape_cast %18 : vector<1x1x16x4xbf16> to vector<1x16x4xbf16>
    %20 = vector.extract_strided_slice %19 {offsets = [0, 1, 0], sizes = [1, 15, 4], strides = [1, 1, 1]} : vector<1x16x4xbf16> to vector<1x15x4xbf16>
    %c0_35 = arith.constant 0 : index
    %c0_36 = arith.constant 0 : index
    %c8_37 = arith.constant 8 : index
    %21 = vector.load %arg8[%c0_35, %c0_36, %c8_37] : memref<16x16x36xbf16, #tpu.memory_space<vmem>>, vector<1x15x4xbf16>
    tpu.vector_store %arg8[%c0_35, %c0_36, %c8_37], %20 {strides = array<i32>} : memref<16x16x36xbf16, #tpu.memory_space<vmem>>, vector<1x15x4xbf16>,
    %c0_38 = arith.constant 0 : index
    %c0_39 = arith.constant 0 : index
    %c0_40 = arith.constant 0 : index
    %c0_41 = arith.constant 0 : index
    %22 = vector.load %arg2[%c0_38, %c0_39, %c0_40, %c0_41] : memref<1x16x16x4xbf16, #tpu.memory_space<vmem>>, vector<1x16x16x4xbf16>
    %23 = vector.shape_cast %22 : vector<1x16x16x4xbf16> to vector<16x16x4xbf16>
    %24 = vector.extract_strided_slice %23 {offsets = [0, 0, 0], sizes = [16, 15, 4], strides = [1, 1, 1]} : vector<16x16x4xbf16> to vector<16x15x4xbf16>
    %c0_42 = arith.constant 0 : index
    %c1_43 = arith.constant 1 : index
    %c12 = arith.constant 12 : index
    %25 = vector.load %arg8[%c0_42, %c1_43, %c12] : memref<16x16x36xbf16, #tpu.memory_space<vmem>>, vector<16x15x4xbf16>
    tpu.vector_store %arg8[%c0_42, %c1_43, %c12], %24 {strides = array<i32>} : memref<16x16x36xbf16, #tpu.memory_space<vmem>>, vector<16x15x4xbf16>,
    %c0_44 = arith.constant 0 : index
    %c0_45 = arith.constant 0 : index
    %c0_46 = arith.constant 0 : index
    %c0_47 = arith.constant 0 : index
    %26 = vector.load %arg2[%c0_44, %c0_45, %c0_46, %c0_47] : memref<1x16x16x4xbf16, #tpu.memory_space<vmem>>, vector<1x16x16x4xbf16>
    %27 = vector.shape_cast %26 : vector<1x16x16x4xbf16> to vector<16x16x4xbf16>
    %c0_48 = arith.constant 0 : index
    %c0_49 = arith.constant 0 : index
    %c16 = arith.constant 16 : index
    %28 = vector.load %arg8[%c0_48, %c0_49, %c16] : memref<16x16x36xbf16, #tpu.memory_space<vmem>>, vector<16x16x4xbf16>
    tpu.vector_store %arg8[%c0_48, %c0_49, %c16], %27 {strides = array<i32>} : memref<16x16x36xbf16, #tpu.memory_space<vmem>>, vector<16x16x4xbf16>,
    %c0_50 = arith.constant 0 : index
    %c0_51 = arith.constant 0 : index
    %c0_52 = arith.constant 0 : index
    %c0_53 = arith.constant 0 : index
    %29 = vector.load %arg2[%c0_50, %c0_51, %c0_52, %c0_53] : memref<1x16x16x4xbf16, #tpu.memory_space<vmem>>, vector<1x16x16x4xbf16>
    %30 = vector.shape_cast %29 : vector<1x16x16x4xbf16> to vector<16x16x4xbf16>
    %31 = vector.extract_strided_slice %30 {offsets = [0, 1, 0], sizes = [16, 15, 4], strides = [1, 1, 1]} : vector<16x16x4xbf16> to vector<16x15x4xbf16>
    %c0_54 = arith.constant 0 : index
    %c0_55 = arith.constant 0 : index
    %c20 = arith.constant 20 : index
    %32 = vector.load %arg8[%c0_54, %c0_55, %c20] : memref<16x16x36xbf16, #tpu.memory_space<vmem>>, vector<16x15x4xbf16>
    tpu.vector_store %arg8[%c0_54, %c0_55, %c20], %31 {strides = array<i32>} : memref<16x16x36xbf16, #tpu.memory_space<vmem>>, vector<16x15x4xbf16>,
    %c0_56 = arith.constant 0 : index
    %c1_57 = arith.constant 1 : index
    %c0_58 = arith.constant 0 : index
    %c0_59 = arith.constant 0 : index
    %33 = vector.load %arg2[%c0_56, %c1_57, %c0_58, %c0_59] : memref<1x16x16x4xbf16, #tpu.memory_space<vmem>>, vector<1x15x16x4xbf16>
    %34 = vector.shape_cast %33 : vector<1x15x16x4xbf16> to vector<15x16x4xbf16>
    %35 = vector.extract_strided_slice %34 {offsets = [0, 0, 0], sizes = [15, 15, 4], strides = [1, 1, 1]} : vector<15x16x4xbf16> to vector<15x15x4xbf16>
    %c0_60 = arith.constant 0 : index
    %c1_61 = arith.constant 1 : index
    %c24 = arith.constant 24 : index
    %36 = vector.load %arg8[%c0_60, %c1_61, %c24] : memref<16x16x36xbf16, #tpu.memory_space<vmem>>, vector<15x15x4xbf16>
    tpu.vector_store %arg8[%c0_60, %c1_61, %c24], %35 {strides = array<i32>} : memref<16x16x36xbf16, #tpu.memory_space<vmem>>, vector<15x15x4xbf16>,
    %c0_62 = arith.constant 0 : index
    %c0_63 = arith.constant 0 : index
    %c0_64 = arith.constant 0 : index
    %c0_65 = arith.constant 0 : index
    %37 = vector.load %arg4[%c0_62, %c0_63, %c0_64, %c0_65] : memref<1x1x16x4xbf16, #tpu.memory_space<vmem>>, vector<1x1x16x4xbf16>
    %38 = vector.shape_cast %37 : vector<1x1x16x4xbf16> to vector<1x16x4xbf16>
    %39 = vector.extract_strided_slice %38 {offsets = [0, 0, 0], sizes = [1, 15, 4], strides = [1, 1, 1]} : vector<1x16x4xbf16> to vector<1x15x4xbf16>
    %c15 = arith.constant 15 : index
    %c1_66 = arith.constant 1 : index
    %c24_67 = arith.constant 24 : index
    %40 = vector.load %arg8[%c15, %c1_66, %c24_67] : memref<16x16x36xbf16, #tpu.memory_space<vmem>>, vector<1x15x4xbf16>
    tpu.vector_store %arg8[%c15, %c1_66, %c24_67], %39 {strides = array<i32>} : memref<16x16x36xbf16, #tpu.memory_space<vmem>>, vector<1x15x4xbf16>,
    %c0_68 = arith.constant 0 : index
    %c1_69 = arith.constant 1 : index
    %c0_70 = arith.constant 0 : index
    %c0_71 = arith.constant 0 : index
    %41 = vector.load %arg2[%c0_68, %c1_69, %c0_70, %c0_71] : memref<1x16x16x4xbf16, #tpu.memory_space<vmem>>, vector<1x15x16x4xbf16>
    %42 = vector.shape_cast %41 : vector<1x15x16x4xbf16> to vector<15x16x4xbf16>
    %c0_72 = arith.constant 0 : index
    %c0_73 = arith.constant 0 : index
    %c28 = arith.constant 28 : index
    %43 = vector.load %arg8[%c0_72, %c0_73, %c28] : memref<16x16x36xbf16, #tpu.memory_space<vmem>>, vector<15x16x4xbf16>
    tpu.vector_store %arg8[%c0_72, %c0_73, %c28], %42 {strides = array<i32>} : memref<16x16x36xbf16, #tpu.memory_space<vmem>>, vector<15x16x4xbf16>,
    %c0_74 = arith.constant 0 : index
    %c0_75 = arith.constant 0 : index
    %c0_76 = arith.constant 0 : index
    %c0_77 = arith.constant 0 : index
    %44 = vector.load %arg4[%c0_74, %c0_75, %c0_76, %c0_77] : memref<1x1x16x4xbf16, #tpu.memory_space<vmem>>, vector<1x1x16x4xbf16>
    %45 = vector.shape_cast %44 : vector<1x1x16x4xbf16> to vector<1x16x4xbf16>
    %c15_78 = arith.constant 15 : index
    %c0_79 = arith.constant 0 : index
    %c28_80 = arith.constant 28 : index
    %46 = vector.load %arg8[%c15_78, %c0_79, %c28_80] : memref<16x16x36xbf16, #tpu.memory_space<vmem>>, vector<1x16x4xbf16>
    tpu.vector_store %arg8[%c15_78, %c0_79, %c28_80], %45 {strides = array<i32>} : memref<16x16x36xbf16, #tpu.memory_space<vmem>>, vector<1x16x4xbf16>,
    %c0_81 = arith.constant 0 : index
    %c1_82 = arith.constant 1 : index
    %c0_83 = arith.constant 0 : index
    %c0_84 = arith.constant 0 : index
    %47 = vector.load %arg2[%c0_81, %c1_82, %c0_83, %c0_84] : memref<1x16x16x4xbf16, #tpu.memory_space<vmem>>, vector<1x15x16x4xbf16>
    %48 = vector.shape_cast %47 : vector<1x15x16x4xbf16> to vector<15x16x4xbf16>
    %49 = vector.extract_strided_slice %48 {offsets = [0, 1, 0], sizes = [15, 15, 4], strides = [1, 1, 1]} : vector<15x16x4xbf16> to vector<15x15x4xbf16>
    %c0_85 = arith.constant 0 : index
    %c0_86 = arith.constant 0 : index
    %c32 = arith.constant 32 : index
    %50 = vector.load %arg8[%c0_85, %c0_86, %c32] : memref<16x16x36xbf16, #tpu.memory_space<vmem>>, vector<15x15x4xbf16>
    tpu.vector_store %arg8[%c0_85, %c0_86, %c32], %49 {strides = array<i32>} : memref<16x16x36xbf16, #tpu.memory_space<vmem>>, vector<15x15x4xbf16>,
    %c0_87 = arith.constant 0 : index
    %c0_88 = arith.constant 0 : index
    %c0_89 = arith.constant 0 : index
    %c0_90 = arith.constant 0 : index
    %51 = vector.load %arg4[%c0_87, %c0_88, %c0_89, %c0_90] : memref<1x1x16x4xbf16, #tpu.memory_space<vmem>>, vector<1x1x16x4xbf16>
    %52 = vector.shape_cast %51 : vector<1x1x16x4xbf16> to vector<1x16x4xbf16>
    %53 = vector.extract_strided_slice %52 {offsets = [0, 1, 0], sizes = [1, 15, 4], strides = [1, 1, 1]} : vector<1x16x4xbf16> to vector<1x15x4xbf16>
    %c15_91 = arith.constant 15 : index
    %c0_92 = arith.constant 0 : index
    %c32_93 = arith.constant 32 : index
    %54 = vector.load %arg8[%c15_91, %c0_92, %c32_93] : memref<16x16x36xbf16, #tpu.memory_space<vmem>>, vector<1x15x4xbf16>
    tpu.vector_store %arg8[%c15_91, %c0_92, %c32_93], %53 {strides = array<i32>} : memref<16x16x36xbf16, #tpu.memory_space<vmem>>, vector<1x15x4xbf16>,
    %cst = arith.constant 0.000000e+00 : bf16
    %55 = vector.broadcast %cst : bf16 to vector<16x1x4xbf16>
    %c0_94 = arith.constant 0 : index
    %c0_95 = arith.constant 0 : index
    %c0_96 = arith.constant 0 : index
    %56 = vector.load %arg8[%c0_94, %c0_95, %c0_96] : memref<16x16x36xbf16, #tpu.memory_space<vmem>>, vector<16x1x4xbf16>
    tpu.vector_store %arg8[%c0_94, %c0_95, %c0_96], %55 {strides = array<i32>} : memref<16x16x36xbf16, #tpu.memory_space<vmem>>, vector<16x1x4xbf16>,
    %c0_97 = arith.constant 0 : index
    %c15_98 = arith.constant 15 : index
    %c8_99 = arith.constant 8 : index
    %57 = vector.load %arg8[%c0_97, %c15_98, %c8_99] : memref<16x16x36xbf16, #tpu.memory_space<vmem>>, vector<16x1x4xbf16>
    tpu.vector_store %arg8[%c0_97, %c15_98, %c8_99], %55 {strides = array<i32>} : memref<16x16x36xbf16, #tpu.memory_space<vmem>>, vector<16x1x4xbf16>,
    %c0_100 = arith.constant 0 : index
    %c0_101 = arith.constant 0 : index
    %c12_102 = arith.constant 12 : index
    %58 = vector.load %arg8[%c0_100, %c0_101, %c12_102] : memref<16x16x36xbf16, #tpu.memory_space<vmem>>, vector<16x1x4xbf16>
    tpu.vector_store %arg8[%c0_100, %c0_101, %c12_102], %55 {strides = array<i32>} : memref<16x16x36xbf16, #tpu.memory_space<vmem>>, vector<16x1x4xbf16>,
    %c0_103 = arith.constant 0 : index
    %c15_104 = arith.constant 15 : index
    %c20_105 = arith.constant 20 : index
    %59 = vector.load %arg8[%c0_103, %c15_104, %c20_105] : memref<16x16x36xbf16, #tpu.memory_space<vmem>>, vector<16x1x4xbf16>
    tpu.vector_store %arg8[%c0_103, %c15_104, %c20_105], %55 {strides = array<i32>} : memref<16x16x36xbf16, #tpu.memory_space<vmem>>, vector<16x1x4xbf16>,
    %c0_106 = arith.constant 0 : index
    %c0_107 = arith.constant 0 : index
    %c24_108 = arith.constant 24 : index
    %60 = vector.load %arg8[%c0_106, %c0_107, %c24_108] : memref<16x16x36xbf16, #tpu.memory_space<vmem>>, vector<16x1x4xbf16>
    tpu.vector_store %arg8[%c0_106, %c0_107, %c24_108], %55 {strides = array<i32>} : memref<16x16x36xbf16, #tpu.memory_space<vmem>>, vector<16x1x4xbf16>,
    %c0_109 = arith.constant 0 : index
    %c15_110 = arith.constant 15 : index
    %c32_111 = arith.constant 32 : index
    %61 = vector.load %arg8[%c0_109, %c15_110, %c32_111] : memref<16x16x36xbf16, #tpu.memory_space<vmem>>, vector<16x1x4xbf16>
    tpu.vector_store %arg8[%c0_109, %c15_110, %c32_111], %55 {strides = array<i32>} : memref<16x16x36xbf16, #tpu.memory_space<vmem>>, vector<16x1x4xbf16>,
    %c0_i32 = arith.constant 0 : i32
    %62 = arith.cmpi eq, %arg1, %c0_i32 : i32
    %63 = arith.extui %62 : i1 to i32
    %c0_i32_112 = arith.constant 0 : i32
    %64 = arith.cmpi ne, %63, %c0_i32_112 : i32
    scf.if %64 {
      %cst_127 = arith.constant 0.000000e+00 : bf16
      %77 = vector.broadcast %cst_127 : bf16 to vector<1x16x12xbf16>
      %c0_128 = arith.constant 0 : index
      %c0_129 = arith.constant 0 : index
      %c0_130 = arith.constant 0 : index
      %78 = vector.load %arg8[%c0_128, %c0_129, %c0_130] : memref<16x16x36xbf16, #tpu.memory_space<vmem>>, vector<1x16x12xbf16>
      tpu.vector_store %arg8[%c0_128, %c0_129, %c0_130], %77 {strides = array<i32>} : memref<16x16x36xbf16, #tpu.memory_space<vmem>>, vector<1x16x12xbf16>,
    } else {
    }
    %c0_i32_113 = arith.constant 0 : i32
    %65 = arith.cmpi eq, %arg1, %c0_i32_113 : i32
    %66 = arith.extui %65 : i1 to i32
    %c0_i32_114 = arith.constant 0 : i32
    %67 = arith.cmpi ne, %66, %c0_i32_114 : i32
    scf.if %67 {
      %cst_127 = arith.constant 0.000000e+00 : bf16
      %77 = vector.broadcast %cst_127 : bf16 to vector<1x16x12xbf16>
      %c15_128 = arith.constant 15 : index
      %c0_129 = arith.constant 0 : index
      %c24_130 = arith.constant 24 : index
      %78 = vector.load %arg8[%c15_128, %c0_129, %c24_130] : memref<16x16x36xbf16, #tpu.memory_space<vmem>>, vector<1x16x12xbf16>
      tpu.vector_store %arg8[%c15_128, %c0_129, %c24_130], %77 {strides = array<i32>} : memref<16x16x36xbf16, #tpu.memory_space<vmem>>, vector<1x16x12xbf16>,
    } else {
    }
    %c0_115 = arith.constant 0 : index
    %c0_116 = arith.constant 0 : index
    %c0_117 = arith.constant 0 : index
    %68 = vector.load %arg8[%c0_115, %c0_116, %c0_117] : memref<16x16x36xbf16, #tpu.memory_space<vmem>>, vector<16x16x36xbf16>
    %69 = vector.shape_cast %68 : vector<16x16x36xbf16> to vector<256x36xbf16>
    %c0_118 = arith.constant 0 : index
    %c0_119 = arith.constant 0 : index
    %70 = vector.load %arg5[%c0_118, %c0_119] : memref<36x128xbf16, #tpu.memory_space<vmem>>, vector<36x128xbf16>
    %cst_120 = arith.constant dense<0.000000e+00> : vector<256x128xf32>
    %71 = tpu.matmul %69, %70, %cst_120 {dimension_numbers = #tpu.dot_dimension_numbers<[1], [0], [0], [1], [0, 0, 1, 1], [], []>} : vector<256x36xbf16>, vector<36x128xbf16>, vector<256x128xf32> -> vector<256x128xf32>
    %c0_121 = arith.constant 0 : index
    %c0_122 = arith.constant 0 : index
    %72 = vector.load %arg6[%c0_121, %c0_122] : memref<1x128xf32, #tpu.memory_space<vmem>>, vector<1x128xf32>
    %73 = vector.broadcast %72 : vector<1x128xf32> to vector<256x128xf32>
    %74 = arith.addf %71, %73 : vector<256x128xf32>
    %75 = vector.shape_cast %74 : vector<256x128xf32> to vector<1x16x16x128xf32>
    %c0_123 = arith.constant 0 : index
    %c0_124 = arith.constant 0 : index
    %c0_125 = arith.constant 0 : index
    %c0_126 = arith.constant 0 : index
    %76 = vector.load %arg7[%c0_123, %c0_124, %c0_125, %c0_126] : memref<1x16x16x128xf32, #tpu.memory_space<vmem>>, vector<1x16x16x128xf32>
    tpu.vector_store %arg7[%c0_123, %c0_124, %c0_125, %c0_126], %75 {strides = array<i32>} : memref<1x16x16x128xf32, #tpu.memory_space<vmem>>, vector<1x16x16x128xf32>,
    return
  }
  func.func @transform_0(%arg0: i32, %arg1: i32) -> (i32, i32, i32, i32) {
    %c0_i32 = arith.constant 0 : i32
    %c0_i32_0 = arith.constant 0 : i32
    %c0_i32_1 = arith.constant 0 : i32
    return %arg0, %arg1, %c0_i32, %c0_i32_0 : i32, i32, i32, i32
  }
  func.func @transform_1(%arg0: i32, %arg1: i32) -> (i32, i32, i32, i32) {
    %c16_i32 = arith.constant 16 : i32
    %0 = arith.muli %arg1, %c16_i32 : i32
    %c1_i32 = arith.constant 1 : i32
    %1 = arith.subi %0, %c1_i32 : i32
    %c0_i32 = arith.constant 0 : i32
    %2 = arith.maxsi %1, %c0_i32 : i32
    %c0_i32_0 = arith.constant 0 : i32
    %c0_i32_1 = arith.constant 0 : i32
    %c0_i32_2 = arith.constant 0 : i32
    return %arg0, %2, %c0_i32_0, %c0_i32_1 : i32, i32, i32, i32
  }
  func.func @transform_2(%arg0: i32, %arg1: i32) -> (i32, i32, i32, i32) {
    %c1_i32 = arith.constant 1 : i32
    %0 = arith.addi %arg1, %c1_i32 : i32
    %c16_i32 = arith.constant 16 : i32
    %1 = arith.muli %0, %c16_i32 : i32
    %c15_i32 = arith.constant 15 : i32
    %2 = arith.minsi %1, %c15_i32 : i32
    %c0_i32 = arith.constant 0 : i32
    %c0_i32_0 = arith.constant 0 : i32
    %c0_i32_1 = arith.constant 0 : i32
    return %arg0, %2, %c0_i32, %c0_i32_0 : i32, i32, i32, i32
  }
  func.func @transform_3(%arg0: i32, %arg1: i32) -> (i32, i32) {
    %c0_i32 = arith.constant 0 : i32
    %c0_i32_0 = arith.constant 0 : i32
    %c0_i32_1 = arith.constant 0 : i32
    return %c0_i32, %c0_i32_0 : i32, i32
  }
  func.func @transform_4(%arg0: i32, %arg1: i32) -> (i32, i32) {
    %c0_i32 = arith.constant 0 : i32
    %c0_i32_0 = arith.constant 0 : i32
    %c0_i32_1 = arith.constant 0 : i32
    return %c0_i32, %c0_i32_0 : i32, i32
  }
  func.func @transform_5(%arg0: i32, %arg1: i32) -> (i32, i32, i32, i32) {
    %c0_i32 = arith.constant 0 : i32
    %c0_i32_0 = arith.constant 0 : i32
    %c0_i32_1 = arith.constant 0 : i32
    return %arg0, %arg1, %c0_i32, %c0_i32_0 : i32, i32, i32, i32
  }
}

</mosaic_0001>

<llo_original>
// kernel: separable_conv_block.1
$region0: #{separable_conv_block.1}
  #allocation0 [shape = 'u32[]', space=smem, size = 0x4, offset = 0x4, fixed_abs, tag = 'smem constant byte address 0x4 - core index']
  #allocation1 [shape = 'u32[144,128]{1,0:T(1,128)}', space=vmem, size = 0x12000, scoped, tag = 'internal scratch']
  #allocation2 [shape = 'bf16[16,16,36]{2,1,0:T(16,128)(2,1)}', space=vmem, size = 0x10000, scoped, tag = 'scratch operand']
  %s0 = inlined_call_operand.vmem [shape: bf16[2,16,16,4], index: 0, kind: input, shape index: {}, may-alias: {0,1,2}]
  %s1 = inlined_call_operand.vmem [shape: bf16[2,16,16,4], index: 1, kind: input, shape index: {}, may-alias: {0,1,2}]
  %s2 = inlined_call_operand.vmem [shape: bf16[2,16,16,4], index: 2, kind: input, shape index: {}, may-alias: {0,1,2}]
  %s3 = inlined_call_operand.vmem [shape: bf16[36,128], index: 3, kind: input, shape index: {}]
  %s4 = inlined_call_operand.vmem [shape: f32[1,128], index: 4, kind: input, shape index: {}]
  %s5 = inlined_call_operand.vmem [shape: f32[2,16,16,128], index: 5, kind: output, shape index: {}]
  %s6 = sld [smem:[#allocation0]]
  $region57: #{separable_conv_block.1} parent=0
    _
  %s8 = ssub.s32 1, %s6
  %s9 = scalar_select 0, %s8, %s6
  loop: start=0, step=1, limit=4
  $region2: #{separable_conv_block.1} parent=0 // loop_pre_header
    _
  $region3: #{separable_conv_block.1} parent=0 // loop_header
    %s11 = sphi 0, %s15
    %p12 = scmp.ge.s32.totalorder %s11, 4
    %s18 = sphi 0, %s30
    %s19 = sphi 0, %s26
    %s20 = sphi 0, %s18
    %s21 = sphi 0, %s19
    %s22 = sphi 0, %s20
    %s23 = sphi 0, %s21
    %s35 = sphi 0, %s37
    %s38 = sphi 0, %s35
    %s39 = sphi 0, %s38
    %s55 = sphi 0, %s39
    %s71 = sphi 0, %s73
    %s74 = sphi 0, %s71
    %s75 = sphi 0, %s74
    %s91 = sphi 0, %s75
    %s107 = sphi 0, %s109
    %s110 = sphi 0, %s107
    %s111 = sphi 0, %s110
    %s127 = sphi 0, %s111
    %s131 = sphi 0, %s131
    %s133 = sphi 0, %s131
    %s134 = sphi 0, %s133
    %s148 = sphi 0, %s134
    %s152 = sphi 0, %s152
    %s154 = sphi 0, %s152
    %s155 = sphi 0, %s154
    %s169 = sphi 0, %s155
    %s177 = sphi 0, %s179
    %s180 = sphi 0, %s177
    %s181 = sphi 0, %s180
    %s197 = sphi 0, %s181
  $region4: #{separable_conv_block.1} parent=0 // loop_header_branch
    %14 = sbr.rel (%p12) target = $region8
  $region5: #{separable_conv_block.1} parent=0 // loop_body
    %s16 = ssub.s32 %s11, 1
    %s17 = ssub.s32 %s11, 2
    %s24 = sadd.s32 1, %s19
    %p25 = scmp.ge.s32.totalorder %s24, 1
    %s26 = scalar_select %p25, 0, %s24
    %s27 = sadd.s32 1, %s18
    %s28 = scalar_select %p25, %s27, %s18
    %p29 = scmp.ge.s32.totalorder %s28, 2
    %s30 = scalar_select %p29, 0, %s28
    %s31 = ssub.s32 %s18, %s30
    %s32 = ssub.s32 %s19, %s26
    %s33 = sor.u32 %s31, %s32
    %p34 = scmp.eq.s32.totalorder %s33, 0
    %s36 = sadd.s32 %s35, 1
    %s37 = scalar_select %p34, %s35, %s36
    %p40 = pneg %p34
    %p41 = scmp.eq.s32.totalorder %s11, 1
    %p42 = por %p40, %p41
    %p43 = scmp.ne.s32.totalorder %s35, %s38
    %p44 = scmp.eq.s32.totalorder %s11, 0
    %p45 = por %p43, %p44
    %p46 = scmp.ne.s32.totalorder %s35, %s38
    %p47 = scmp.eq.s32.totalorder %s16, 1
    %p48 = por %p46, %p47
    %p49 = scmp.ne.s32.totalorder %s38, %s39
    %p50 = scmp.eq.s32.totalorder %s16, 0
    %p51 = por %p49, %p50
    %p52 = scmp.ne.s32.totalorder %s38, %s39
    %p53 = scmp.eq.s32.totalorder %s17, 1
    %p54 = por %p52, %p53
    %p56 = scmp.ne.s32.totalorder %s39, %s55
    %p57 = scmp.eq.s32.totalorder %s17, 0
    %p58 = por %p56, %p57
    %s59 = smul.u32 %s19, 16
    %s60 = ssub.s32 %s59, 1
    %p61 = scmp.gt.s32.totalorder %s60, 0
    %s62 = scalar_select %p61, %s60, 0
    %s63 = smul.u32 %s26, 16
    %s64 = ssub.s32 %s63, 1
    %p65 = scmp.gt.s32.totalorder %s64, 0
    %s66 = scalar_select %p65, %s64, 0
    %s67 = ssub.s32 %s18, %s30
    %s68 = ssub.s32 %s62, %s66
    %s69 = sor.u32 %s67, %s68
    %p70 = scmp.eq.s32.totalorder %s69, 0
    %s72 = sadd.s32 %s71, 1
    %s73 = scalar_select %p70, %s71, %s72
    %p76 = pneg %p70
    %p77 = scmp.eq.s32.totalorder %s11, 1
    %p78 = por %p76, %p77
    %p79 = scmp.ne.s32.totalorder %s71, %s74
    %p80 = scmp.eq.s32.totalorder %s11, 0
    %p81 = por %p79, %p80
    %p82 = scmp.ne.s32.totalorder %s71, %s74
    %p83 = scmp.eq.s32.totalorder %s16, 1
    %p84 = por %p82, %p83
    %p85 = scmp.ne.s32.totalorder %s74, %s75
    %p86 = scmp.eq.s32.totalorder %s16, 0
    %p87 = por %p85, %p86
    %p88 = scmp.ne.s32.totalorder %s74, %s75
    %p89 = scmp.eq.s32.totalorder %s17, 1
    %p90 = por %p88, %p89
    %p92 = scmp.ne.s32.totalorder %s75, %s91
    %p93 = scmp.eq.s32.totalorder %s17, 0
    %p94 = por %p92, %p93
    %s95 = sadd.s32 %s19, 1
    %s96 = smul.u32 %s95, 16
    %p97 = scmp.lt.s32.totalorder %s96, 15
    %s98 = scalar_select %p97, %s96, 15
    %s99 = sadd.s32 %s26, 1
    %s100 = smul.u32 %s99, 16
    %p101 = scmp.lt.s32.totalorder %s100, 15
    %s102 = scalar_select %p101, %s100, 15
    %s103 = ssub.s32 %s18, %s30
    %s104 = ssub.s32 %s98, %s102
    %s105 = sor.u32 %s103, %s104
    %p106 = scmp.eq.s32.totalorder %s105, 0
    %s108 = sadd.s32 %s107, 1
    %s109 = scalar_select %p106, %s107, %s108
    %p112 = pneg %p106
    %p113 = scmp.eq.s32.totalorder %s11, 1
    %p114 = por %p112, %p113
    %p115 = scmp.ne.s32.totalorder %s107, %s110
    %p116 = scmp.eq.s32.totalorder %s11, 0
    %p117 = por %p115, %p116
    %p118 = scmp.ne.s32.totalorder %s107, %s110
    %p119 = scmp.eq.s32.totalorder %s16, 1
    %p120 = por %p118, %p119
    %p121 = scmp.ne.s32.totalorder %s110, %s111
    %p122 = scmp.eq.s32.totalorder %s16, 0
    %p123 = por %p121, %p122
    %p124 = scmp.ne.s32.totalorder %s110, %s111
    %p125 = scmp.eq.s32.totalorder %s17, 1
    %p126 = por %p124, %p125
    %p128 = scmp.ne.s32.totalorder %s111, %s127
    %p129 = scmp.eq.s32.totalorder %s17, 0
    %p130 = por %p128, %p129
    %s132 = sadd.s32 %s131, 1
    %p135 = scmp.eq.s32.totalorder %s11, 1
    %p136 = scmp.ne.s32.totalorder %s131, %s133
    %p137 = scmp.eq.s32.totalorder %s11, 0
    %p138 = por %p136, %p137
    %p139 = scmp.ne.s32.totalorder %s131, %s133
    %p140 = scmp.eq.s32.totalorder %s16, 1
    %p141 = por %p139, %p140
    %p142 = scmp.ne.s32.totalorder %s133, %s134
    %p143 = scmp.eq.s32.totalorder %s16, 0
    %p144 = por %p142, %p143
    %p145 = scmp.ne.s32.totalorder %s133, %s134
    %p146 = scmp.eq.s32.totalorder %s17, 1
    %p147 = por %p145, %p146
    %p149 = scmp.ne.s32.totalorder %s134, %s148
    %p150 = scmp.eq.s32.totalorder %s17, 0
    %p151 = por %p149, %p150
    %s153 = sadd.s32 %s152, 1
    %p156 = scmp.eq.s32.totalorder %s11, 1
    %p157 = scmp.ne.s32.totalorder %s152, %s154
    %p158 = scmp.eq.s32.totalorder %s11, 0
    %p159 = por %p157, %p158
    %p160 = scmp.ne.s32.totalorder %s152, %s154
    %p161 = scmp.eq.s32.totalorder %s16, 1
    %p162 = por %p160, %p161
    %p163 = scmp.ne.s32.totalorder %s154, %s155
    %p164 = scmp.eq.s32.totalorder %s16, 0
    %p165 = por %p163, %p164
    %p166 = scmp.ne.s32.totalorder %s154, %s155
    %p167 = scmp.eq.s32.totalorder %s17, 1
    %p168 = por %p166, %p167
    %p170 = scmp.ne.s32.totalorder %s155, %s169
    %p171 = scmp.eq.s32.totalorder %s17, 0
    %p172 = por %p170, %p171
    %s173 = ssub.s32 %s18, %s30
    %s174 = ssub.s32 %s19, %s26
    %s175 = sor.u32 %s173, %s174
    %p176 = scmp.eq.s32.totalorder %s175, 0
    %s178 = sadd.s32 %s177, 1
    %s179 = scalar_select %p176, %s177, %s178
    %p182 = pneg %p176
    %p183 = scmp.eq.s32.totalorder %s11, 1
    %p184 = por %p182, %p183
    %p185 = scmp.ne.s32.totalorder %s177, %s180
    %p186 = scmp.eq.s32.totalorder %s11, 0
    %p187 = por %p185, %p186
    %p188 = scmp.ne.s32.totalorder %s177, %s180
    %p189 = scmp.eq.s32.totalorder %s16, 1
    %p190 = por %p188, %p189
    %p191 = scmp.ne.s32.totalorder %s180, %s181
    %p192 = scmp.eq.s32.totalorder %s16, 0
    %p193 = por %p191, %p192
    %p194 = scmp.ne.s32.totalorder %s180, %s181
    %p195 = scmp.eq.s32.totalorder %s17, 1
    %p196 = por %p194, %p195
    %p198 = scmp.ne.s32.totalorder %s181, %s197
    %p199 = scmp.eq.s32.totalorder %s17, 0
    %p200 = por %p198, %p199
    %p201 = scmp.le.s32.totalorder 1, %s11
    %p202 = scmp.lt.s32.totalorder %s11, 3
    %p203 = pnand %p201, %p202
    %p204 = pneg %p203
    // Predicated region
    $region9: #{separable_conv_block.1} parent=5 // pred_check
      _
    $region10: #{separable_conv_block.1} parent=5 // pred_check_branch
      %206 = sbr.rel (%p203) target = $region12
    $region11: #{separable_conv_block.1} parent=5 // pred_region
      %s207 = ssub.s32 %s11, 1
      // Predicated region
      $region13: #{separable_conv_block.1} parent=11 // pred_check
        %p208 = pneg %p144
      $region14: #{separable_conv_block.1} parent=11 // pred_check_branch
        %210 = sbr.rel (%p208) target = $region16
      $region15: #{separable_conv_block.1} parent=11 // pred_region
        _
      $region16: #{separable_conv_block.1} parent=11 // pred_fallthru
        _
      // Predicated region
      $region17: #{separable_conv_block.1} parent=11 // pred_check
        %p211 = pneg %p165
      $region18: #{separable_conv_block.1} parent=11 // pred_check_branch
        %213 = sbr.rel (%p211) target = $region20
      $region19: #{separable_conv_block.1} parent=11 // pred_region
        _
      $region20: #{separable_conv_block.1} parent=11 // pred_fallthru
        _
    $region12: #{separable_conv_block.1} parent=5 // pred_fallthru
      _
    %p214 = scmp.lt.s32.totalorder %s11, 2
    // Predicated region
    $region21: #{separable_conv_block.1} parent=5 // pred_check
      %p215 = pneg %p214
    $region22: #{separable_conv_block.1} parent=5 // pred_check_branch
      %217 = sbr.rel (%p215) target = $region24
    $region23: #{separable_conv_block.1} parent=5 // pred_region
      // Predicated region
      $region25: #{separable_conv_block.1} parent=23 // pred_check
        %p218 = pneg %p45
      $region26: #{separable_conv_block.1} parent=23 // pred_check_branch
        %220 = sbr.rel (%p218) target = $region28
      $region27: #{separable_conv_block.1} parent=23 // pred_region
        %s221 = smul.u32 16, %s19
        %p222 = scmp.lt.s32.totalorder %s18, 1
        %s223 = scalar_select %p222, %s18, 1
        %p224 = scmp.lt.s32.totalorder %s221, 15
        %s225 = scalar_select %p224, %s221, 15
        %s226 = smul.addr %s225, 2
        %s227 = smul.addr %s223, 32
        %s228 = sadd.s32 %s226, %s227
        %s229 = smul.addr %s228, 4
        %s230 = scalar_lea.vmem %s0, %s229
        %s231 = smul.u32 16, %s19
      $region28: #{separable_conv_block.1} parent=23 // pred_fallthru
        _
      // Predicated region
      $region29: #{separable_conv_block.1} parent=23 // pred_check
        %p232 = pneg %p81
      $region30: #{separable_conv_block.1} parent=23 // pred_check_branch
        %234 = sbr.rel (%p232) target = $region32
      $region31: #{separable_conv_block.1} parent=23 // pred_region
        %s235 = smul.u32 %s19, 16
        %s236 = ssub.s32 %s235, 1
        %p237 = scmp.gt.s32.totalorder %s236, 0
        %s238 = scalar_select %p237, %s236, 0
        %p239 = scmp.lt.s32.totalorder %s18, 1
        %s240 = scalar_select %p239, %s18, 1
        %p241 = scmp.lt.s32.totalorder %s238, 15
        %s242 = scalar_select %p241, %s238, 15
        %s243 = smul.addr %s242, 2
        %s244 = smul.addr %s240, 32
        %s245 = sadd.s32 %s243, %s244
        %s246 = smul.addr %s245, 4
        %s247 = scalar_lea.vmem %s1, %s246
        %s248 = smul.u32 %s19, 16
        %s249 = ssub.s32 %s248, 1
        %p250 = scmp.gt.s32.totalorder %s249, 0
        %s251 = scalar_select %p250, %s249, 0
      $region32: #{separable_conv_block.1} parent=23 // pred_fallthru
        _
      // Predicated region
      $region33: #{separable_conv_block.1} parent=23 // pred_check
        %p252 = pneg %p117
      $region34: #{separable_conv_block.1} parent=23 // pred_check_branch
        %254 = sbr.rel (%p252) target = $region36
      $region35: #{separable_conv_block.1} parent=23 // pred_region
        %s255 = sadd.s32 %s19, 1
        %s256 = smul.u32 %s255, 16
        %p257 = scmp.lt.s32.totalorder %s256, 15
        %s258 = scalar_select %p257, %s256, 15
        %p259 = scmp.lt.s32.totalorder %s18, 1
        %s260 = scalar_select %p259, %s18, 1
        %p261 = scmp.lt.s32.totalorder %s258, 15
        %s262 = scalar_select %p261, %s258, 15
        %s263 = smul.addr %s262, 2
        %s264 = smul.addr %s260, 32
        %s265 = sadd.s32 %s263, %s264
        %s266 = smul.addr %s265, 4
        %s267 = scalar_lea.vmem %s2, %s266
        %s268 = sadd.s32 %s19, 1
        %s269 = smul.u32 %s268, 16
        %p270 = scmp.lt.s32.totalorder %s269, 15
        %s271 = scalar_select %p270, %s269, 15
      $region36: #{separable_conv_block.1} parent=23 // pred_fallthru
        _
    $region24: #{separable_conv_block.1} parent=5 // pred_fallthru
      _
    %p272 = scmp.le.s32.totalorder 1, %s11
    %p273 = scmp.lt.s32.totalorder %s11, 3
    %p274 = pnand %p272, %p273
    %p275 = pneg %p274
    // Predicated region
    $region37: #{separable_conv_block.1} parent=5 // pred_check
      _
    $region38: #{separable_conv_block.1} parent=5 // pred_check_branch
      %277 = sbr.rel (%p274) target = $region40
    $region39: #{separable_conv_block.1} parent=5 // pred_region
      %s278 = ssub.s32 %s11, 1
      %s279 = smul.u32 16, %s21
      %p280 = scmp.lt.s32.totalorder %s20, 1
      %s281 = scalar_select %p280, %s20, 1
      %p282 = scmp.lt.s32.totalorder %s279, 15
      %s283 = scalar_select %p282, %s279, 15
      %s284 = smul.addr %s283, 2
      %s285 = smul.addr %s281, 32
      %s286 = sadd.s32 %s284, %s285
      %s287 = smul.addr %s286, 4
      %s288 = scalar_lea.vmem %s0, %s287
      %p289 = pneg %p51
      %p290 = pneg %p48
      %s291 = smul.u32 %s21, 16
      %s292 = ssub.s32 %s291, 1
      %p293 = scmp.gt.s32.totalorder %s292, 0
      %s294 = scalar_select %p293, %s292, 0
      %p295 = scmp.lt.s32.totalorder %s20, 1
      %s296 = scalar_select %p295, %s20, 1
      %p297 = scmp.lt.s32.totalorder %s294, 15
      %s298 = scalar_select %p297, %s294, 15
      %s299 = smul.addr %s298, 2
      %s300 = smul.addr %s296, 32
      %s301 = sadd.s32 %s299, %s300
      %s302 = smul.addr %s301, 4
      %s303 = scalar_lea.vmem %s1, %s302
      %p304 = pneg %p87
      %p305 = pneg %p84
      %s306 = sadd.s32 %s21, 1
      %s307 = smul.u32 %s306, 16
      %p308 = scmp.lt.s32.totalorder %s307, 15
      %s309 = scalar_select %p308, %s307, 15
      %p310 = scmp.lt.s32.totalorder %s20, 1
      %s311 = scalar_select %p310, %s20, 1
      %p312 = scmp.lt.s32.totalorder %s309, 15
      %s313 = scalar_select %p312, %s309, 15
      %s314 = smul.addr %s313, 2
      %s315 = smul.addr %s311, 32
      %s316 = sadd.s32 %s314, %s315
      %s317 = smul.addr %s316, 4
      %s318 = scalar_lea.vmem %s2, %s317
      %p319 = pneg %p123
      %p320 = pneg %p120
      %p321 = pneg %p144
      %p322 = pneg %p141
      %p323 = pneg %p165
      %p324 = pneg %p162
      %p325 = pneg %p193
      %p326 = pneg %p190
      %s327 = smul.u32 16, %s21
      %p328 = scmp.lt.s32.totalorder %s20, 1
      %s329 = scalar_select %p328, %s20, 1
      %p330 = scmp.lt.s32.totalorder %s327, 15
      %s331 = scalar_select %p330, %s327, 15
      %s332 = smul.addr %s331, 2
      %s333 = smul.addr %s329, 32
      %s334 = sadd.s32 %s332, %s333
      %s335 = smul.addr %s334, 8
      %s336 = scalar_lea.vmem %s5, %s335
      %s337 = smul.u32 16, %s21
      %p338 = scmp.lt.s32.totalorder %s20, 1
      %s339 = scalar_select %p338, %s20, 1
      %p340 = scmp.lt.s32.totalorder %s337, 15
      %s341 = scalar_select %p340, %s337, 15
      %s342 = smul.addr %s341, 2
      %s343 = smul.addr %s339, 32
      %s344 = sadd.s32 %s342, %s343
      %s345 = smul.addr %s344, 4
      %s346 = scalar_lea.vmem %s0, %s345
      %s347 = smul.u32 16, %s21
      %s348 = smul.u32 %s21, 16
      %s349 = ssub.s32 %s348, 1
      %p350 = scmp.gt.s32.totalorder %s349, 0
      %s351 = scalar_select %p350, %s349, 0
      %p352 = scmp.lt.s32.totalorder %s20, 1
      %s353 = scalar_select %p352, %s20, 1
      %p354 = scmp.lt.s32.totalorder %s351, 15
      %s355 = scalar_select %p354, %s351, 15
      %s356 = smul.addr %s355, 2
      %s357 = smul.addr %s353, 32
      %s358 = sadd.s32 %s356, %s357
      %s359 = smul.addr %s358, 4
      %s360 = scalar_lea.vmem %s1, %s359
      %s361 = smul.u32 %s21, 16
      %s362 = ssub.s32 %s361, 1
      %p363 = scmp.gt.s32.totalorder %s362, 0
      %s364 = scalar_select %p363, %s362, 0
      %s365 = sadd.s32 %s21, 1
      %s366 = smul.u32 %s365, 16
      %p367 = scmp.lt.s32.totalorder %s366, 15
      %s368 = scalar_select %p367, %s366, 15
      %p369 = scmp.lt.s32.totalorder %s20, 1
      %s370 = scalar_select %p369, %s20, 1
      %p371 = scmp.lt.s32.totalorder %s368, 15
      %s372 = scalar_select %p371, %s368, 15
      %s373 = smul.addr %s372, 2
      %s374 = smul.addr %s370, 32
      %s375 = sadd.s32 %s373, %s374
      %s376 = smul.addr %s375, 4
      %s377 = scalar_lea.vmem %s2, %s376
      %s378 = sadd.s32 %s21, 1
      %s379 = smul.u32 %s378, 16
      %p380 = scmp.lt.s32.totalorder %s379, 15
      %s381 = scalar_select %p380, %s379, 15
      %s382 = smul.u32 16, %s21
      %p383 = scmp.lt.s32.totalorder %s20, 1
      %s384 = scalar_select %p383, %s20, 1
      %p385 = scmp.lt.s32.totalorder %s382, 15
      %s386 = scalar_select %p385, %s382, 15
      %s387 = smul.addr %s386, 2
      %s388 = smul.addr %s384, 32
      %s389 = sadd.s32 %s387, %s388
      %s390 = smul.addr %s389, 8
      %s391 = scalar_lea.vmem %s5, %s390
      %s392 = smul.u32 16, %s21
      %v394 = vld [vmem:[%s346] sm:$0xf]
      %v395 = vld [vmem:[%s346 + $0x4] sm:$0xf]
      %v396 = vld [vmem:[%s346 + $0x8] sm:$0xf]
      %v397 = vld [vmem:[%s346 + $0xc] sm:$0xf]
      %v398 = vld [vmem:[%s346 + $0x10] sm:$0xf]
      %v399 = vld [vmem:[%s346 + $0x14] sm:$0xf]
      %v400 = vld [vmem:[%s346 + $0x18] sm:$0xf]
      %v401 = vld [vmem:[%s346 + $0x1c] sm:$0xf]
      %v402 = vld [vmem:[%s346 + $0x20] sm:$0xf]
      %v403 = vld [vmem:[%s346 + $0x24] sm:$0xf]
      %v404 = vld [vmem:[%s346 + $0x28] sm:$0xf]
      %v405 = vld [vmem:[%s346 + $0x2c] sm:$0xf]
      %v406 = vld [vmem:[%s346 + $0x30] sm:$0xf]
      %v407 = vld [vmem:[%s346 + $0x34] sm:$0xf]
      %v408 = vld [vmem:[%s346 + $0x38] sm:$0xf]
      %v409 = vld [vmem:[%s346 + $0x3c] sm:$0xf]
      %v410 = vld [vmem:[%s346 + $0x40] sm:$0xf]
      %v411 = vld [vmem:[%s346 + $0x44] sm:$0xf]
      %v412 = vld [vmem:[%s346 + $0x48] sm:$0xf]
      %v413 = vld [vmem:[%s346 + $0x4c] sm:$0xf]
      %v414 = vld [vmem:[%s346 + $0x50] sm:$0xf]
      %v415 = vld [vmem:[%s346 + $0x54] sm:$0xf]
      %v416 = vld [vmem:[%s346 + $0x58] sm:$0xf]
      %v417 = vld [vmem:[%s346 + $0x5c] sm:$0xf]
      %v418 = vld [vmem:[%s346 + $0x60] sm:$0xf]
      %v419 = vld [vmem:[%s346 + $0x64] sm:$0xf]
      %v420 = vld [vmem:[%s346 + $0x68] sm:$0xf]
      %v421 = vld [vmem:[%s346 + $0x6c] sm:$0xf]
      %v422 = vld [vmem:[%s346 + $0x70] sm:$0xf]
      %v423 = vld [vmem:[%s346 + $0x74] sm:$0xf]
      %v454 = vunpack.c.l.b16 %v394
      %v455 = vunpack.c.l.b16 %v395
      %v456 = vunpack.c.l.b16 %v396
      %v457 = vunpack.c.l.b16 %v397
      %v458 = vunpack.c.l.b16 %v398
      %v459 = vunpack.c.l.b16 %v399
      %v460 = vunpack.c.l.b16 %v400
      %v461 = vunpack.c.l.b16 %v401
      %v462 = vunpack.c.l.b16 %v402
      %v463 = vunpack.c.l.b16 %v403
      %v464 = vunpack.c.l.b16 %v404
      %v465 = vunpack.c.l.b16 %v405
      %v466 = vunpack.c.l.b16 %v406
      %v467 = vunpack.c.l.b16 %v407
      %v468 = vunpack.c.l.b16 %v408
      %v469 = vunpack.c.l.b16 %v409
      %v470 = vunpack.c.l.b16 %v410
      %v471 = vunpack.c.l.b16 %v411
      %v472 = vunpack.c.l.b16 %v412
      %v473 = vunpack.c.l.b16 %v413
      %v474 = vunpack.c.l.b16 %v414
      %v475 = vunpack.c.l.b16 %v415
      %v476 = vunpack.c.l.b16 %v416
      %v477 = vunpack.c.l.b16 %v417
      %v478 = vunpack.c.l.b16 %v418
      %v479 = vunpack.c.l.b16 %v419
      %v480 = vunpack.c.l.b16 %v420
      %v481 = vunpack.c.l.b16 %v421
      %v482 = vunpack.c.l.b16 %v422
      %v483 = vunpack.c.l.b16 %v423
      %v484 = vpack.c.b16 %v455, %v454
      %v485 = vpack.c.b16 %v457, %v456
      %v486 = vpack.c.b16 %v459, %v458
      %v487 = vpack.c.b16 %v461, %v460
      %v488 = vpack.c.b16 %v463, %v462
      %v489 = vpack.c.b16 %v465, %v464
      %v490 = vpack.c.b16 %v467, %v466
      %v491 = vpack.c.b16 %v469, %v468
      %v492 = vpack.c.b16 %v471, %v470
      %v493 = vpack.c.b16 %v473, %v472
      %v494 = vpack.c.b16 %v475, %v474
      %v495 = vpack.c.b16 %v477, %v476
      %v496 = vpack.c.b16 %v479, %v478
      %v497 = vpack.c.b16 %v481, %v480
      %v498 = vpack.c.b16 %v483, %v482
      %v500 = vshrl.u32 %v484, 16
      %v502 = vrot.slane %v500, 7
      %v503 = vshll.u32 %v484, 16
      %v505 = vor.u32 %v502, %v503
      %v507 = vshrl.u32 %v485, 16
      %v509 = vrot.slane %v507, 7
      %v510 = vshll.u32 %v485, 16
      %v512 = vor.u32 %v509, %v510
      %v514 = vshrl.u32 %v486, 16
      %v516 = vrot.slane %v514, 7
      %v517 = vshll.u32 %v486, 16
      %v519 = vor.u32 %v516, %v517
      %v521 = vshrl.u32 %v487, 16
      %v523 = vrot.slane %v521, 7
      %v524 = vshll.u32 %v487, 16
      %v526 = vor.u32 %v523, %v524
      %v528 = vshrl.u32 %v488, 16
      %v530 = vrot.slane %v528, 7
      %v531 = vshll.u32 %v488, 16
      %v533 = vor.u32 %v530, %v531
      %v535 = vshrl.u32 %v489, 16
      %v537 = vrot.slane %v535, 7
      %v538 = vshll.u32 %v489, 16
      %v540 = vor.u32 %v537, %v538
      %v542 = vshrl.u32 %v490, 16
      %v544 = vrot.slane %v542, 7
      %v545 = vshll.u32 %v490, 16
      %v547 = vor.u32 %v544, %v545
      %v549 = vshrl.u32 %v491, 16
      %v551 = vrot.slane %v549, 7
      %v552 = vshll.u32 %v491, 16
      %v554 = vor.u32 %v551, %v552
      %v556 = vshrl.u32 %v492, 16
      %v558 = vrot.slane %v556, 7
      %v559 = vshll.u32 %v492, 16
      %v561 = vor.u32 %v558, %v559
      %v563 = vshrl.u32 %v493, 16
      %v565 = vrot.slane %v563, 7
      %v566 = vshll.u32 %v493, 16
      %v568 = vor.u32 %v565, %v566
      %v570 = vshrl.u32 %v494, 16
      %v572 = vrot.slane %v570, 7
      %v573 = vshll.u32 %v494, 16
      %v575 = vor.u32 %v572, %v573
      %v577 = vshrl.u32 %v495, 16
      %v579 = vrot.slane %v577, 7
      %v580 = vshll.u32 %v495, 16
      %v582 = vor.u32 %v579, %v580
      %v584 = vshrl.u32 %v496, 16
      %v586 = vrot.slane %v584, 7
      %v587 = vshll.u32 %v496, 16
      %v589 = vor.u32 %v586, %v587
      %v591 = vshrl.u32 %v497, 16
      %v593 = vrot.slane %v591, 7
      %v594 = vshll.u32 %v497, 16
      %v596 = vor.u32 %v593, %v594
      %v598 = vshrl.u32 %v498, 16
      %v600 = vrot.slane %v598, 7
      %v601 = vshll.u32 %v498, 16
      %v603 = vor.u32 %v600, %v601
      %s619 = scalar_lea.vmem [#allocation2], 8
      %vm620 = vcmask 31744
      %vm621 = vsmask.f32 7938
      %vm622 = vmand %vm620, %vm621
      %v623 = vld [vmem:[%s619] sm:$0xff]
      %v624 = vsel %vm622, %v505, %v623
      %625 = vst [vmem:[%s619] sm:$0xff] %v624
      %v626 = vld [vmem:[%s619 + $0x8] sm:$0xff]
      %v627 = vsel %vm622, %v512, %v626
      %628 = vst [vmem:[%s619 + $0x8] sm:$0xff] %v627
      %v629 = vld [vmem:[%s619 + $0x10] sm:$0xff]
      %v630 = vsel %vm622, %v519, %v629
      %631 = vst [vmem:[%s619 + $0x10] sm:$0xff] %v630
      %v632 = vld [vmem:[%s619 + $0x18] sm:$0xff]
      %v633 = vsel %vm622, %v526, %v632
      %634 = vst [vmem:[%s619 + $0x18] sm:$0xff] %v633
      %v635 = vld [vmem:[%s619 + $0x20] sm:$0xff]
      %v636 = vsel %vm622, %v533, %v635
      %637 = vst [vmem:[%s619 + $0x20] sm:$0xff] %v636
      %v638 = vld [vmem:[%s619 + $0x28] sm:$0xff]
      %v639 = vsel %vm622, %v540, %v638
      %640 = vst [vmem:[%s619 + $0x28] sm:$0xff] %v639
      %v641 = vld [vmem:[%s619 + $0x30] sm:$0xff]
      %v642 = vsel %vm622, %v547, %v641
      %643 = vst [vmem:[%s619 + $0x30] sm:$0xff] %v642
      %v644 = vld [vmem:[%s619 + $0x38] sm:$0xff]
      %v645 = vsel %vm622, %v554, %v644
      %646 = vst [vmem:[%s619 + $0x38] sm:$0xff] %v645
      %v647 = vld [vmem:[%s619 + $0x40] sm:$0xff]
      %v648 = vsel %vm622, %v561, %v647
      %649 = vst [vmem:[%s619 + $0x40] sm:$0xff] %v648
      %v650 = vld [vmem:[%s619 + $0x48] sm:$0xff]
      %v651 = vsel %vm622, %v568, %v650
      %652 = vst [vmem:[%s619 + $0x48] sm:$0xff] %v651
      %v653 = vld [vmem:[%s619 + $0x50] sm:$0xff]
      %v654 = vsel %vm622, %v575, %v653
      %655 = vst [vmem:[%s619 + $0x50] sm:$0xff] %v654
      %v656 = vld [vmem:[%s619 + $0x58] sm:$0xff]
      %v657 = vsel %vm622, %v582, %v656
      %658 = vst [vmem:[%s619 + $0x58] sm:$0xff] %v657
      %v659 = vld [vmem:[%s619 + $0x60] sm:$0xff]
      %v660 = vsel %vm622, %v589, %v659
      %661 = vst [vmem:[%s619 + $0x60] sm:$0xff] %v660
      %v662 = vld [vmem:[%s619 + $0x68] sm:$0xff]
      %v663 = vsel %vm622, %v596, %v662
      %664 = vst [vmem:[%s619 + $0x68] sm:$0xff] %v663
      %v665 = vld [vmem:[%s619 + $0x70] sm:$0xff]
      %v666 = vsel %vm622, %v603, %v665
      %667 = vst [vmem:[%s619 + $0x70] sm:$0xff] %v666
      %v668 = vld [vmem:[%s360] sm:$0xf]
      %v669 = vld [vmem:[%s360 + $0x4] sm:$0xf]
      %v672 = vunpack.c.l.b16 %v668
      %v673 = vunpack.c.l.b16 %v669
      %v674 = vpack.c.b16 %v673, %v672
      %v676 = vshrl.u32 %v674, 16
      %v678 = vrot.slane %v676, 7
      %v679 = vshll.u32 %v674, 16
      %v681 = vor.u32 %v678, %v679
      %v683 = vld [vmem:[#allocation2] sm:$0xff]
      %v684 = vsel %vm622, %v681, %v683
      %685 = vst [vmem:[#allocation2] sm:$0xff] %v684
      %v686 = vld [vmem:[%s346] sm:$0xf]
      %v687 = vld [vmem:[%s346 + $0x4] sm:$0xf]
      %v688 = vld [vmem:[%s346 + $0x8] sm:$0xf]
      %v689 = vld [vmem:[%s346 + $0xc] sm:$0xf]
      %v690 = vld [vmem:[%s346 + $0x10] sm:$0xf]
      %v691 = vld [vmem:[%s346 + $0x14] sm:$0xf]
      %v692 = vld [vmem:[%s346 + $0x18] sm:$0xf]
      %v693 = vld [vmem:[%s346 + $0x1c] sm:$0xf]
      %v694 = vld [vmem:[%s346 + $0x20] sm:$0xf]
      %v695 = vld [vmem:[%s346 + $0x24] sm:$0xf]
      %v696 = vld [vmem:[%s346 + $0x28] sm:$0xf]
      %v697 = vld [vmem:[%s346 + $0x2c] sm:$0xf]
      %v698 = vld [vmem:[%s346 + $0x30] sm:$0xf]
      %v699 = vld [vmem:[%s346 + $0x34] sm:$0xf]
      %v700 = vld [vmem:[%s346 + $0x38] sm:$0xf]
      %v701 = vld [vmem:[%s346 + $0x3c] sm:$0xf]
      %v702 = vld [vmem:[%s346 + $0x40] sm:$0xf]
      %v703 = vld [vmem:[%s346 + $0x44] sm:$0xf]
      %v704 = vld [vmem:[%s346 + $0x48] sm:$0xf]
      %v705 = vld [vmem:[%s346 + $0x4c] sm:$0xf]
      %v706 = vld [vmem:[%s346 + $0x50] sm:$0xf]
      %v707 = vld [vmem:[%s346 + $0x54] sm:$0xf]
      %v708 = vld [vmem:[%s346 + $0x58] sm:$0xf]
      %v709 = vld [vmem:[%s346 + $0x5c] sm:$0xf]
      %v710 = vld [vmem:[%s346 + $0x60] sm:$0xf]
      %v711 = vld [vmem:[%s346 + $0x64] sm:$0xf]
      %v712 = vld [vmem:[%s346 + $0x68] sm:$0xf]
      %v713 = vld [vmem:[%s346 + $0x6c] sm:$0xf]
      %v714 = vld [vmem:[%s346 + $0x70] sm:$0xf]
      %v715 = vld [vmem:[%s346 + $0x74] sm:$0xf]
      %v746 = vunpack.c.l.b16 %v686
      %v747 = vunpack.c.l.b16 %v687
      %v748 = vunpack.c.l.b16 %v688
      %v749 = vunpack.c.l.b16 %v689
      %v750 = vunpack.c.l.b16 %v690
      %v751 = vunpack.c.l.b16 %v691
      %v752 = vunpack.c.l.b16 %v692
      %v753 = vunpack.c.l.b16 %v693
      %v754 = vunpack.c.l.b16 %v694
      %v755 = vunpack.c.l.b16 %v695
      %v756 = vunpack.c.l.b16 %v696
      %v757 = vunpack.c.l.b16 %v697
      %v758 = vunpack.c.l.b16 %v698
      %v759 = vunpack.c.l.b16 %v699
      %v760 = vunpack.c.l.b16 %v700
      %v761 = vunpack.c.l.b16 %v701
      %v762 = vunpack.c.l.b16 %v702
      %v763 = vunpack.c.l.b16 %v703
      %v764 = vunpack.c.l.b16 %v704
      %v765 = vunpack.c.l.b16 %v705
      %v766 = vunpack.c.l.b16 %v706
      %v767 = vunpack.c.l.b16 %v707
      %v768 = vunpack.c.l.b16 %v708
      %v769 = vunpack.c.l.b16 %v709
      %v770 = vunpack.c.l.b16 %v710
      %v771 = vunpack.c.l.b16 %v711
      %v772 = vunpack.c.l.b16 %v712
      %v773 = vunpack.c.l.b16 %v713
      %v774 = vunpack.c.l.b16 %v714
      %v775 = vunpack.c.l.b16 %v715
      %v776 = vpack.c.b16 %v747, %v746
      %v777 = vpack.c.b16 %v749, %v748
      %v778 = vpack.c.b16 %v751, %v750
      %v779 = vpack.c.b16 %v753, %v752
      %v780 = vpack.c.b16 %v755, %v754
      %v781 = vpack.c.b16 %v757, %v756
      %v782 = vpack.c.b16 %v759, %v758
      %v783 = vpack.c.b16 %v761, %v760
      %v784 = vpack.c.b16 %v763, %v762
      %v785 = vpack.c.b16 %v765, %v764
      %v786 = vpack.c.b16 %v767, %v766
      %v787 = vpack.c.b16 %v769, %v768
      %v788 = vpack.c.b16 %v771, %v770
      %v789 = vpack.c.b16 %v773, %v772
      %v790 = vpack.c.b16 %v775, %v774
      %791 = vrot.lane.b32.xlu0 %v776, 4
      %v792 = vpop.permute.xlu0 %791
      %793 = vrot.lane.b32.xlu0 %v777, 4
      %v794 = vpop.permute.xlu0 %793
      %795 = vrot.lane.b32.xlu0 %v778, 4
      %v796 = vpop.permute.xlu0 %795
      %797 = vrot.lane.b32.xlu0 %v779, 4
      %v798 = vpop.permute.xlu0 %797
      %799 = vrot.lane.b32.xlu0 %v780, 4
      %v800 = vpop.permute.xlu0 %799
      %801 = vrot.lane.b32.xlu0 %v781, 4
      %v802 = vpop.permute.xlu0 %801
      %803 = vrot.lane.b32.xlu0 %v782, 4
      %v804 = vpop.permute.xlu0 %803
      %805 = vrot.lane.b32.xlu0 %v783, 4
      %v806 = vpop.permute.xlu0 %805
      %807 = vrot.lane.b32.xlu0 %v784, 4
      %v808 = vpop.permute.xlu0 %807
      %809 = vrot.lane.b32.xlu0 %v785, 4
      %v810 = vpop.permute.xlu0 %809
      %811 = vrot.lane.b32.xlu0 %v786, 4
      %v812 = vpop.permute.xlu0 %811
      %813 = vrot.lane.b32.xlu0 %v787, 4
      %v814 = vpop.permute.xlu0 %813
      %815 = vrot.lane.b32.xlu0 %v788, 4
      %v816 = vpop.permute.xlu0 %815
      %817 = vrot.lane.b32.xlu0 %v789, 4
      %v818 = vpop.permute.xlu0 %817
      %819 = vrot.lane.b32.xlu0 %v790, 4
      %v820 = vpop.permute.xlu0 %819
      %vm836 = vcmask 64544
      %837 = vst.msk [vmem:[%s619] sm:$0xff] %vm836, %v792
      %838 = vst.msk [vmem:[%s619 + $0x8] sm:$0xff] %vm836, %v794
      %839 = vst.msk [vmem:[%s619 + $0x10] sm:$0xff] %vm836, %v796
      %840 = vst.msk [vmem:[%s619 + $0x18] sm:$0xff] %vm836, %v798
      %841 = vst.msk [vmem:[%s619 + $0x20] sm:$0xff] %vm836, %v800
      %842 = vst.msk [vmem:[%s619 + $0x28] sm:$0xff] %vm836, %v802
      %843 = vst.msk [vmem:[%s619 + $0x30] sm:$0xff] %vm836, %v804
      %844 = vst.msk [vmem:[%s619 + $0x38] sm:$0xff] %vm836, %v806
      %845 = vst.msk [vmem:[%s619 + $0x40] sm:$0xff] %vm836, %v808
      %846 = vst.msk [vmem:[%s619 + $0x48] sm:$0xff] %vm836, %v810
      %847 = vst.msk [vmem:[%s619 + $0x50] sm:$0xff] %vm836, %v812
      %848 = vst.msk [vmem:[%s619 + $0x58] sm:$0xff] %vm836, %v814
      %849 = vst.msk [vmem:[%s619 + $0x60] sm:$0xff] %vm836, %v816
      %850 = vst.msk [vmem:[%s619 + $0x68] sm:$0xff] %vm836, %v818
      %851 = vst.msk [vmem:[%s619 + $0x70] sm:$0xff] %vm836, %v820
      %v852 = vld [vmem:[%s360] sm:$0xf]
      %v853 = vld [vmem:[%s360 + $0x4] sm:$0xf]
      %v856 = vunpack.c.l.b16 %v852
      %v857 = vunpack.c.l.b16 %v853
      %v858 = vpack.c.b16 %v857, %v856
      %859 = vrot.lane.b32.xlu0 %v858, 4
      %v860 = vpop.permute.xlu0 %859
      %862 = vst.msk [vmem:[#allocation2] sm:$0xff] %vm836, %v860
      %v863 = vld [vmem:[%s346] sm:$0xf]
      %v864 = vld [vmem:[%s346 + $0x4] sm:$0xf]
      %v865 = vld [vmem:[%s346 + $0x8] sm:$0xf]
      %v866 = vld [vmem:[%s346 + $0xc] sm:$0xf]
      %v867 = vld [vmem:[%s346 + $0x10] sm:$0xf]
      %v868 = vld [vmem:[%s346 + $0x14] sm:$0xf]
      %v869 = vld [vmem:[%s346 + $0x18] sm:$0xf]
      %v870 = vld [vmem:[%s346 + $0x1c] sm:$0xf]
      %v871 = vld [vmem:[%s346 + $0x20] sm:$0xf]
      %v872 = vld [vmem:[%s346 + $0x24] sm:$0xf]
      %v873 = vld [vmem:[%s346 + $0x28] sm:$0xf]
      %v874 = vld [vmem:[%s346 + $0x2c] sm:$0xf]
      %v875 = vld [vmem:[%s346 + $0x30] sm:$0xf]
      %v876 = vld [vmem:[%s346 + $0x34] sm:$0xf]
      %v877 = vld [vmem:[%s346 + $0x38] sm:$0xf]
      %v878 = vld [vmem:[%s346 + $0x3c] sm:$0xf]
      %v879 = vld [vmem:[%s346 + $0x40] sm:$0xf]
      %v880 = vld [vmem:[%s346 + $0x44] sm:$0xf]
      %v881 = vld [vmem:[%s346 + $0x48] sm:$0xf]
      %v882 = vld [vmem:[%s346 + $0x4c] sm:$0xf]
      %v883 = vld [vmem:[%s346 + $0x50] sm:$0xf]
      %v884 = vld [vmem:[%s346 + $0x54] sm:$0xf]
      %v885 = vld [vmem:[%s346 + $0x58] sm:$0xf]
      %v886 = vld [vmem:[%s346 + $0x5c] sm:$0xf]
      %v887 = vld [vmem:[%s346 + $0x60] sm:$0xf]
      %v888 = vld [vmem:[%s346 + $0x64] sm:$0xf]
      %v889 = vld [vmem:[%s346 + $0x68] sm:$0xf]
      %v890 = vld [vmem:[%s346 + $0x6c] sm:$0xf]
      %v891 = vld [vmem:[%s346 + $0x70] sm:$0xf]
      %v892 = vld [vmem:[%s346 + $0x74] sm:$0xf]
      %v923 = vunpack.c.l.b16 %v863
      %v924 = vunpack.c.l.b16 %v864
      %v925 = vunpack.c.l.b16 %v865
      %v926 = vunpack.c.l.b16 %v866
      %v927 = vunpack.c.l.b16 %v867
      %v928 = vunpack.c.l.b16 %v868
      %v929 = vunpack.c.l.b16 %v869
      %v930 = vunpack.c.l.b16 %v870
      %v931 = vunpack.c.l.b16 %v871
      %v932 = vunpack.c.l.b16 %v872
      %v933 = vunpack.c.l.b16 %v873
      %v934 = vunpack.c.l.b16 %v874
      %v935 = vunpack.c.l.b16 %v875
      %v936 = vunpack.c.l.b16 %v876
      %v937 = vunpack.c.l.b16 %v877
      %v938 = vunpack.c.l.b16 %v878
      %v939 = vunpack.c.l.b16 %v879
      %v940 = vunpack.c.l.b16 %v880
      %v941 = vunpack.c.l.b16 %v881
      %v942 = vunpack.c.l.b16 %v882
      %v943 = vunpack.c.l.b16 %v883
      %v944 = vunpack.c.l.b16 %v884
      %v945 = vunpack.c.l.b16 %v885
      %v946 = vunpack.c.l.b16 %v886
      %v947 = vunpack.c.l.b16 %v887
      %v948 = vunpack.c.l.b16 %v888
      %v949 = vunpack.c.l.b16 %v889
      %v950 = vunpack.c.l.b16 %v890
      %v951 = vunpack.c.l.b16 %v891
      %v952 = vunpack.c.l.b16 %v892
      %v953 = vpack.c.b16 %v924, %v923
      %v954 = vpack.c.b16 %v926, %v925
      %v955 = vpack.c.b16 %v928, %v927
      %v956 = vpack.c.b16 %v930, %v929
      %v957 = vpack.c.b16 %v932, %v931
      %v958 = vpack.c.b16 %v934, %v933
      %v959 = vpack.c.b16 %v936, %v935
      %v960 = vpack.c.b16 %v938, %v937
      %v961 = vpack.c.b16 %v940, %v939
      %v962 = vpack.c.b16 %v942, %v941
      %v963 = vpack.c.b16 %v944, %v943
      %v964 = vpack.c.b16 %v946, %v945
      %v965 = vpack.c.b16 %v948, %v947
      %v966 = vpack.c.b16 %v950, %v949
      %v967 = vpack.c.b16 %v952, %v951
      %v969 = vshrl.u32 %v953, 16
      %v971 = vshll.u32 %v953, 16
      %v973 = vrot.slane %v971, 1
      %v974 = vor.u32 %v969, %v973
      %v976 = vshrl.u32 %v954, 16
      %v978 = vshll.u32 %v954, 16
      %v980 = vrot.slane %v978, 1
      %v981 = vor.u32 %v976, %v980
      %v983 = vshrl.u32 %v955, 16
      %v985 = vshll.u32 %v955, 16
      %v987 = vrot.slane %v985, 1
      %v988 = vor.u32 %v983, %v987
      %v990 = vshrl.u32 %v956, 16
      %v992 = vshll.u32 %v956, 16
      %v994 = vrot.slane %v992, 1
      %v995 = vor.u32 %v990, %v994
      %v997 = vshrl.u32 %v957, 16
      %v999 = vshll.u32 %v957, 16
      %v1001 = vrot.slane %v999, 1
      %v1002 = vor.u32 %v997, %v1001
      %v1004 = vshrl.u32 %v958, 16
      %v1006 = vshll.u32 %v958, 16
      %v1008 = vrot.slane %v1006, 1
      %v1009 = vor.u32 %v1004, %v1008
      %v1011 = vshrl.u32 %v959, 16
      %v1013 = vshll.u32 %v959, 16
      %v1015 = vrot.slane %v1013, 1
      %v1016 = vor.u32 %v1011, %v1015
      %v1018 = vshrl.u32 %v960, 16
      %v1020 = vshll.u32 %v960, 16
      %v1022 = vrot.slane %v1020, 1
      %v1023 = vor.u32 %v1018, %v1022
      %v1025 = vshrl.u32 %v961, 16
      %v1027 = vshll.u32 %v961, 16
      %v1029 = vrot.slane %v1027, 1
      %v1030 = vor.u32 %v1025, %v1029
      %v1032 = vshrl.u32 %v962, 16
      %v1034 = vshll.u32 %v962, 16
      %v1036 = vrot.slane %v1034, 1
      %v1037 = vor.u32 %v1032, %v1036
      %v1039 = vshrl.u32 %v963, 16
      %v1041 = vshll.u32 %v963, 16
      %v1043 = vrot.slane %v1041, 1
      %v1044 = vor.u32 %v1039, %v1043
      %v1046 = vshrl.u32 %v964, 16
      %v1048 = vshll.u32 %v964, 16
      %v1050 = vrot.slane %v1048, 1
      %v1051 = vor.u32 %v1046, %v1050
      %v1053 = vshrl.u32 %v965, 16
      %v1055 = vshll.u32 %v965, 16
      %v1057 = vrot.slane %v1055, 1
      %v1058 = vor.u32 %v1053, %v1057
      %v1060 = vshrl.u32 %v966, 16
      %v1062 = vshll.u32 %v966, 16
      %v1064 = vrot.slane %v1062, 1
      %v1065 = vor.u32 %v1060, %v1064
      %v1067 = vshrl.u32 %v967, 16
      %v1069 = vshll.u32 %v967, 16
      %v1071 = vrot.slane %v1069, 1
      %v1072 = vor.u32 %v1067, %v1071
      %1073 = vrot.lane.b32.xlu0 %v974, 8
      %v1074 = vpop.permute.xlu0 %1073
      %1075 = vrot.lane.b32.xlu0 %v981, 8
      %v1076 = vpop.permute.xlu0 %1075
      %1077 = vrot.lane.b32.xlu0 %v988, 8
      %v1078 = vpop.permute.xlu0 %1077
      %1079 = vrot.lane.b32.xlu0 %v995, 8
      %v1080 = vpop.permute.xlu0 %1079
      %1081 = vrot.lane.b32.xlu0 %v1002, 8
      %v1082 = vpop.permute.xlu0 %1081
      %1083 = vrot.lane.b32.xlu0 %v1009, 8
      %v1084 = vpop.permute.xlu0 %1083
      %1085 = vrot.lane.b32.xlu0 %v1016, 8
      %v1086 = vpop.permute.xlu0 %1085
      %1087 = vrot.lane.b32.xlu0 %v1023, 8
      %v1088 = vpop.permute.xlu0 %1087
      %1089 = vrot.lane.b32.xlu0 %v1030, 8
      %v1090 = vpop.permute.xlu0 %1089
      %1091 = vrot.lane.b32.xlu0 %v1037, 8
      %v1092 = vpop.permute.xlu0 %1091
      %1093 = vrot.lane.b32.xlu0 %v1044, 8
      %v1094 = vpop.permute.xlu0 %1093
      %1095 = vrot.lane.b32.xlu0 %v1051, 8
      %v1096 = vpop.permute.xlu0 %1095
      %1097 = vrot.lane.b32.xlu0 %v1058, 8
      %v1098 = vpop.permute.xlu0 %1097
      %1099 = vrot.lane.b32.xlu0 %v1065, 8
      %v1100 = vpop.permute.xlu0 %1099
      %1101 = vrot.lane.b32.xlu0 %v1072, 8
      %v1102 = vpop.permute.xlu0 %1101
      %vm1118 = vcmask 97344
      %vm1119 = vsmask.f32 7424
      %vm1120 = vmand %vm1118, %vm1119
      %v1121 = vld [vmem:[%s619] sm:$0xff]
      %v1122 = vsel %vm1120, %v1074, %v1121
      %1123 = vst [vmem:[%s619] sm:$0xff] %v1122
      %v1124 = vld [vmem:[%s619 + $0x8] sm:$0xff]
      %v1125 = vsel %vm1120, %v1076, %v1124
      %1126 = vst [vmem:[%s619 + $0x8] sm:$0xff] %v1125
      %v1127 = vld [vmem:[%s619 + $0x10] sm:$0xff]
      %v1128 = vsel %vm1120, %v1078, %v1127
      %1129 = vst [vmem:[%s619 + $0x10] sm:$0xff] %v1128
      %v1130 = vld [vmem:[%s619 + $0x18] sm:$0xff]
      %v1131 = vsel %vm1120, %v1080, %v1130
      %1132 = vst [vmem:[%s619 + $0x18] sm:$0xff] %v1131
      %v1133 = vld [vmem:[%s619 + $0x20] sm:$0xff]
      %v1134 = vsel %vm1120, %v1082, %v1133
      %1135 = vst [vmem:[%s619 + $0x20] sm:$0xff] %v1134
      %v1136 = vld [vmem:[%s619 + $0x28] sm:$0xff]
      %v1137 = vsel %vm1120, %v1084, %v1136
      %1138 = vst [vmem:[%s619 + $0x28] sm:$0xff] %v1137
      %v1139 = vld [vmem:[%s619 + $0x30] sm:$0xff]
      %v1140 = vsel %vm1120, %v1086, %v1139
      %1141 = vst [vmem:[%s619 + $0x30] sm:$0xff] %v1140
      %v1142 = vld [vmem:[%s619 + $0x38] sm:$0xff]
      %v1143 = vsel %vm1120, %v1088, %v1142
      %1144 = vst [vmem:[%s619 + $0x38] sm:$0xff] %v1143
      %v1145 = vld [vmem:[%s619 + $0x40] sm:$0xff]
      %v1146 = vsel %vm1120, %v1090, %v1145
      %1147 = vst [vmem:[%s619 + $0x40] sm:$0xff] %v1146
      %v1148 = vld [vmem:[%s619 + $0x48] sm:$0xff]
      %v1149 = vsel %vm1120, %v1092, %v1148
      %1150 = vst [vmem:[%s619 + $0x48] sm:$0xff] %v1149
      %v1151 = vld [vmem:[%s619 + $0x50] sm:$0xff]
      %v1152 = vsel %vm1120, %v1094, %v1151
      %1153 = vst [vmem:[%s619 + $0x50] sm:$0xff] %v1152
      %v1154 = vld [vmem:[%s619 + $0x58] sm:$0xff]
      %v1155 = vsel %vm1120, %v1096, %v1154
      %1156 = vst [vmem:[%s619 + $0x58] sm:$0xff] %v1155
      %v1157 = vld [vmem:[%s619 + $0x60] sm:$0xff]
      %v1158 = vsel %vm1120, %v1098, %v1157
      %1159 = vst [vmem:[%s619 + $0x60] sm:$0xff] %v1158
      %v1160 = vld [vmem:[%s619 + $0x68] sm:$0xff]
      %v1161 = vsel %vm1120, %v1100, %v1160
      %1162 = vst [vmem:[%s619 + $0x68] sm:$0xff] %v1161
      %v1163 = vld [vmem:[%s619 + $0x70] sm:$0xff]
      %v1164 = vsel %vm1120, %v1102, %v1163
      %1165 = vst [vmem:[%s619 + $0x70] sm:$0xff] %v1164
      %v1166 = vld [vmem:[%s360] sm:$0xf]
      %v1167 = vld [vmem:[%s360 + $0x4] sm:$0xf]
      %v1170 = vunpack.c.l.b16 %v1166
      %v1171 = vunpack.c.l.b16 %v1167
      %v1172 = vpack.c.b16 %v1171, %v1170
      %v1174 = vshrl.u32 %v1172, 16
      %v1176 = vshll.u32 %v1172, 16
      %v1178 = vrot.slane %v1176, 1
      %v1179 = vor.u32 %v1174, %v1178
      %1180 = vrot.lane.b32.xlu0 %v1179, 8
      %v1181 = vpop.permute.xlu0 %1180
      %v1183 = vld [vmem:[#allocation2] sm:$0xff]
      %v1184 = vsel %vm1120, %v1181, %v1183
      %1185 = vst [vmem:[#allocation2] sm:$0xff] %v1184
      %v1186 = vld [vmem:[%s346] sm:$0xf]
      %v1187 = vld [vmem:[%s346 + $0x4] sm:$0xf]
      %v1188 = vld [vmem:[%s346 + $0x8] sm:$0xf]
      %v1189 = vld [vmem:[%s346 + $0xc] sm:$0xf]
      %v1190 = vld [vmem:[%s346 + $0x10] sm:$0xf]
      %v1191 = vld [vmem:[%s346 + $0x14] sm:$0xf]
      %v1192 = vld [vmem:[%s346 + $0x18] sm:$0xf]
      %v1193 = vld [vmem:[%s346 + $0x1c] sm:$0xf]
      %v1194 = vld [vmem:[%s346 + $0x20] sm:$0xf]
      %v1195 = vld [vmem:[%s346 + $0x24] sm:$0xf]
      %v1196 = vld [vmem:[%s346 + $0x28] sm:$0xf]
      %v1197 = vld [vmem:[%s346 + $0x2c] sm:$0xf]
      %v1198 = vld [vmem:[%s346 + $0x30] sm:$0xf]
      %v1199 = vld [vmem:[%s346 + $0x34] sm:$0xf]
      %v1200 = vld [vmem:[%s346 + $0x38] sm:$0xf]
      %v1201 = vld [vmem:[%s346 + $0x3c] sm:$0xf]
      %v1202 = vld [vmem:[%s346 + $0x40] sm:$0xf]
      %v1203 = vld [vmem:[%s346 + $0x44] sm:$0xf]
      %v1204 = vld [vmem:[%s346 + $0x48] sm:$0xf]
      %v1205 = vld [vmem:[%s346 + $0x4c] sm:$0xf]
      %v1206 = vld [vmem:[%s346 + $0x50] sm:$0xf]
      %v1207 = vld [vmem:[%s346 + $0x54] sm:$0xf]
      %v1208 = vld [vmem:[%s346 + $0x58] sm:$0xf]
      %v1209 = vld [vmem:[%s346 + $0x5c] sm:$0xf]
      %v1210 = vld [vmem:[%s346 + $0x60] sm:$0xf]
      %v1211 = vld [vmem:[%s346 + $0x64] sm:$0xf]
      %v1212 = vld [vmem:[%s346 + $0x68] sm:$0xf]
      %v1213 = vld [vmem:[%s346 + $0x6c] sm:$0xf]
      %v1214 = vld [vmem:[%s346 + $0x70] sm:$0xf]
      %v1215 = vld [vmem:[%s346 + $0x74] sm:$0xf]
      %v1216 = vld [vmem:[%s346 + $0x78] sm:$0xf]
      %v1217 = vld [vmem:[%s346 + $0x7c] sm:$0xf]
      %v1250 = vunpack.c.l.b16 %v1186
      %v1251 = vunpack.c.l.b16 %v1187
      %v1252 = vunpack.c.l.b16 %v1188
      %v1253 = vunpack.c.l.b16 %v1189
      %v1254 = vunpack.c.l.b16 %v1190
      %v1255 = vunpack.c.l.b16 %v1191
      %v1256 = vunpack.c.l.b16 %v1192
      %v1257 = vunpack.c.l.b16 %v1193
      %v1258 = vunpack.c.l.b16 %v1194
      %v1259 = vunpack.c.l.b16 %v1195
      %v1260 = vunpack.c.l.b16 %v1196
      %v1261 = vunpack.c.l.b16 %v1197
      %v1262 = vunpack.c.l.b16 %v1198
      %v1263 = vunpack.c.l.b16 %v1199
      %v1264 = vunpack.c.l.b16 %v1200
      %v1265 = vunpack.c.l.b16 %v1201
      %v1266 = vunpack.c.l.b16 %v1202
      %v1267 = vunpack.c.l.b16 %v1203
      %v1268 = vunpack.c.l.b16 %v1204
      %v1269 = vunpack.c.l.b16 %v1205
      %v1270 = vunpack.c.l.b16 %v1206
      %v1271 = vunpack.c.l.b16 %v1207
      %v1272 = vunpack.c.l.b16 %v1208
      %v1273 = vunpack.c.l.b16 %v1209
      %v1274 = vunpack.c.l.b16 %v1210
      %v1275 = vunpack.c.l.b16 %v1211
      %v1276 = vunpack.c.l.b16 %v1212
      %v1277 = vunpack.c.l.b16 %v1213
      %v1278 = vunpack.c.l.b16 %v1214
      %v1279 = vunpack.c.l.b16 %v1215
      %v1280 = vunpack.c.l.b16 %v1216
      %v1281 = vunpack.c.l.b16 %v1217
      %v1282 = vpack.c.b16 %v1251, %v1250
      %v1283 = vpack.c.b16 %v1253, %v1252
      %v1284 = vpack.c.b16 %v1255, %v1254
      %v1285 = vpack.c.b16 %v1257, %v1256
      %v1286 = vpack.c.b16 %v1259, %v1258
      %v1287 = vpack.c.b16 %v1261, %v1260
      %v1288 = vpack.c.b16 %v1263, %v1262
      %v1289 = vpack.c.b16 %v1265, %v1264
      %v1290 = vpack.c.b16 %v1267, %v1266
      %v1291 = vpack.c.b16 %v1269, %v1268
      %v1292 = vpack.c.b16 %v1271, %v1270
      %v1293 = vpack.c.b16 %v1273, %v1272
      %v1294 = vpack.c.b16 %v1275, %v1274
      %v1295 = vpack.c.b16 %v1277, %v1276
      %v1296 = vpack.c.b16 %v1279, %v1278
      %v1297 = vpack.c.b16 %v1281, %v1280
      %v1299 = vshrl.u32 %v1282, 16
      %v1301 = vrot.slane %v1299, 7
      %v1302 = vshll.u32 %v1282, 16
      %v1304 = vor.u32 %v1301, %v1302
      %v1306 = vshrl.u32 %v1283, 16
      %v1308 = vrot.slane %v1306, 7
      %v1309 = vshll.u32 %v1283, 16
      %v1311 = vor.u32 %v1308, %v1309
      %v1313 = vshrl.u32 %v1284, 16
      %v1315 = vrot.slane %v1313, 7
      %v1316 = vshll.u32 %v1284, 16
      %v1318 = vor.u32 %v1315, %v1316
      %v1320 = vshrl.u32 %v1285, 16
      %v1322 = vrot.slane %v1320, 7
      %v1323 = vshll.u32 %v1285, 16
      %v1325 = vor.u32 %v1322, %v1323
      %v1327 = vshrl.u32 %v1286, 16
      %v1329 = vrot.slane %v1327, 7
      %v1330 = vshll.u32 %v1286, 16
      %v1332 = vor.u32 %v1329, %v1330
      %v1334 = vshrl.u32 %v1287, 16
      %v1336 = vrot.slane %v1334, 7
      %v1337 = vshll.u32 %v1287, 16
      %v1339 = vor.u32 %v1336, %v1337
      %v1341 = vshrl.u32 %v1288, 16
      %v1343 = vrot.slane %v1341, 7
      %v1344 = vshll.u32 %v1288, 16
      %v1346 = vor.u32 %v1343, %v1344
      %v1348 = vshrl.u32 %v1289, 16
      %v1350 = vrot.slane %v1348, 7
      %v1351 = vshll.u32 %v1289, 16
      %v1353 = vor.u32 %v1350, %v1351
      %v1355 = vshrl.u32 %v1290, 16
      %v1357 = vrot.slane %v1355, 7
      %v1358 = vshll.u32 %v1290, 16
      %v1360 = vor.u32 %v1357, %v1358
      %v1362 = vshrl.u32 %v1291, 16
      %v1364 = vrot.slane %v1362, 7
      %v1365 = vshll.u32 %v1291, 16
      %v1367 = vor.u32 %v1364, %v1365
      %v1369 = vshrl.u32 %v1292, 16
      %v1371 = vrot.slane %v1369, 7
      %v1372 = vshll.u32 %v1292, 16
      %v1374 = vor.u32 %v1371, %v1372
      %v1376 = vshrl.u32 %v1293, 16
      %v1378 = vrot.slane %v1376, 7
      %v1379 = vshll.u32 %v1293, 16
      %v1381 = vor.u32 %v1378, %v1379
      %v1383 = vshrl.u32 %v1294, 16
      %v1385 = vrot.slane %v1383, 7
      %v1386 = vshll.u32 %v1294, 16
      %v1388 = vor.u32 %v1385, %v1386
      %v1390 = vshrl.u32 %v1295, 16
      %v1392 = vrot.slane %v1390, 7
      %v1393 = vshll.u32 %v1295, 16
      %v1395 = vor.u32 %v1392, %v1393
      %v1397 = vshrl.u32 %v1296, 16
      %v1399 = vrot.slane %v1397, 7
      %v1400 = vshll.u32 %v1296, 16
      %v1402 = vor.u32 %v1399, %v1400
      %v1404 = vshrl.u32 %v1297, 16
      %v1406 = vrot.slane %v1404, 7
      %v1407 = vshll.u32 %v1297, 16
      %v1409 = vor.u32 %v1406, %v1407
      %1410 = vrot.lane.b32.xlu0 %v1304, 12
      %v1411 = vpop.permute.xlu0 %1410
      %1412 = vrot.lane.b32.xlu0 %v1311, 12
      %v1413 = vpop.permute.xlu0 %1412
      %1414 = vrot.lane.b32.xlu0 %v1318, 12
      %v1415 = vpop.permute.xlu0 %1414
      %1416 = vrot.lane.b32.xlu0 %v1325, 12
      %v1417 = vpop.permute.xlu0 %1416
      %1418 = vrot.lane.b32.xlu0 %v1332, 12
      %v1419 = vpop.permute.xlu0 %1418
      %1420 = vrot.lane.b32.xlu0 %v1339, 12
      %v1421 = vpop.permute.xlu0 %1420
      %1422 = vrot.lane.b32.xlu0 %v1346, 12
      %v1423 = vpop.permute.xlu0 %1422
      %1424 = vrot.lane.b32.xlu0 %v1353, 12
      %v1425 = vpop.permute.xlu0 %1424
      %1426 = vrot.lane.b32.xlu0 %v1360, 12
      %v1427 = vpop.permute.xlu0 %1426
      %1428 = vrot.lane.b32.xlu0 %v1367, 12
      %v1429 = vpop.permute.xlu0 %1428
      %1430 = vrot.lane.b32.xlu0 %v1374, 12
      %v1431 = vpop.permute.xlu0 %1430
      %1432 = vrot.lane.b32.xlu0 %v1381, 12
      %v1433 = vpop.permute.xlu0 %1432
      %1434 = vrot.lane.b32.xlu0 %v1388, 12
      %v1435 = vpop.permute.xlu0 %1434
      %1436 = vrot.lane.b32.xlu0 %v1395, 12
      %v1437 = vpop.permute.xlu0 %1436
      %1438 = vrot.lane.b32.xlu0 %v1402, 12
      %v1439 = vpop.permute.xlu0 %1438
      %1440 = vrot.lane.b32.xlu0 %v1409, 12
      %v1441 = vpop.permute.xlu0 %1440
      %vm1458 = vcmask 130144
      %vm1459 = vmand %vm1458, %vm621
      %v1460 = vld [vmem:[#allocation2] sm:$0xff]
      %v1461 = vsel %vm1459, %v1411, %v1460
      %1462 = vst [vmem:[#allocation2] sm:$0xff] %v1461
      %v1463 = vld [vmem:[#allocation2 + $0x8] sm:$0xff]
      %v1464 = vsel %vm1459, %v1413, %v1463
      %1465 = vst [vmem:[#allocation2 + $0x8] sm:$0xff] %v1464
      %v1466 = vld [vmem:[#allocation2 + $0x10] sm:$0xff]
      %v1467 = vsel %vm1459, %v1415, %v1466
      %1468 = vst [vmem:[#allocation2 + $0x10] sm:$0xff] %v1467
      %v1469 = vld [vmem:[#allocation2 + $0x18] sm:$0xff]
      %v1470 = vsel %vm1459, %v1417, %v1469
      %1471 = vst [vmem:[#allocation2 + $0x18] sm:$0xff] %v1470
      %v1472 = vld [vmem:[#allocation2 + $0x20] sm:$0xff]
      %v1473 = vsel %vm1459, %v1419, %v1472
      %1474 = vst [vmem:[#allocation2 + $0x20] sm:$0xff] %v1473
      %v1475 = vld [vmem:[#allocation2 + $0x28] sm:$0xff]
      %v1476 = vsel %vm1459, %v1421, %v1475
      %1477 = vst [vmem:[#allocation2 + $0x28] sm:$0xff] %v1476
      %v1478 = vld [vmem:[#allocation2 + $0x30] sm:$0xff]
      %v1479 = vsel %vm1459, %v1423, %v1478
      %1480 = vst [vmem:[#allocation2 + $0x30] sm:$0xff] %v1479
      %v1481 = vld [vmem:[#allocation2 + $0x38] sm:$0xff]
      %v1482 = vsel %vm1459, %v1425, %v1481
      %1483 = vst [vmem:[#allocation2 + $0x38] sm:$0xff] %v1482
      %v1484 = vld [vmem:[#allocation2 + $0x40] sm:$0xff]
      %v1485 = vsel %vm1459, %v1427, %v1484
      %1486 = vst [vmem:[#allocation2 + $0x40] sm:$0xff] %v1485
      %v1487 = vld [vmem:[#allocation2 + $0x48] sm:$0xff]
      %v1488 = vsel %vm1459, %v1429, %v1487
      %1489 = vst [vmem:[#allocation2 + $0x48] sm:$0xff] %v1488
      %v1490 = vld [vmem:[#allocation2 + $0x50] sm:$0xff]
      %v1491 = vsel %vm1459, %v1431, %v1490
      %1492 = vst [vmem:[#allocation2 + $0x50] sm:$0xff] %v1491
      %v1493 = vld [vmem:[#allocation2 + $0x58] sm:$0xff]
      %v1494 = vsel %vm1459, %v1433, %v1493
      %1495 = vst [vmem:[#allocation2 + $0x58] sm:$0xff] %v1494
      %v1496 = vld [vmem:[#allocation2 + $0x60] sm:$0xff]
      %v1497 = vsel %vm1459, %v1435, %v1496
      %1498 = vst [vmem:[#allocation2 + $0x60] sm:$0xff] %v1497
      %v1499 = vld [vmem:[#allocation2 + $0x68] sm:$0xff]
      %v1500 = vsel %vm1459, %v1437, %v1499
      %1501 = vst [vmem:[#allocation2 + $0x68] sm:$0xff] %v1500
      %v1502 = vld [vmem:[#allocation2 + $0x70] sm:$0xff]
      %v1503 = vsel %vm1459, %v1439, %v1502
      %1504 = vst [vmem:[#allocation2 + $0x70] sm:$0xff] %v1503
      %v1505 = vld [vmem:[#allocation2 + $0x78] sm:$0xff]
      %v1506 = vsel %vm1459, %v1441, %v1505
      %1507 = vst [vmem:[#allocation2 + $0x78] sm:$0xff] %v1506
      %v1508 = vld [vmem:[%s346] sm:$0xf]
      %v1509 = vld [vmem:[%s346 + $0x4] sm:$0xf]
      %v1510 = vld [vmem:[%s346 + $0x8] sm:$0xf]
      %v1511 = vld [vmem:[%s346 + $0xc] sm:$0xf]
      %v1512 = vld [vmem:[%s346 + $0x10] sm:$0xf]
      %v1513 = vld [vmem:[%s346 + $0x14] sm:$0xf]
      %v1514 = vld [vmem:[%s346 + $0x18] sm:$0xf]
      %v1515 = vld [vmem:[%s346 + $0x1c] sm:$0xf]
      %v1516 = vld [vmem:[%s346 + $0x20] sm:$0xf]
      %v1517 = vld [vmem:[%s346 + $0x24] sm:$0xf]
      %v1518 = vld [vmem:[%s346 + $0x28] sm:$0xf]
      %v1519 = vld [vmem:[%s346 + $0x2c] sm:$0xf]
      %v1520 = vld [vmem:[%s346 + $0x30] sm:$0xf]
      %v1521 = vld [vmem:[%s346 + $0x34] sm:$0xf]
      %v1522 = vld [vmem:[%s346 + $0x38] sm:$0xf]
      %v1523 = vld [vmem:[%s346 + $0x3c] sm:$0xf]
      %v1524 = vld [vmem:[%s346 + $0x40] sm:$0xf]
      %v1525 = vld [vmem:[%s346 + $0x44] sm:$0xf]
      %v1526 = vld [vmem:[%s346 + $0x48] sm:$0xf]
      %v1527 = vld [vmem:[%s346 + $0x4c] sm:$0xf]
      %v1528 = vld [vmem:[%s346 + $0x50] sm:$0xf]
      %v1529 = vld [vmem:[%s346 + $0x54] sm:$0xf]
      %v1530 = vld [vmem:[%s346 + $0x58] sm:$0xf]
      %v1531 = vld [vmem:[%s346 + $0x5c] sm:$0xf]
      %v1532 = vld [vmem:[%s346 + $0x60] sm:$0xf]
      %v1533 = vld [vmem:[%s346 + $0x64] sm:$0xf]
      %v1534 = vld [vmem:[%s346 + $0x68] sm:$0xf]
      %v1535 = vld [vmem:[%s346 + $0x6c] sm:$0xf]
      %v1536 = vld [vmem:[%s346 + $0x70] sm:$0xf]
      %v1537 = vld [vmem:[%s346 + $0x74] sm:$0xf]
      %v1538 = vld [vmem:[%s346 + $0x78] sm:$0xf]
      %v1539 = vld [vmem:[%s346 + $0x7c] sm:$0xf]
      %v1572 = vunpack.c.l.b16 %v1508
      %v1573 = vunpack.c.l.b16 %v1509
      %v1574 = vunpack.c.l.b16 %v1510
      %v1575 = vunpack.c.l.b16 %v1511
      %v1576 = vunpack.c.l.b16 %v1512
      %v1577 = vunpack.c.l.b16 %v1513
      %v1578 = vunpack.c.l.b16 %v1514
      %v1579 = vunpack.c.l.b16 %v1515
      %v1580 = vunpack.c.l.b16 %v1516
      %v1581 = vunpack.c.l.b16 %v1517
      %v1582 = vunpack.c.l.b16 %v1518
      %v1583 = vunpack.c.l.b16 %v1519
      %v1584 = vunpack.c.l.b16 %v1520
      %v1585 = vunpack.c.l.b16 %v1521
      %v1586 = vunpack.c.l.b16 %v1522
      %v1587 = vunpack.c.l.b16 %v1523
      %v1588 = vunpack.c.l.b16 %v1524
      %v1589 = vunpack.c.l.b16 %v1525
      %v1590 = vunpack.c.l.b16 %v1526
      %v1591 = vunpack.c.l.b16 %v1527
      %v1592 = vunpack.c.l.b16 %v1528
      %v1593 = vunpack.c.l.b16 %v1529
      %v1594 = vunpack.c.l.b16 %v1530
      %v1595 = vunpack.c.l.b16 %v1531
      %v1596 = vunpack.c.l.b16 %v1532
      %v1597 = vunpack.c.l.b16 %v1533
      %v1598 = vunpack.c.l.b16 %v1534
      %v1599 = vunpack.c.l.b16 %v1535
      %v1600 = vunpack.c.l.b16 %v1536
      %v1601 = vunpack.c.l.b16 %v1537
      %v1602 = vunpack.c.l.b16 %v1538
      %v1603 = vunpack.c.l.b16 %v1539
      %v1604 = vpack.c.b16 %v1573, %v1572
      %v1605 = vpack.c.b16 %v1575, %v1574
      %v1606 = vpack.c.b16 %v1577, %v1576
      %v1607 = vpack.c.b16 %v1579, %v1578
      %v1608 = vpack.c.b16 %v1581, %v1580
      %v1609 = vpack.c.b16 %v1583, %v1582
      %v1610 = vpack.c.b16 %v1585, %v1584
      %v1611 = vpack.c.b16 %v1587, %v1586
      %v1612 = vpack.c.b16 %v1589, %v1588
      %v1613 = vpack.c.b16 %v1591, %v1590
      %v1614 = vpack.c.b16 %v1593, %v1592
      %v1615 = vpack.c.b16 %v1595, %v1594
      %v1616 = vpack.c.b16 %v1597, %v1596
      %v1617 = vpack.c.b16 %v1599, %v1598
      %v1618 = vpack.c.b16 %v1601, %v1600
      %v1619 = vpack.c.b16 %v1603, %v1602
      %1620 = vrot.lane.b32.xlu0 %v1604, 16
      %v1621 = vpop.permute.xlu0 %1620
      %1622 = vrot.lane.b32.xlu0 %v1605, 16
      %v1623 = vpop.permute.xlu0 %1622
      %1624 = vrot.lane.b32.xlu0 %v1606, 16
      %v1625 = vpop.permute.xlu0 %1624
      %1626 = vrot.lane.b32.xlu0 %v1607, 16
      %v1627 = vpop.permute.xlu0 %1626
      %1628 = vrot.lane.b32.xlu0 %v1608, 16
      %v1629 = vpop.permute.xlu0 %1628
      %1630 = vrot.lane.b32.xlu0 %v1609, 16
      %v1631 = vpop.permute.xlu0 %1630
      %1632 = vrot.lane.b32.xlu0 %v1610, 16
      %v1633 = vpop.permute.xlu0 %1632
      %1634 = vrot.lane.b32.xlu0 %v1611, 16
      %v1635 = vpop.permute.xlu0 %1634
      %1636 = vrot.lane.b32.xlu0 %v1612, 16
      %v1637 = vpop.permute.xlu0 %1636
      %1638 = vrot.lane.b32.xlu0 %v1613, 16
      %v1639 = vpop.permute.xlu0 %1638
      %1640 = vrot.lane.b32.xlu0 %v1614, 16
      %v1641 = vpop.permute.xlu0 %1640
      %1642 = vrot.lane.b32.xlu0 %v1615, 16
      %v1643 = vpop.permute.xlu0 %1642
      %1644 = vrot.lane.b32.xlu0 %v1616, 16
      %v1645 = vpop.permute.xlu0 %1644
      %1646 = vrot.lane.b32.xlu0 %v1617, 16
      %v1647 = vpop.permute.xlu0 %1646
      %1648 = vrot.lane.b32.xlu0 %v1618, 16
      %v1649 = vpop.permute.xlu0 %1648
      %1650 = vrot.lane.b32.xlu0 %v1619, 16
      %v1651 = vpop.permute.xlu0 %1650
      %vm1668 = vcmask 162944
      %1669 = vst.msk [vmem:[#allocation2] sm:$0xff] %vm1668, %v1621
      %1670 = vst.msk [vmem:[#allocation2 + $0x8] sm:$0xff] %vm1668, %v1623
      %1671 = vst.msk [vmem:[#allocation2 + $0x10] sm:$0xff] %vm1668, %v1625
      %1672 = vst.msk [vmem:[#allocation2 + $0x18] sm:$0xff] %vm1668, %v1627
      %1673 = vst.msk [vmem:[#allocation2 + $0x20] sm:$0xff] %vm1668, %v1629
      %1674 = vst.msk [vmem:[#allocation2 + $0x28] sm:$0xff] %vm1668, %v1631
      %1675 = vst.msk [vmem:[#allocation2 + $0x30] sm:$0xff] %vm1668, %v1633
      %1676 = vst.msk [vmem:[#allocation2 + $0x38] sm:$0xff] %vm1668, %v1635
      %1677 = vst.msk [vmem:[#allocation2 + $0x40] sm:$0xff] %vm1668, %v1637
      %1678 = vst.msk [vmem:[#allocation2 + $0x48] sm:$0xff] %vm1668, %v1639
      %1679 = vst.msk [vmem:[#allocation2 + $0x50] sm:$0xff] %vm1668, %v1641
      %1680 = vst.msk [vmem:[#allocation2 + $0x58] sm:$0xff] %vm1668, %v1643
      %1681 = vst.msk [vmem:[#allocation2 + $0x60] sm:$0xff] %vm1668, %v1645
      %1682 = vst.msk [vmem:[#allocation2 + $0x68] sm:$0xff] %vm1668, %v1647
      %1683 = vst.msk [vmem:[#allocation2 + $0x70] sm:$0xff] %vm1668, %v1649
      %1684 = vst.msk [vmem:[#allocation2 + $0x78] sm:$0xff] %vm1668, %v1651
      %v1685 = vld [vmem:[%s346] sm:$0xf]
      %v1686 = vld [vmem:[%s346 + $0x4] sm:$0xf]
      %v1687 = vld [vmem:[%s346 + $0x8] sm:$0xf]
      %v1688 = vld [vmem:[%s346 + $0xc] sm:$0xf]
      %v1689 = vld [vmem:[%s346 + $0x10] sm:$0xf]
      %v1690 = vld [vmem:[%s346 + $0x14] sm:$0xf]
      %v1691 = vld [vmem:[%s346 + $0x18] sm:$0xf]
      %v1692 = vld [vmem:[%s346 + $0x1c] sm:$0xf]
      %v1693 = vld [vmem:[%s346 + $0x20] sm:$0xf]
      %v1694 = vld [vmem:[%s346 + $0x24] sm:$0xf]
      %v1695 = vld [vmem:[%s346 + $0x28] sm:$0xf]
      %v1696 = vld [vmem:[%s346 + $0x2c] sm:$0xf]
      %v1697 = vld [vmem:[%s346 + $0x30] sm:$0xf]
      %v1698 = vld [vmem:[%s346 + $0x34] sm:$0xf]
      %v1699 = vld [vmem:[%s346 + $0x38] sm:$0xf]
      %v1700 = vld [vmem:[%s346 + $0x3c] sm:$0xf]
      %v1701 = vld [vmem:[%s346 + $0x40] sm:$0xf]
      %v1702 = vld [vmem:[%s346 + $0x44] sm:$0xf]
      %v1703 = vld [vmem:[%s346 + $0x48] sm:$0xf]
      %v1704 = vld [vmem:[%s346 + $0x4c] sm:$0xf]
      %v1705 = vld [vmem:[%s346 + $0x50] sm:$0xf]
      %v1706 = vld [vmem:[%s346 + $0x54] sm:$0xf]
      %v1707 = vld [vmem:[%s346 + $0x58] sm:$0xf]
      %v1708 = vld [vmem:[%s346 + $0x5c] sm:$0xf]
      %v1709 = vld [vmem:[%s346 + $0x60] sm:$0xf]
      %v1710 = vld [vmem:[%s346 + $0x64] sm:$0xf]
      %v1711 = vld [vmem:[%s346 + $0x68] sm:$0xf]
      %v1712 = vld [vmem:[%s346 + $0x6c] sm:$0xf]
      %v1713 = vld [vmem:[%s346 + $0x70] sm:$0xf]
      %v1714 = vld [vmem:[%s346 + $0x74] sm:$0xf]
      %v1715 = vld [vmem:[%s346 + $0x78] sm:$0xf]
      %v1716 = vld [vmem:[%s346 + $0x7c] sm:$0xf]
      %v1749 = vunpack.c.l.b16 %v1685
      %v1750 = vunpack.c.l.b16 %v1686
      %v1751 = vunpack.c.l.b16 %v1687
      %v1752 = vunpack.c.l.b16 %v1688
      %v1753 = vunpack.c.l.b16 %v1689
      %v1754 = vunpack.c.l.b16 %v1690
      %v1755 = vunpack.c.l.b16 %v1691
      %v1756 = vunpack.c.l.b16 %v1692
      %v1757 = vunpack.c.l.b16 %v1693
      %v1758 = vunpack.c.l.b16 %v1694
      %v1759 = vunpack.c.l.b16 %v1695
      %v1760 = vunpack.c.l.b16 %v1696
      %v1761 = vunpack.c.l.b16 %v1697
      %v1762 = vunpack.c.l.b16 %v1698
      %v1763 = vunpack.c.l.b16 %v1699
      %v1764 = vunpack.c.l.b16 %v1700
      %v1765 = vunpack.c.l.b16 %v1701
      %v1766 = vunpack.c.l.b16 %v1702
      %v1767 = vunpack.c.l.b16 %v1703
      %v1768 = vunpack.c.l.b16 %v1704
      %v1769 = vunpack.c.l.b16 %v1705
      %v1770 = vunpack.c.l.b16 %v1706
      %v1771 = vunpack.c.l.b16 %v1707
      %v1772 = vunpack.c.l.b16 %v1708
      %v1773 = vunpack.c.l.b16 %v1709
      %v1774 = vunpack.c.l.b16 %v1710
      %v1775 = vunpack.c.l.b16 %v1711
      %v1776 = vunpack.c.l.b16 %v1712
      %v1777 = vunpack.c.l.b16 %v1713
      %v1778 = vunpack.c.l.b16 %v1714
      %v1779 = vunpack.c.l.b16 %v1715
      %v1780 = vunpack.c.l.b16 %v1716
      %v1781 = vpack.c.b16 %v1750, %v1749
      %v1782 = vpack.c.b16 %v1752, %v1751
      %v1783 = vpack.c.b16 %v1754, %v1753
      %v1784 = vpack.c.b16 %v1756, %v1755
      %v1785 = vpack.c.b16 %v1758, %v1757
      %v1786 = vpack.c.b16 %v1760, %v1759
      %v1787 = vpack.c.b16 %v1762, %v1761
      %v1788 = vpack.c.b16 %v1764, %v1763
      %v1789 = vpack.c.b16 %v1766, %v1765
      %v1790 = vpack.c.b16 %v1768, %v1767
      %v1791 = vpack.c.b16 %v1770, %v1769
      %v1792 = vpack.c.b16 %v1772, %v1771
      %v1793 = vpack.c.b16 %v1774, %v1773
      %v1794 = vpack.c.b16 %v1776, %v1775
      %v1795 = vpack.c.b16 %v1778, %v1777
      %v1796 = vpack.c.b16 %v1780, %v1779
      %v1798 = vshrl.u32 %v1781, 16
      %v1800 = vshll.u32 %v1781, 16
      %v1802 = vrot.slane %v1800, 1
      %v1803 = vor.u32 %v1798, %v1802
      %v1805 = vshrl.u32 %v1782, 16
      %v1807 = vshll.u32 %v1782, 16
      %v1809 = vrot.slane %v1807, 1
      %v1810 = vor.u32 %v1805, %v1809
      %v1812 = vshrl.u32 %v1783, 16
      %v1814 = vshll.u32 %v1783, 16
      %v1816 = vrot.slane %v1814, 1
      %v1817 = vor.u32 %v1812, %v1816
      %v1819 = vshrl.u32 %v1784, 16
      %v1821 = vshll.u32 %v1784, 16
      %v1823 = vrot.slane %v1821, 1
      %v1824 = vor.u32 %v1819, %v1823
      %v1826 = vshrl.u32 %v1785, 16
      %v1828 = vshll.u32 %v1785, 16
      %v1830 = vrot.slane %v1828, 1
      %v1831 = vor.u32 %v1826, %v1830
      %v1833 = vshrl.u32 %v1786, 16
      %v1835 = vshll.u32 %v1786, 16
      %v1837 = vrot.slane %v1835, 1
      %v1838 = vor.u32 %v1833, %v1837
      %v1840 = vshrl.u32 %v1787, 16
      %v1842 = vshll.u32 %v1787, 16
      %v1844 = vrot.slane %v1842, 1
      %v1845 = vor.u32 %v1840, %v1844
      %v1847 = vshrl.u32 %v1788, 16
      %v1849 = vshll.u32 %v1788, 16
      %v1851 = vrot.slane %v1849, 1
      %v1852 = vor.u32 %v1847, %v1851
      %v1854 = vshrl.u32 %v1789, 16
      %v1856 = vshll.u32 %v1789, 16
      %v1858 = vrot.slane %v1856, 1
      %v1859 = vor.u32 %v1854, %v1858
      %v1861 = vshrl.u32 %v1790, 16
      %v1863 = vshll.u32 %v1790, 16
      %v1865 = vrot.slane %v1863, 1
      %v1866 = vor.u32 %v1861, %v1865
      %v1868 = vshrl.u32 %v1791, 16
      %v1870 = vshll.u32 %v1791, 16
      %v1872 = vrot.slane %v1870, 1
      %v1873 = vor.u32 %v1868, %v1872
      %v1875 = vshrl.u32 %v1792, 16
      %v1877 = vshll.u32 %v1792, 16
      %v1879 = vrot.slane %v1877, 1
      %v1880 = vor.u32 %v1875, %v1879
      %v1882 = vshrl.u32 %v1793, 16
      %v1884 = vshll.u32 %v1793, 16
      %v1886 = vrot.slane %v1884, 1
      %v1887 = vor.u32 %v1882, %v1886
      %v1889 = vshrl.u32 %v1794, 16
      %v1891 = vshll.u32 %v1794, 16
      %v1893 = vrot.slane %v1891, 1
      %v1894 = vor.u32 %v1889, %v1893
      %v1896 = vshrl.u32 %v1795, 16
      %v1898 = vshll.u32 %v1795, 16
      %v1900 = vrot.slane %v1898, 1
      %v1901 = vor.u32 %v1896, %v1900
      %v1903 = vshrl.u32 %v1796, 16
      %v1905 = vshll.u32 %v1796, 16
      %v1907 = vrot.slane %v1905, 1
      %v1908 = vor.u32 %v1903, %v1907
      %1909 = vrot.lane.b32.xlu0 %v1803, 20
      %v1910 = vpop.permute.xlu0 %1909
      %1911 = vrot.lane.b32.xlu0 %v1810, 20
      %v1912 = vpop.permute.xlu0 %1911
      %1913 = vrot.lane.b32.xlu0 %v1817, 20
      %v1914 = vpop.permute.xlu0 %1913
      %1915 = vrot.lane.b32.xlu0 %v1824, 20
      %v1916 = vpop.permute.xlu0 %1915
      %1917 = vrot.lane.b32.xlu0 %v1831, 20
      %v1918 = vpop.permute.xlu0 %1917
      %1919 = vrot.lane.b32.xlu0 %v1838, 20
      %v1920 = vpop.permute.xlu0 %1919
      %1921 = vrot.lane.b32.xlu0 %v1845, 20
      %v1922 = vpop.permute.xlu0 %1921
      %1923 = vrot.lane.b32.xlu0 %v1852, 20
      %v1924 = vpop.permute.xlu0 %1923
      %1925 = vrot.lane.b32.xlu0 %v1859, 20
      %v1926 = vpop.permute.xlu0 %1925
      %1927 = vrot.lane.b32.xlu0 %v1866, 20
      %v1928 = vpop.permute.xlu0 %1927
      %1929 = vrot.lane.b32.xlu0 %v1873, 20
      %v1930 = vpop.permute.xlu0 %1929
      %1931 = vrot.lane.b32.xlu0 %v1880, 20
      %v1932 = vpop.permute.xlu0 %1931
      %1933 = vrot.lane.b32.xlu0 %v1887, 20
      %v1934 = vpop.permute.xlu0 %1933
      %1935 = vrot.lane.b32.xlu0 %v1894, 20
      %v1936 = vpop.permute.xlu0 %1935
      %1937 = vrot.lane.b32.xlu0 %v1901, 20
      %v1938 = vpop.permute.xlu0 %1937
      %1939 = vrot.lane.b32.xlu0 %v1908, 20
      %v1940 = vpop.permute.xlu0 %1939
      %vm1957 = vcmask 195744
      %vm1958 = vmand %vm1957, %vm1119
      %v1959 = vld [vmem:[#allocation2] sm:$0xff]
      %v1960 = vsel %vm1958, %v1910, %v1959
      %1961 = vst [vmem:[#allocation2] sm:$0xff] %v1960
      %v1962 = vld [vmem:[#allocation2 + $0x8] sm:$0xff]
      %v1963 = vsel %vm1958, %v1912, %v1962
      %1964 = vst [vmem:[#allocation2 + $0x8] sm:$0xff] %v1963
      %v1965 = vld [vmem:[#allocation2 + $0x10] sm:$0xff]
      %v1966 = vsel %vm1958, %v1914, %v1965
      %1967 = vst [vmem:[#allocation2 + $0x10] sm:$0xff] %v1966
      %v1968 = vld [vmem:[#allocation2 + $0x18] sm:$0xff]
      %v1969 = vsel %vm1958, %v1916, %v1968
      %1970 = vst [vmem:[#allocation2 + $0x18] sm:$0xff] %v1969
      %v1971 = vld [vmem:[#allocation2 + $0x20] sm:$0xff]
      %v1972 = vsel %vm1958, %v1918, %v1971
      %1973 = vst [vmem:[#allocation2 + $0x20] sm:$0xff] %v1972
      %v1974 = vld [vmem:[#allocation2 + $0x28] sm:$0xff]
      %v1975 = vsel %vm1958, %v1920, %v1974
      %1976 = vst [vmem:[#allocation2 + $0x28] sm:$0xff] %v1975
      %v1977 = vld [vmem:[#allocation2 + $0x30] sm:$0xff]
      %v1978 = vsel %vm1958, %v1922, %v1977
      %1979 = vst [vmem:[#allocation2 + $0x30] sm:$0xff] %v1978
      %v1980 = vld [vmem:[#allocation2 + $0x38] sm:$0xff]
      %v1981 = vsel %vm1958, %v1924, %v1980
      %1982 = vst [vmem:[#allocation2 + $0x38] sm:$0xff] %v1981
      %v1983 = vld [vmem:[#allocation2 + $0x40] sm:$0xff]
      %v1984 = vsel %vm1958, %v1926, %v1983
      %1985 = vst [vmem:[#allocation2 + $0x40] sm:$0xff] %v1984
      %v1986 = vld [vmem:[#allocation2 + $0x48] sm:$0xff]
      %v1987 = vsel %vm1958, %v1928, %v1986
      %1988 = vst [vmem:[#allocation2 + $0x48] sm:$0xff] %v1987
      %v1989 = vld [vmem:[#allocation2 + $0x50] sm:$0xff]
      %v1990 = vsel %vm1958, %v1930, %v1989
      %1991 = vst [vmem:[#allocation2 + $0x50] sm:$0xff] %v1990
      %v1992 = vld [vmem:[#allocation2 + $0x58] sm:$0xff]
      %v1993 = vsel %vm1958, %v1932, %v1992
      %1994 = vst [vmem:[#allocation2 + $0x58] sm:$0xff] %v1993
      %v1995 = vld [vmem:[#allocation2 + $0x60] sm:$0xff]
      %v1996 = vsel %vm1958, %v1934, %v1995
      %1997 = vst [vmem:[#allocation2 + $0x60] sm:$0xff] %v1996
      %v1998 = vld [vmem:[#allocation2 + $0x68] sm:$0xff]
      %v1999 = vsel %vm1958, %v1936, %v1998
      %2000 = vst [vmem:[#allocation2 + $0x68] sm:$0xff] %v1999
      %v2001 = vld [vmem:[#allocation2 + $0x70] sm:$0xff]
      %v2002 = vsel %vm1958, %v1938, %v2001
      %2003 = vst [vmem:[#allocation2 + $0x70] sm:$0xff] %v2002
      %v2004 = vld [vmem:[#allocation2 + $0x78] sm:$0xff]
      %v2005 = vsel %vm1958, %v1940, %v2004
      %2006 = vst [vmem:[#allocation2 + $0x78] sm:$0xff] %v2005
      %s2007 = scalar_lea.vmem %s346, 8
      %v2008 = vld [vmem:[%s2007] sm:$0xf]
      %v2009 = vld [vmem:[%s2007 + $0x4] sm:$0xf]
      %v2010 = vld [vmem:[%s2007 + $0x8] sm:$0xf]
      %v2011 = vld [vmem:[%s2007 + $0xc] sm:$0xf]
      %v2012 = vld [vmem:[%s2007 + $0x10] sm:$0xf]
      %v2013 = vld [vmem:[%s2007 + $0x14] sm:$0xf]
      %v2014 = vld [vmem:[%s2007 + $0x18] sm:$0xf]
      %v2015 = vld [vmem:[%s2007 + $0x1c] sm:$0xf]
      %v2016 = vld [vmem:[%s2007 + $0x20] sm:$0xf]
      %v2017 = vld [vmem:[%s2007 + $0x24] sm:$0xf]
      %v2018 = vld [vmem:[%s2007 + $0x28] sm:$0xf]
      %v2019 = vld [vmem:[%s2007 + $0x2c] sm:$0xf]
      %v2020 = vld [vmem:[%s2007 + $0x30] sm:$0xf]
      %v2021 = vld [vmem:[%s2007 + $0x34] sm:$0xf]
      %v2022 = vld [vmem:[%s2007 + $0x38] sm:$0xf]
      %v2023 = vld [vmem:[%s2007 + $0x3c] sm:$0xf]
      %v2024 = vld [vmem:[%s2007 + $0x40] sm:$0xf]
      %v2025 = vld [vmem:[%s2007 + $0x44] sm:$0xf]
      %v2026 = vld [vmem:[%s2007 + $0x48] sm:$0xf]
      %v2027 = vld [vmem:[%s2007 + $0x4c] sm:$0xf]
      %v2028 = vld [vmem:[%s2007 + $0x50] sm:$0xf]
      %v2029 = vld [vmem:[%s2007 + $0x54] sm:$0xf]
      %v2030 = vld [vmem:[%s2007 + $0x58] sm:$0xf]
      %v2031 = vld [vmem:[%s2007 + $0x5c] sm:$0xf]
      %v2032 = vld [vmem:[%s2007 + $0x60] sm:$0xf]
      %v2033 = vld [vmem:[%s2007 + $0x64] sm:$0xf]
      %v2034 = vld [vmem:[%s2007 + $0x68] sm:$0xf]
      %v2035 = vld [vmem:[%s2007 + $0x6c] sm:$0xf]
      %v2036 = vld [vmem:[%s2007 + $0x70] sm:$0xf]
      %v2037 = vld [vmem:[%s2007 + $0x74] sm:$0xf]
      %v2068 = vunpack.c.l.b16 %v2008
      %v2069 = vunpack.c.l.b16 %v2009
      %v2070 = vunpack.c.l.b16 %v2010
      %v2071 = vunpack.c.l.b16 %v2011
      %v2072 = vunpack.c.l.b16 %v2012
      %v2073 = vunpack.c.l.b16 %v2013
      %v2074 = vunpack.c.l.b16 %v2014
      %v2075 = vunpack.c.l.b16 %v2015
      %v2076 = vunpack.c.l.b16 %v2016
      %v2077 = vunpack.c.l.b16 %v2017
      %v2078 = vunpack.c.l.b16 %v2018
      %v2079 = vunpack.c.l.b16 %v2019
      %v2080 = vunpack.c.l.b16 %v2020
      %v2081 = vunpack.c.l.b16 %v2021
      %v2082 = vunpack.c.l.b16 %v2022
      %v2083 = vunpack.c.l.b16 %v2023
      %v2084 = vunpack.c.l.b16 %v2024
      %v2085 = vunpack.c.l.b16 %v2025
      %v2086 = vunpack.c.l.b16 %v2026
      %v2087 = vunpack.c.l.b16 %v2027
      %v2088 = vunpack.c.l.b16 %v2028
      %v2089 = vunpack.c.l.b16 %v2029
      %v2090 = vunpack.c.l.b16 %v2030
      %v2091 = vunpack.c.l.b16 %v2031
      %v2092 = vunpack.c.l.b16 %v2032
      %v2093 = vunpack.c.l.b16 %v2033
      %v2094 = vunpack.c.l.b16 %v2034
      %v2095 = vunpack.c.l.b16 %v2035
      %v2096 = vunpack.c.l.b16 %v2036
      %v2097 = vunpack.c.l.b16 %v2037
      %v2098 = vpack.c.b16 %v2069, %v2068
      %v2099 = vpack.c.b16 %v2071, %v2070
      %v2100 = vpack.c.b16 %v2073, %v2072
      %v2101 = vpack.c.b16 %v2075, %v2074
      %v2102 = vpack.c.b16 %v2077, %v2076
      %v2103 = vpack.c.b16 %v2079, %v2078
      %v2104 = vpack.c.b16 %v2081, %v2080
      %v2105 = vpack.c.b16 %v2083, %v2082
      %v2106 = vpack.c.b16 %v2085, %v2084
      %v2107 = vpack.c.b16 %v2087, %v2086
      %v2108 = vpack.c.b16 %v2089, %v2088
      %v2109 = vpack.c.b16 %v2091, %v2090
      %v2110 = vpack.c.b16 %v2093, %v2092
      %v2111 = vpack.c.b16 %v2095, %v2094
      %v2112 = vpack.c.b16 %v2097, %v2096
      %v2114 = vshrl.u32 %v2098, 16
      %v2116 = vrot.slane %v2114, 7
      %v2117 = vshll.u32 %v2098, 16
      %v2119 = vor.u32 %v2116, %v2117
      %v2121 = vshrl.u32 %v2099, 16
      %v2123 = vrot.slane %v2121, 7
      %v2124 = vshll.u32 %v2099, 16
      %v2126 = vor.u32 %v2123, %v2124
      %v2128 = vshrl.u32 %v2100, 16
      %v2130 = vrot.slane %v2128, 7
      %v2131 = vshll.u32 %v2100, 16
      %v2133 = vor.u32 %v2130, %v2131
      %v2135 = vshrl.u32 %v2101, 16
      %v2137 = vrot.slane %v2135, 7
      %v2138 = vshll.u32 %v2101, 16
      %v2140 = vor.u32 %v2137, %v2138
      %v2142 = vshrl.u32 %v2102, 16
      %v2144 = vrot.slane %v2142, 7
      %v2145 = vshll.u32 %v2102, 16
      %v2147 = vor.u32 %v2144, %v2145
      %v2149 = vshrl.u32 %v2103, 16
      %v2151 = vrot.slane %v2149, 7
      %v2152 = vshll.u32 %v2103, 16
      %v2154 = vor.u32 %v2151, %v2152
      %v2156 = vshrl.u32 %v2104, 16
      %v2158 = vrot.slane %v2156, 7
      %v2159 = vshll.u32 %v2104, 16
      %v2161 = vor.u32 %v2158, %v2159
      %v2163 = vshrl.u32 %v2105, 16
      %v2165 = vrot.slane %v2163, 7
      %v2166 = vshll.u32 %v2105, 16
      %v2168 = vor.u32 %v2165, %v2166
      %v2170 = vshrl.u32 %v2106, 16
      %v2172 = vrot.slane %v2170, 7
      %v2173 = vshll.u32 %v2106, 16
      %v2175 = vor.u32 %v2172, %v2173
      %v2177 = vshrl.u32 %v2107, 16
      %v2179 = vrot.slane %v2177, 7
      %v2180 = vshll.u32 %v2107, 16
      %v2182 = vor.u32 %v2179, %v2180
      %v2184 = vshrl.u32 %v2108, 16
      %v2186 = vrot.slane %v2184, 7
      %v2187 = vshll.u32 %v2108, 16
      %v2189 = vor.u32 %v2186, %v2187
      %v2191 = vshrl.u32 %v2109, 16
      %v2193 = vrot.slane %v2191, 7
      %v2194 = vshll.u32 %v2109, 16
      %v2196 = vor.u32 %v2193, %v2194
      %v2198 = vshrl.u32 %v2110, 16
      %v2200 = vrot.slane %v2198, 7
      %v2201 = vshll.u32 %v2110, 16
      %v2203 = vor.u32 %v2200, %v2201
      %v2205 = vshrl.u32 %v2111, 16
      %v2207 = vrot.slane %v2205, 7
      %v2208 = vshll.u32 %v2111, 16
      %v2210 = vor.u32 %v2207, %v2208
      %v2212 = vshrl.u32 %v2112, 16
      %v2214 = vrot.slane %v2212, 7
      %v2215 = vshll.u32 %v2112, 16
      %v2217 = vor.u32 %v2214, %v2215
      %2218 = vrot.lane.b32.xlu0 %v2119, 24
      %v2219 = vpop.permute.xlu0 %2218
      %2220 = vrot.lane.b32.xlu0 %v2126, 24
      %v2221 = vpop.permute.xlu0 %2220
      %2222 = vrot.lane.b32.xlu0 %v2133, 24
      %v2223 = vpop.permute.xlu0 %2222
      %2224 = vrot.lane.b32.xlu0 %v2140, 24
      %v2225 = vpop.permute.xlu0 %2224
      %2226 = vrot.lane.b32.xlu0 %v2147, 24
      %v2227 = vpop.permute.xlu0 %2226
      %2228 = vrot.lane.b32.xlu0 %v2154, 24
      %v2229 = vpop.permute.xlu0 %2228
      %2230 = vrot.lane.b32.xlu0 %v2161, 24
      %v2231 = vpop.permute.xlu0 %2230
      %2232 = vrot.lane.b32.xlu0 %v2168, 24
      %v2233 = vpop.permute.xlu0 %2232
      %2234 = vrot.lane.b32.xlu0 %v2175, 24
      %v2235 = vpop.permute.xlu0 %2234
      %2236 = vrot.lane.b32.xlu0 %v2182, 24
      %v2237 = vpop.permute.xlu0 %2236
      %2238 = vrot.lane.b32.xlu0 %v2189, 24
      %v2239 = vpop.permute.xlu0 %2238
      %2240 = vrot.lane.b32.xlu0 %v2196, 24
      %v2241 = vpop.permute.xlu0 %2240
      %2242 = vrot.lane.b32.xlu0 %v2203, 24
      %v2243 = vpop.permute.xlu0 %2242
      %2244 = vrot.lane.b32.xlu0 %v2210, 24
      %v2245 = vpop.permute.xlu0 %2244
      %2246 = vrot.lane.b32.xlu0 %v2217, 24
      %v2247 = vpop.permute.xlu0 %2246
      %vm2263 = vcmask 228544
      %vm2264 = vmand %vm2263, %vm621
      %v2265 = vld [vmem:[#allocation2] sm:$0xff]
      %v2266 = vsel %vm2264, %v2219, %v2265
      %2267 = vst [vmem:[#allocation2] sm:$0xff] %v2266
      %v2268 = vld [vmem:[#allocation2 + $0x8] sm:$0xff]
      %v2269 = vsel %vm2264, %v2221, %v2268
      %2270 = vst [vmem:[#allocation2 + $0x8] sm:$0xff] %v2269
      %v2271 = vld [vmem:[#allocation2 + $0x10] sm:$0xff]
      %v2272 = vsel %vm2264, %v2223, %v2271
      %2273 = vst [vmem:[#allocation2 + $0x10] sm:$0xff] %v2272
      %v2274 = vld [vmem:[#allocation2 + $0x18] sm:$0xff]
      %v2275 = vsel %vm2264, %v2225, %v2274
      %2276 = vst [vmem:[#allocation2 + $0x18] sm:$0xff] %v2275
      %v2277 = vld [vmem:[#allocation2 + $0x20] sm:$0xff]
      %v2278 = vsel %vm2264, %v2227, %v2277
      %2279 = vst [vmem:[#allocation2 + $0x20] sm:$0xff] %v2278
      %v2280 = vld [vmem:[#allocation2 + $0x28] sm:$0xff]
      %v2281 = vsel %vm2264, %v2229, %v2280
      %2282 = vst [vmem:[#allocation2 + $0x28] sm:$0xff] %v2281
      %v2283 = vld [vmem:[#allocation2 + $0x30] sm:$0xff]
      %v2284 = vsel %vm2264, %v2231, %v2283
      %2285 = vst [vmem:[#allocation2 + $0x30] sm:$0xff] %v2284
      %v2286 = vld [vmem:[#allocation2 + $0x38] sm:$0xff]
      %v2287 = vsel %vm2264, %v2233, %v2286
      %2288 = vst [vmem:[#allocation2 + $0x38] sm:$0xff] %v2287
      %v2289 = vld [vmem:[#allocation2 + $0x40] sm:$0xff]
      %v2290 = vsel %vm2264, %v2235, %v2289
      %2291 = vst [vmem:[#allocation2 + $0x40] sm:$0xff] %v2290
      %v2292 = vld [vmem:[#allocation2 + $0x48] sm:$0xff]
      %v2293 = vsel %vm2264, %v2237, %v2292
      %2294 = vst [vmem:[#allocation2 + $0x48] sm:$0xff] %v2293
      %v2295 = vld [vmem:[#allocation2 + $0x50] sm:$0xff]
      %v2296 = vsel %vm2264, %v2239, %v2295
      %2297 = vst [vmem:[#allocation2 + $0x50] sm:$0xff] %v2296
      %v2298 = vld [vmem:[#allocation2 + $0x58] sm:$0xff]
      %v2299 = vsel %vm2264, %v2241, %v2298
      %2300 = vst [vmem:[#allocation2 + $0x58] sm:$0xff] %v2299
      %v2301 = vld [vmem:[#allocation2 + $0x60] sm:$0xff]
      %v2302 = vsel %vm2264, %v2243, %v2301
      %2303 = vst [vmem:[#allocation2 + $0x60] sm:$0xff] %v2302
      %v2304 = vld [vmem:[#allocation2 + $0x68] sm:$0xff]
      %v2305 = vsel %vm2264, %v2245, %v2304
      %2306 = vst [vmem:[#allocation2 + $0x68] sm:$0xff] %v2305
      %v2307 = vld [vmem:[#allocation2 + $0x70] sm:$0xff]
      %v2308 = vsel %vm2264, %v2247, %v2307
      %2309 = vst [vmem:[#allocation2 + $0x70] sm:$0xff] %v2308
      %v2310 = vld [vmem:[%s377] sm:$0xf]
      %v2311 = vld [vmem:[%s377 + $0x4] sm:$0xf]
      %v2314 = vunpack.c.l.b16 %v2310
      %v2315 = vunpack.c.l.b16 %v2311
      %v2316 = vpack.c.b16 %v2315, %v2314
      %v2318 = vshrl.u32 %v2316, 16
      %v2320 = vrot.slane %v2318, 7
      %v2321 = vshll.u32 %v2316, 16
      %v2323 = vor.u32 %v2320, %v2321
      %2324 = vrot.lane.b32.xlu0 %v2323, 24
      %v2325 = vpop.permute.xlu0 %2324
      %s2327 = scalar_lea.vmem [#allocation2], 120
      %v2328 = vld [vmem:[%s2327] sm:$0xff]
      %v2329 = vsel %vm2264, %v2325, %v2328
      %2330 = vst [vmem:[%s2327] sm:$0xff] %v2329
      %v2331 = vld [vmem:[%s2007] sm:$0xf]
      %v2332 = vld [vmem:[%s2007 + $0x4] sm:$0xf]
      %v2333 = vld [vmem:[%s2007 + $0x8] sm:$0xf]
      %v2334 = vld [vmem:[%s2007 + $0xc] sm:$0xf]
      %v2335 = vld [vmem:[%s2007 + $0x10] sm:$0xf]
      %v2336 = vld [vmem:[%s2007 + $0x14] sm:$0xf]
      %v2337 = vld [vmem:[%s2007 + $0x18] sm:$0xf]
      %v2338 = vld [vmem:[%s2007 + $0x1c] sm:$0xf]
      %v2339 = vld [vmem:[%s2007 + $0x20] sm:$0xf]
      %v2340 = vld [vmem:[%s2007 + $0x24] sm:$0xf]
      %v2341 = vld [vmem:[%s2007 + $0x28] sm:$0xf]
      %v2342 = vld [vmem:[%s2007 + $0x2c] sm:$0xf]
      %v2343 = vld [vmem:[%s2007 + $0x30] sm:$0xf]
      %v2344 = vld [vmem:[%s2007 + $0x34] sm:$0xf]
      %v2345 = vld [vmem:[%s2007 + $0x38] sm:$0xf]
      %v2346 = vld [vmem:[%s2007 + $0x3c] sm:$0xf]
      %v2347 = vld [vmem:[%s2007 + $0x40] sm:$0xf]
      %v2348 = vld [vmem:[%s2007 + $0x44] sm:$0xf]
      %v2349 = vld [vmem:[%s2007 + $0x48] sm:$0xf]
      %v2350 = vld [vmem:[%s2007 + $0x4c] sm:$0xf]
      %v2351 = vld [vmem:[%s2007 + $0x50] sm:$0xf]
      %v2352 = vld [vmem:[%s2007 + $0x54] sm:$0xf]
      %v2353 = vld [vmem:[%s2007 + $0x58] sm:$0xf]
      %v2354 = vld [vmem:[%s2007 + $0x5c] sm:$0xf]
      %v2355 = vld [vmem:[%s2007 + $0x60] sm:$0xf]
      %v2356 = vld [vmem:[%s2007 + $0x64] sm:$0xf]
      %v2357 = vld [vmem:[%s2007 + $0x68] sm:$0xf]
      %v2358 = vld [vmem:[%s2007 + $0x6c] sm:$0xf]
      %v2359 = vld [vmem:[%s2007 + $0x70] sm:$0xf]
      %v2360 = vld [vmem:[%s2007 + $0x74] sm:$0xf]
      %v2391 = vunpack.c.l.b16 %v2331
      %v2392 = vunpack.c.l.b16 %v2332
      %v2393 = vunpack.c.l.b16 %v2333
      %v2394 = vunpack.c.l.b16 %v2334
      %v2395 = vunpack.c.l.b16 %v2335
      %v2396 = vunpack.c.l.b16 %v2336
      %v2397 = vunpack.c.l.b16 %v2337
      %v2398 = vunpack.c.l.b16 %v2338
      %v2399 = vunpack.c.l.b16 %v2339
      %v2400 = vunpack.c.l.b16 %v2340
      %v2401 = vunpack.c.l.b16 %v2341
      %v2402 = vunpack.c.l.b16 %v2342
      %v2403 = vunpack.c.l.b16 %v2343
      %v2404 = vunpack.c.l.b16 %v2344
      %v2405 = vunpack.c.l.b16 %v2345
      %v2406 = vunpack.c.l.b16 %v2346
      %v2407 = vunpack.c.l.b16 %v2347
      %v2408 = vunpack.c.l.b16 %v2348
      %v2409 = vunpack.c.l.b16 %v2349
      %v2410 = vunpack.c.l.b16 %v2350
      %v2411 = vunpack.c.l.b16 %v2351
      %v2412 = vunpack.c.l.b16 %v2352
      %v2413 = vunpack.c.l.b16 %v2353
      %v2414 = vunpack.c.l.b16 %v2354
      %v2415 = vunpack.c.l.b16 %v2355
      %v2416 = vunpack.c.l.b16 %v2356
      %v2417 = vunpack.c.l.b16 %v2357
      %v2418 = vunpack.c.l.b16 %v2358
      %v2419 = vunpack.c.l.b16 %v2359
      %v2420 = vunpack.c.l.b16 %v2360
      %v2421 = vpack.c.b16 %v2392, %v2391
      %v2422 = vpack.c.b16 %v2394, %v2393
      %v2423 = vpack.c.b16 %v2396, %v2395
      %v2424 = vpack.c.b16 %v2398, %v2397
      %v2425 = vpack.c.b16 %v2400, %v2399
      %v2426 = vpack.c.b16 %v2402, %v2401
      %v2427 = vpack.c.b16 %v2404, %v2403
      %v2428 = vpack.c.b16 %v2406, %v2405
      %v2429 = vpack.c.b16 %v2408, %v2407
      %v2430 = vpack.c.b16 %v2410, %v2409
      %v2431 = vpack.c.b16 %v2412, %v2411
      %v2432 = vpack.c.b16 %v2414, %v2413
      %v2433 = vpack.c.b16 %v2416, %v2415
      %v2434 = vpack.c.b16 %v2418, %v2417
      %v2435 = vpack.c.b16 %v2420, %v2419
      %2436 = vrot.lane.b32.xlu0 %v2421, 28
      %v2437 = vpop.permute.xlu0 %2436
      %2438 = vrot.lane.b32.xlu0 %v2422, 28
      %v2439 = vpop.permute.xlu0 %2438
      %2440 = vrot.lane.b32.xlu0 %v2423, 28
      %v2441 = vpop.permute.xlu0 %2440
      %2442 = vrot.lane.b32.xlu0 %v2424, 28
      %v2443 = vpop.permute.xlu0 %2442
      %2444 = vrot.lane.b32.xlu0 %v2425, 28
      %v2445 = vpop.permute.xlu0 %2444
      %2446 = vrot.lane.b32.xlu0 %v2426, 28
      %v2447 = vpop.permute.xlu0 %2446
      %2448 = vrot.lane.b32.xlu0 %v2427, 28
      %v2449 = vpop.permute.xlu0 %2448
      %2450 = vrot.lane.b32.xlu0 %v2428, 28
      %v2451 = vpop.permute.xlu0 %2450
      %2452 = vrot.lane.b32.xlu0 %v2429, 28
      %v2453 = vpop.permute.xlu0 %2452
      %2454 = vrot.lane.b32.xlu0 %v2430, 28
      %v2455 = vpop.permute.xlu0 %2454
      %2456 = vrot.lane.b32.xlu0 %v2431, 28
      %v2457 = vpop.permute.xlu0 %2456
      %2458 = vrot.lane.b32.xlu0 %v2432, 28
      %v2459 = vpop.permute.xlu0 %2458
      %2460 = vrot.lane.b32.xlu0 %v2433, 28
      %v2461 = vpop.permute.xlu0 %2460
      %2462 = vrot.lane.b32.xlu0 %v2434, 28
      %v2463 = vpop.permute.xlu0 %2462
      %2464 = vrot.lane.b32.xlu0 %v2435, 28
      %v2465 = vpop.permute.xlu0 %2464
      %vm2481 = vcmask 261344
      %2482 = vst.msk [vmem:[#allocation2] sm:$0xff] %vm2481, %v2437
      %2483 = vst.msk [vmem:[#allocation2 + $0x8] sm:$0xff] %vm2481, %v2439
      %2484 = vst.msk [vmem:[#allocation2 + $0x10] sm:$0xff] %vm2481, %v2441
      %2485 = vst.msk [vmem:[#allocation2 + $0x18] sm:$0xff] %vm2481, %v2443
      %2486 = vst.msk [vmem:[#allocation2 + $0x20] sm:$0xff] %vm2481, %v2445
      %2487 = vst.msk [vmem:[#allocation2 + $0x28] sm:$0xff] %vm2481, %v2447
      %2488 = vst.msk [vmem:[#allocation2 + $0x30] sm:$0xff] %vm2481, %v2449
      %2489 = vst.msk [vmem:[#allocation2 + $0x38] sm:$0xff] %vm2481, %v2451
      %2490 = vst.msk [vmem:[#allocation2 + $0x40] sm:$0xff] %vm2481, %v2453
      %2491 = vst.msk [vmem:[#allocation2 + $0x48] sm:$0xff] %vm2481, %v2455
      %2492 = vst.msk [vmem:[#allocation2 + $0x50] sm:$0xff] %vm2481, %v2457
      %2493 = vst.msk [vmem:[#allocation2 + $0x58] sm:$0xff] %vm2481, %v2459
      %2494 = vst.msk [vmem:[#allocation2 + $0x60] sm:$0xff] %vm2481, %v2461
      %2495 = vst.msk [vmem:[#allocation2 + $0x68] sm:$0xff] %vm2481, %v2463
      %2496 = vst.msk [vmem:[#allocation2 + $0x70] sm:$0xff] %vm2481, %v2465
      %v2497 = vld [vmem:[%s377] sm:$0xf]
      %v2498 = vld [vmem:[%s377 + $0x4] sm:$0xf]
      %v2501 = vunpack.c.l.b16 %v2497
      %v2502 = vunpack.c.l.b16 %v2498
      %v2503 = vpack.c.b16 %v2502, %v2501
      %2504 = vrot.lane.b32.xlu0 %v2503, 28
      %v2505 = vpop.permute.xlu0 %2504
      %2507 = vst.msk [vmem:[%s2327] sm:$0xff] %vm2481, %v2505
      %v2508 = vld [vmem:[%s2007] sm:$0xf]
      %v2509 = vld [vmem:[%s2007 + $0x4] sm:$0xf]
      %v2510 = vld [vmem:[%s2007 + $0x8] sm:$0xf]
      %v2511 = vld [vmem:[%s2007 + $0xc] sm:$0xf]
      %v2512 = vld [vmem:[%s2007 + $0x10] sm:$0xf]
      %v2513 = vld [vmem:[%s2007 + $0x14] sm:$0xf]
      %v2514 = vld [vmem:[%s2007 + $0x18] sm:$0xf]
      %v2515 = vld [vmem:[%s2007 + $0x1c] sm:$0xf]
      %v2516 = vld [vmem:[%s2007 + $0x20] sm:$0xf]
      %v2517 = vld [vmem:[%s2007 + $0x24] sm:$0xf]
      %v2518 = vld [vmem:[%s2007 + $0x28] sm:$0xf]
      %v2519 = vld [vmem:[%s2007 + $0x2c] sm:$0xf]
      %v2520 = vld [vmem:[%s2007 + $0x30] sm:$0xf]
      %v2521 = vld [vmem:[%s2007 + $0x34] sm:$0xf]
      %v2522 = vld [vmem:[%s2007 + $0x38] sm:$0xf]
      %v2523 = vld [vmem:[%s2007 + $0x3c] sm:$0xf]
      %v2524 = vld [vmem:[%s2007 + $0x40] sm:$0xf]
      %v2525 = vld [vmem:[%s2007 + $0x44] sm:$0xf]
      %v2526 = vld [vmem:[%s2007 + $0x48] sm:$0xf]
      %v2527 = vld [vmem:[%s2007 + $0x4c] sm:$0xf]
      %v2528 = vld [vmem:[%s2007 + $0x50] sm:$0xf]
      %v2529 = vld [vmem:[%s2007 + $0x54] sm:$0xf]
      %v2530 = vld [vmem:[%s2007 + $0x58] sm:$0xf]
      %v2531 = vld [vmem:[%s2007 + $0x5c] sm:$0xf]
      %v2532 = vld [vmem:[%s2007 + $0x60] sm:$0xf]
      %v2533 = vld [vmem:[%s2007 + $0x64] sm:$0xf]
      %v2534 = vld [vmem:[%s2007 + $0x68] sm:$0xf]
      %v2535 = vld [vmem:[%s2007 + $0x6c] sm:$0xf]
      %v2536 = vld [vmem:[%s2007 + $0x70] sm:$0xf]
      %v2537 = vld [vmem:[%s2007 + $0x74] sm:$0xf]
      %v2568 = vunpack.c.l.b16 %v2508
      %v2569 = vunpack.c.l.b16 %v2509
      %v2570 = vunpack.c.l.b16 %v2510
      %v2571 = vunpack.c.l.b16 %v2511
      %v2572 = vunpack.c.l.b16 %v2512
      %v2573 = vunpack.c.l.b16 %v2513
      %v2574 = vunpack.c.l.b16 %v2514
      %v2575 = vunpack.c.l.b16 %v2515
      %v2576 = vunpack.c.l.b16 %v2516
      %v2577 = vunpack.c.l.b16 %v2517
      %v2578 = vunpack.c.l.b16 %v2518
      %v2579 = vunpack.c.l.b16 %v2519
      %v2580 = vunpack.c.l.b16 %v2520
      %v2581 = vunpack.c.l.b16 %v2521
      %v2582 = vunpack.c.l.b16 %v2522
      %v2583 = vunpack.c.l.b16 %v2523
      %v2584 = vunpack.c.l.b16 %v2524
      %v2585 = vunpack.c.l.b16 %v2525
      %v2586 = vunpack.c.l.b16 %v2526
      %v2587 = vunpack.c.l.b16 %v2527
      %v2588 = vunpack.c.l.b16 %v2528
      %v2589 = vunpack.c.l.b16 %v2529
      %v2590 = vunpack.c.l.b16 %v2530
      %v2591 = vunpack.c.l.b16 %v2531
      %v2592 = vunpack.c.l.b16 %v2532
      %v2593 = vunpack.c.l.b16 %v2533
      %v2594 = vunpack.c.l.b16 %v2534
      %v2595 = vunpack.c.l.b16 %v2535
      %v2596 = vunpack.c.l.b16 %v2536
      %v2597 = vunpack.c.l.b16 %v2537
      %v2598 = vpack.c.b16 %v2569, %v2568
      %v2599 = vpack.c.b16 %v2571, %v2570
      %v2600 = vpack.c.b16 %v2573, %v2572
      %v2601 = vpack.c.b16 %v2575, %v2574
      %v2602 = vpack.c.b16 %v2577, %v2576
      %v2603 = vpack.c.b16 %v2579, %v2578
      %v2604 = vpack.c.b16 %v2581, %v2580
      %v2605 = vpack.c.b16 %v2583, %v2582
      %v2606 = vpack.c.b16 %v2585, %v2584
      %v2607 = vpack.c.b16 %v2587, %v2586
      %v2608 = vpack.c.b16 %v2589, %v2588
      %v2609 = vpack.c.b16 %v2591, %v2590
      %v2610 = vpack.c.b16 %v2593, %v2592
      %v2611 = vpack.c.b16 %v2595, %v2594
      %v2612 = vpack.c.b16 %v2597, %v2596
      %v2614 = vshrl.u32 %v2598, 16
      %v2616 = vshll.u32 %v2598, 16
      %v2618 = vrot.slane %v2616, 1
      %v2619 = vor.u32 %v2614, %v2618
      %v2621 = vshrl.u32 %v2599, 16
      %v2623 = vshll.u32 %v2599, 16
      %v2625 = vrot.slane %v2623, 1
      %v2626 = vor.u32 %v2621, %v2625
      %v2628 = vshrl.u32 %v2600, 16
      %v2630 = vshll.u32 %v2600, 16
      %v2632 = vrot.slane %v2630, 1
      %v2633 = vor.u32 %v2628, %v2632
      %v2635 = vshrl.u32 %v2601, 16
      %v2637 = vshll.u32 %v2601, 16
      %v2639 = vrot.slane %v2637, 1
      %v2640 = vor.u32 %v2635, %v2639
      %v2642 = vshrl.u32 %v2602, 16
      %v2644 = vshll.u32 %v2602, 16
      %v2646 = vrot.slane %v2644, 1
      %v2647 = vor.u32 %v2642, %v2646
      %v2649 = vshrl.u32 %v2603, 16
      %v2651 = vshll.u32 %v2603, 16
      %v2653 = vrot.slane %v2651, 1
      %v2654 = vor.u32 %v2649, %v2653
      %v2656 = vshrl.u32 %v2604, 16
      %v2658 = vshll.u32 %v2604, 16
      %v2660 = vrot.slane %v2658, 1
      %v2661 = vor.u32 %v2656, %v2660
      %v2663 = vshrl.u32 %v2605, 16
      %v2665 = vshll.u32 %v2605, 16
      %v2667 = vrot.slane %v2665, 1
      %v2668 = vor.u32 %v2663, %v2667
      %v2670 = vshrl.u32 %v2606, 16
      %v2672 = vshll.u32 %v2606, 16
      %v2674 = vrot.slane %v2672, 1
      %v2675 = vor.u32 %v2670, %v2674
      %v2677 = vshrl.u32 %v2607, 16
      %v2679 = vshll.u32 %v2607, 16
      %v2681 = vrot.slane %v2679, 1
      %v2682 = vor.u32 %v2677, %v2681
      %v2684 = vshrl.u32 %v2608, 16
      %v2686 = vshll.u32 %v2608, 16
      %v2688 = vrot.slane %v2686, 1
      %v2689 = vor.u32 %v2684, %v2688
      %v2691 = vshrl.u32 %v2609, 16
      %v2693 = vshll.u32 %v2609, 16
      %v2695 = vrot.slane %v2693, 1
      %v2696 = vor.u32 %v2691, %v2695
      %v2698 = vshrl.u32 %v2610, 16
      %v2700 = vshll.u32 %v2610, 16
      %v2702 = vrot.slane %v2700, 1
      %v2703 = vor.u32 %v2698, %v2702
      %v2705 = vshrl.u32 %v2611, 16
      %v2707 = vshll.u32 %v2611, 16
      %v2709 = vrot.slane %v2707, 1
      %v2710 = vor.u32 %v2705, %v2709
      %v2712 = vshrl.u32 %v2612, 16
      %v2714 = vshll.u32 %v2612, 16
      %v2716 = vrot.slane %v2714, 1
      %v2717 = vor.u32 %v2712, %v2716
      %2718 = vrot.lane.b32.xlu0 %v2619, 32
      %v2719 = vpop.permute.xlu0 %2718
      %2720 = vrot.lane.b32.xlu0 %v2626, 32
      %v2721 = vpop.permute.xlu0 %2720
      %2722 = vrot.lane.b32.xlu0 %v2633, 32
      %v2723 = vpop.permute.xlu0 %2722
      %2724 = vrot.lane.b32.xlu0 %v2640, 32
      %v2725 = vpop.permute.xlu0 %2724
      %2726 = vrot.lane.b32.xlu0 %v2647, 32
      %v2727 = vpop.permute.xlu0 %2726
      %2728 = vrot.lane.b32.xlu0 %v2654, 32
      %v2729 = vpop.permute.xlu0 %2728
      %2730 = vrot.lane.b32.xlu0 %v2661, 32
      %v2731 = vpop.permute.xlu0 %2730
      %2732 = vrot.lane.b32.xlu0 %v2668, 32
      %v2733 = vpop.permute.xlu0 %2732
      %2734 = vrot.lane.b32.xlu0 %v2675, 32
      %v2735 = vpop.permute.xlu0 %2734
      %2736 = vrot.lane.b32.xlu0 %v2682, 32
      %v2737 = vpop.permute.xlu0 %2736
      %2738 = vrot.lane.b32.xlu0 %v2689, 32
      %v2739 = vpop.permute.xlu0 %2738
      %2740 = vrot.lane.b32.xlu0 %v2696, 32
      %v2741 = vpop.permute.xlu0 %2740
      %2742 = vrot.lane.b32.xlu0 %v2703, 32
      %v2743 = vpop.permute.xlu0 %2742
      %2744 = vrot.lane.b32.xlu0 %v2710, 32
      %v2745 = vpop.permute.xlu0 %2744
      %2746 = vrot.lane.b32.xlu0 %v2717, 32
      %v2747 = vpop.permute.xlu0 %2746
      %vm2763 = vcmask 294144
      %vm2764 = vmand %vm2763, %vm1119
      %v2765 = vld [vmem:[#allocation2] sm:$0xff]
      %v2766 = vsel %vm2764, %v2719, %v2765
      %2767 = vst [vmem:[#allocation2] sm:$0xff] %v2766
      %v2768 = vld [vmem:[#allocation2 + $0x8] sm:$0xff]
      %v2769 = vsel %vm2764, %v2721, %v2768
      %2770 = vst [vmem:[#allocation2 + $0x8] sm:$0xff] %v2769
      %v2771 = vld [vmem:[#allocation2 + $0x10] sm:$0xff]
      %v2772 = vsel %vm2764, %v2723, %v2771
      %2773 = vst [vmem:[#allocation2 + $0x10] sm:$0xff] %v2772
      %v2774 = vld [vmem:[#allocation2 + $0x18] sm:$0xff]
      %v2775 = vsel %vm2764, %v2725, %v2774
      %2776 = vst [vmem:[#allocation2 + $0x18] sm:$0xff] %v2775
      %v2777 = vld [vmem:[#allocation2 + $0x20] sm:$0xff]
      %v2778 = vsel %vm2764, %v2727, %v2777
      %2779 = vst [vmem:[#allocation2 + $0x20] sm:$0xff] %v2778
      %v2780 = vld [vmem:[#allocation2 + $0x28] sm:$0xff]
      %v2781 = vsel %vm2764, %v2729, %v2780
      %2782 = vst [vmem:[#allocation2 + $0x28] sm:$0xff] %v2781
      %v2783 = vld [vmem:[#allocation2 + $0x30] sm:$0xff]
      %v2784 = vsel %vm2764, %v2731, %v2783
      %2785 = vst [vmem:[#allocation2 + $0x30] sm:$0xff] %v2784
      %v2786 = vld [vmem:[#allocation2 + $0x38] sm:$0xff]
      %v2787 = vsel %vm2764, %v2733, %v2786
      %2788 = vst [vmem:[#allocation2 + $0x38] sm:$0xff] %v2787
      %v2789 = vld [vmem:[#allocation2 + $0x40] sm:$0xff]
      %v2790 = vsel %vm2764, %v2735, %v2789
      %2791 = vst [vmem:[#allocation2 + $0x40] sm:$0xff] %v2790
      %v2792 = vld [vmem:[#allocation2 + $0x48] sm:$0xff]
      %v2793 = vsel %vm2764, %v2737, %v2792
      %2794 = vst [vmem:[#allocation2 + $0x48] sm:$0xff] %v2793
      %v2795 = vld [vmem:[#allocation2 + $0x50] sm:$0xff]
      %v2796 = vsel %vm2764, %v2739, %v2795
      %2797 = vst [vmem:[#allocation2 + $0x50] sm:$0xff] %v2796
      %v2798 = vld [vmem:[#allocation2 + $0x58] sm:$0xff]
      %v2799 = vsel %vm2764, %v2741, %v2798
      %2800 = vst [vmem:[#allocation2 + $0x58] sm:$0xff] %v2799
      %v2801 = vld [vmem:[#allocation2 + $0x60] sm:$0xff]
      %v2802 = vsel %vm2764, %v2743, %v2801
      %2803 = vst [vmem:[#allocation2 + $0x60] sm:$0xff] %v2802
      %v2804 = vld [vmem:[#allocation2 + $0x68] sm:$0xff]
      %v2805 = vsel %vm2764, %v2745, %v2804
      %2806 = vst [vmem:[#allocation2 + $0x68] sm:$0xff] %v2805
      %v2807 = vld [vmem:[#allocation2 + $0x70] sm:$0xff]
      %v2808 = vsel %vm2764, %v2747, %v2807
      %2809 = vst [vmem:[#allocation2 + $0x70] sm:$0xff] %v2808
      %v2810 = vld [vmem:[%s377] sm:$0xf]
      %v2811 = vld [vmem:[%s377 + $0x4] sm:$0xf]
      %v2814 = vunpack.c.l.b16 %v2810
      %v2815 = vunpack.c.l.b16 %v2811
      %v2816 = vpack.c.b16 %v2815, %v2814
      %v2818 = vshrl.u32 %v2816, 16
      %v2820 = vshll.u32 %v2816, 16
      %v2822 = vrot.slane %v2820, 1
      %v2823 = vor.u32 %v2818, %v2822
      %2824 = vrot.lane.b32.xlu0 %v2823, 32
      %v2825 = vpop.permute.xlu0 %2824
      %v2827 = vld [vmem:[%s2327] sm:$0xff]
      %v2828 = vsel %vm2764, %v2825, %v2827
      %2829 = vst [vmem:[%s2327] sm:$0xff] %v2828
      %vm2830 = vcmask 24576
      %vm2831 = vsmask.f32 256
      %vm2832 = vmand %vm2830, %vm2831
      %v2833 = vld [vmem:[#allocation2] sm:$0x1]
      %v2834 = vsel %vm2832, 0, %v2833
      %2835 = vst [vmem:[#allocation2] sm:$0x1] %v2834
      %v2836 = vld [vmem:[#allocation2 + $0x8] sm:$0x1]
      %v2837 = vsel %vm2832, 0, %v2836
      %2838 = vst [vmem:[#allocation2 + $0x8] sm:$0x1] %v2837
      %v2839 = vld [vmem:[#allocation2 + $0x10] sm:$0x1]
      %v2840 = vsel %vm2832, 0, %v2839
      %2841 = vst [vmem:[#allocation2 + $0x10] sm:$0x1] %v2840
      %v2842 = vld [vmem:[#allocation2 + $0x18] sm:$0x1]
      %v2843 = vsel %vm2832, 0, %v2842
      %2844 = vst [vmem:[#allocation2 + $0x18] sm:$0x1] %v2843
      %v2845 = vld [vmem:[#allocation2 + $0x20] sm:$0x1]
      %v2846 = vsel %vm2832, 0, %v2845
      %2847 = vst [vmem:[#allocation2 + $0x20] sm:$0x1] %v2846
      %v2848 = vld [vmem:[#allocation2 + $0x28] sm:$0x1]
      %v2849 = vsel %vm2832, 0, %v2848
      %2850 = vst [vmem:[#allocation2 + $0x28] sm:$0x1] %v2849
      %v2851 = vld [vmem:[#allocation2 + $0x30] sm:$0x1]
      %v2852 = vsel %vm2832, 0, %v2851
      %2853 = vst [vmem:[#allocation2 + $0x30] sm:$0x1] %v2852
      %v2854 = vld [vmem:[#allocation2 + $0x38] sm:$0x1]
      %v2855 = vsel %vm2832, 0, %v2854
      %2856 = vst [vmem:[#allocation2 + $0x38] sm:$0x1] %v2855
      %v2857 = vld [vmem:[#allocation2 + $0x40] sm:$0x1]
      %v2858 = vsel %vm2832, 0, %v2857
      %2859 = vst [vmem:[#allocation2 + $0x40] sm:$0x1] %v2858
      %v2860 = vld [vmem:[#allocation2 + $0x48] sm:$0x1]
      %v2861 = vsel %vm2832, 0, %v2860
      %2862 = vst [vmem:[#allocation2 + $0x48] sm:$0x1] %v2861
      %v2863 = vld [vmem:[#allocation2 + $0x50] sm:$0x1]
      %v2864 = vsel %vm2832, 0, %v2863
      %2865 = vst [vmem:[#allocation2 + $0x50] sm:$0x1] %v2864
      %v2866 = vld [vmem:[#allocation2 + $0x58] sm:$0x1]
      %v2867 = vsel %vm2832, 0, %v2866
      %2868 = vst [vmem:[#allocation2 + $0x58] sm:$0x1] %v2867
      %v2869 = vld [vmem:[#allocation2 + $0x60] sm:$0x1]
      %v2870 = vsel %vm2832, 0, %v2869
      %2871 = vst [vmem:[#allocation2 + $0x60] sm:$0x1] %v2870
      %v2872 = vld [vmem:[#allocation2 + $0x68] sm:$0x1]
      %v2873 = vsel %vm2832, 0, %v2872
      %2874 = vst [vmem:[#allocation2 + $0x68] sm:$0x1] %v2873
      %v2875 = vld [vmem:[#allocation2 + $0x70] sm:$0x1]
      %v2876 = vsel %vm2832, 0, %v2875
      %2877 = vst [vmem:[#allocation2 + $0x70] sm:$0x1] %v2876
      %v2878 = vld [vmem:[#allocation2 + $0x78] sm:$0x1]
      %v2879 = vsel %vm2832, 0, %v2878
      %2880 = vst [vmem:[#allocation2 + $0x78] sm:$0x1] %v2879
      %vm2881 = vcmask 97351
      %vm2882 = vsmask.f32 7966
      %vm2883 = vmand %vm2881, %vm2882
      %v2884 = vld [vmem:[#allocation2] sm:$0x80]
      %v2885 = vsel %vm2883, 0, %v2884
      %2886 = vst [vmem:[#allocation2] sm:$0x80] %v2885
      %v2887 = vld [vmem:[#allocation2 + $0x8] sm:$0x80]
      %v2888 = vsel %vm2883, 0, %v2887
      %2889 = vst [vmem:[#allocation2 + $0x8] sm:$0x80] %v2888
      %v2890 = vld [vmem:[#allocation2 + $0x10] sm:$0x80]
      %v2891 = vsel %vm2883, 0, %v2890
      %2892 = vst [vmem:[#allocation2 + $0x10] sm:$0x80] %v2891
      %v2893 = vld [vmem:[#allocation2 + $0x18] sm:$0x80]
      %v2894 = vsel %vm2883, 0, %v2893
      %2895 = vst [vmem:[#allocation2 + $0x18] sm:$0x80] %v2894
      %v2896 = vld [vmem:[#allocation2 + $0x20] sm:$0x80]
      %v2897 = vsel %vm2883, 0, %v2896
      %2898 = vst [vmem:[#allocation2 + $0x20] sm:$0x80] %v2897
      %v2899 = vld [vmem:[#allocation2 + $0x28] sm:$0x80]
      %v2900 = vsel %vm2883, 0, %v2899
      %2901 = vst [vmem:[#allocation2 + $0x28] sm:$0x80] %v2900
      %v2902 = vld [vmem:[#allocation2 + $0x30] sm:$0x80]
      %v2903 = vsel %vm2883, 0, %v2902
      %2904 = vst [vmem:[#allocation2 + $0x30] sm:$0x80] %v2903
      %v2905 = vld [vmem:[#allocation2 + $0x38] sm:$0x80]
      %v2906 = vsel %vm2883, 0, %v2905
      %2907 = vst [vmem:[#allocation2 + $0x38] sm:$0x80] %v2906
      %v2908 = vld [vmem:[#allocation2 + $0x40] sm:$0x80]
      %v2909 = vsel %vm2883, 0, %v2908
      %2910 = vst [vmem:[#allocation2 + $0x40] sm:$0x80] %v2909
      %v2911 = vld [vmem:[#allocation2 + $0x48] sm:$0x80]
      %v2912 = vsel %vm2883, 0, %v2911
      %2913 = vst [vmem:[#allocation2 + $0x48] sm:$0x80] %v2912
      %v2914 = vld [vmem:[#allocation2 + $0x50] sm:$0x80]
      %v2915 = vsel %vm2883, 0, %v2914
      %2916 = vst [vmem:[#allocation2 + $0x50] sm:$0x80] %v2915
      %v2917 = vld [vmem:[#allocation2 + $0x58] sm:$0x80]
      %v2918 = vsel %vm2883, 0, %v2917
      %2919 = vst [vmem:[#allocation2 + $0x58] sm:$0x80] %v2918
      %v2920 = vld [vmem:[#allocation2 + $0x60] sm:$0x80]
      %v2921 = vsel %vm2883, 0, %v2920
      %2922 = vst [vmem:[#allocation2 + $0x60] sm:$0x80] %v2921
      %v2923 = vld [vmem:[#allocation2 + $0x68] sm:$0x80]
      %v2924 = vsel %vm2883, 0, %v2923
      %2925 = vst [vmem:[#allocation2 + $0x68] sm:$0x80] %v2924
      %v2926 = vld [vmem:[#allocation2 + $0x70] sm:$0x80]
      %v2927 = vsel %vm2883, 0, %v2926
      %2928 = vst [vmem:[#allocation2 + $0x70] sm:$0x80] %v2927
      %v2929 = vld [vmem:[#allocation2 + $0x78] sm:$0x80]
      %v2930 = vsel %vm2883, 0, %v2929
      %2931 = vst [vmem:[#allocation2 + $0x78] sm:$0x80] %v2930
      %vm2932 = vcmask 122976
      %vm2933 = vmand %vm2932, %vm2831
      %v2934 = vld [vmem:[#allocation2] sm:$0x1]
      %v2935 = vsel %vm2933, 0, %v2934
      %2936 = vst [vmem:[#allocation2] sm:$0x1] %v2935
      %v2937 = vld [vmem:[#allocation2 + $0x8] sm:$0x1]
      %v2938 = vsel %vm2933, 0, %v2937
      %2939 = vst [vmem:[#allocation2 + $0x8] sm:$0x1] %v2938
      %v2940 = vld [vmem:[#allocation2 + $0x10] sm:$0x1]
      %v2941 = vsel %vm2933, 0, %v2940
      %2942 = vst [vmem:[#allocation2 + $0x10] sm:$0x1] %v2941
      %v2943 = vld [vmem:[#allocation2 + $0x18] sm:$0x1]
      %v2944 = vsel %vm2933, 0, %v2943
      %2945 = vst [vmem:[#allocation2 + $0x18] sm:$0x1] %v2944
      %v2946 = vld [vmem:[#allocation2 + $0x20] sm:$0x1]
      %v2947 = vsel %vm2933, 0, %v2946
      %2948 = vst [vmem:[#allocation2 + $0x20] sm:$0x1] %v2947
      %v2949 = vld [vmem:[#allocation2 + $0x28] sm:$0x1]
      %v2950 = vsel %vm2933, 0, %v2949
      %2951 = vst [vmem:[#allocation2 + $0x28] sm:$0x1] %v2950
      %v2952 = vld [vmem:[#allocation2 + $0x30] sm:$0x1]
      %v2953 = vsel %vm2933, 0, %v2952
      %2954 = vst [vmem:[#allocation2 + $0x30] sm:$0x1] %v2953
      %v2955 = vld [vmem:[#allocation2 + $0x38] sm:$0x1]
      %v2956 = vsel %vm2933, 0, %v2955
      %2957 = vst [vmem:[#allocation2 + $0x38] sm:$0x1] %v2956
      %v2958 = vld [vmem:[#allocation2 + $0x40] sm:$0x1]
      %v2959 = vsel %vm2933, 0, %v2958
      %2960 = vst [vmem:[#allocation2 + $0x40] sm:$0x1] %v2959
      %v2961 = vld [vmem:[#allocation2 + $0x48] sm:$0x1]
      %v2962 = vsel %vm2933, 0, %v2961
      %2963 = vst [vmem:[#allocation2 + $0x48] sm:$0x1] %v2962
      %v2964 = vld [vmem:[#allocation2 + $0x50] sm:$0x1]
      %v2965 = vsel %vm2933, 0, %v2964
      %2966 = vst [vmem:[#allocation2 + $0x50] sm:$0x1] %v2965
      %v2967 = vld [vmem:[#allocation2 + $0x58] sm:$0x1]
      %v2968 = vsel %vm2933, 0, %v2967
      %2969 = vst [vmem:[#allocation2 + $0x58] sm:$0x1] %v2968
      %v2970 = vld [vmem:[#allocation2 + $0x60] sm:$0x1]
      %v2971 = vsel %vm2933, 0, %v2970
      %2972 = vst [vmem:[#allocation2 + $0x60] sm:$0x1] %v2971
      %v2973 = vld [vmem:[#allocation2 + $0x68] sm:$0x1]
      %v2974 = vsel %vm2933, 0, %v2973
      %2975 = vst [vmem:[#allocation2 + $0x68] sm:$0x1] %v2974
      %v2976 = vld [vmem:[#allocation2 + $0x70] sm:$0x1]
      %v2977 = vsel %vm2933, 0, %v2976
      %2978 = vst [vmem:[#allocation2 + $0x70] sm:$0x1] %v2977
      %v2979 = vld [vmem:[#allocation2 + $0x78] sm:$0x1]
      %v2980 = vsel %vm2933, 0, %v2979
      %2981 = vst [vmem:[#allocation2 + $0x78] sm:$0x1] %v2980
      %vm2982 = vcmask 195751
      %vm2983 = vmand %vm2982, %vm2882
      %v2984 = vld [vmem:[#allocation2] sm:$0x80]
      %v2985 = vsel %vm2983, 0, %v2984
      %2986 = vst [vmem:[#allocation2] sm:$0x80] %v2985
      %v2987 = vld [vmem:[#allocation2 + $0x8] sm:$0x80]
      %v2988 = vsel %vm2983, 0, %v2987
      %2989 = vst [vmem:[#allocation2 + $0x8] sm:$0x80] %v2988
      %v2990 = vld [vmem:[#allocation2 + $0x10] sm:$0x80]
      %v2991 = vsel %vm2983, 0, %v2990
      %2992 = vst [vmem:[#allocation2 + $0x10] sm:$0x80] %v2991
      %v2993 = vld [vmem:[#allocation2 + $0x18] sm:$0x80]
      %v2994 = vsel %vm2983, 0, %v2993
      %2995 = vst [vmem:[#allocation2 + $0x18] sm:$0x80] %v2994
      %v2996 = vld [vmem:[#allocation2 + $0x20] sm:$0x80]
      %v2997 = vsel %vm2983, 0, %v2996
      %2998 = vst [vmem:[#allocation2 + $0x20] sm:$0x80] %v2997
      %v2999 = vld [vmem:[#allocation2 + $0x28] sm:$0x80]
      %v3000 = vsel %vm2983, 0, %v2999
      %3001 = vst [vmem:[#allocation2 + $0x28] sm:$0x80] %v3000
      %v3002 = vld [vmem:[#allocation2 + $0x30] sm:$0x80]
      %v3003 = vsel %vm2983, 0, %v3002
      %3004 = vst [vmem:[#allocation2 + $0x30] sm:$0x80] %v3003
      %v3005 = vld [vmem:[#allocation2 + $0x38] sm:$0x80]
      %v3006 = vsel %vm2983, 0, %v3005
      %3007 = vst [vmem:[#allocation2 + $0x38] sm:$0x80] %v3006
      %v3008 = vld [vmem:[#allocation2 + $0x40] sm:$0x80]
      %v3009 = vsel %vm2983, 0, %v3008
      %3010 = vst [vmem:[#allocation2 + $0x40] sm:$0x80] %v3009
      %v3011 = vld [vmem:[#allocation2 + $0x48] sm:$0x80]
      %v3012 = vsel %vm2983, 0, %v3011
      %3013 = vst [vmem:[#allocation2 + $0x48] sm:$0x80] %v3012
      %v3014 = vld [vmem:[#allocation2 + $0x50] sm:$0x80]
      %v3015 = vsel %vm2983, 0, %v3014
      %3016 = vst [vmem:[#allocation2 + $0x50] sm:$0x80] %v3015
      %v3017 = vld [vmem:[#allocation2 + $0x58] sm:$0x80]
      %v3018 = vsel %vm2983, 0, %v3017
      %3019 = vst [vmem:[#allocation2 + $0x58] sm:$0x80] %v3018
      %v3020 = vld [vmem:[#allocation2 + $0x60] sm:$0x80]
      %v3021 = vsel %vm2983, 0, %v3020
      %3022 = vst [vmem:[#allocation2 + $0x60] sm:$0x80] %v3021
      %v3023 = vld [vmem:[#allocation2 + $0x68] sm:$0x80]
      %v3024 = vsel %vm2983, 0, %v3023
      %3025 = vst [vmem:[#allocation2 + $0x68] sm:$0x80] %v3024
      %v3026 = vld [vmem:[#allocation2 + $0x70] sm:$0x80]
      %v3027 = vsel %vm2983, 0, %v3026
      %3028 = vst [vmem:[#allocation2 + $0x70] sm:$0x80] %v3027
      %v3029 = vld [vmem:[#allocation2 + $0x78] sm:$0x80]
      %v3030 = vsel %vm2983, 0, %v3029
      %3031 = vst [vmem:[#allocation2 + $0x78] sm:$0x80] %v3030
      %vm3032 = vcmask 221376
      %vm3033 = vmand %vm3032, %vm2831
      %v3034 = vld [vmem:[#allocation2] sm:$0x1]
      %v3035 = vsel %vm3033, 0, %v3034
      %3036 = vst [vmem:[#allocation2] sm:$0x1] %v3035
      %v3037 = vld [vmem:[#allocation2 + $0x8] sm:$0x1]
      %v3038 = vsel %vm3033, 0, %v3037
      %3039 = vst [vmem:[#allocation2 + $0x8] sm:$0x1] %v3038
      %v3040 = vld [vmem:[#allocation2 + $0x10] sm:$0x1]
      %v3041 = vsel %vm3033, 0, %v3040
      %3042 = vst [vmem:[#allocation2 + $0x10] sm:$0x1] %v3041
      %v3043 = vld [vmem:[#allocation2 + $0x18] sm:$0x1]
      %v3044 = vsel %vm3033, 0, %v3043
      %3045 = vst [vmem:[#allocation2 + $0x18] sm:$0x1] %v3044
      %v3046 = vld [vmem:[#allocation2 + $0x20] sm:$0x1]
      %v3047 = vsel %vm3033, 0, %v3046
      %3048 = vst [vmem:[#allocation2 + $0x20] sm:$0x1] %v3047
      %v3049 = vld [vmem:[#allocation2 + $0x28] sm:$0x1]
      %v3050 = vsel %vm3033, 0, %v3049
      %3051 = vst [vmem:[#allocation2 + $0x28] sm:$0x1] %v3050
      %v3052 = vld [vmem:[#allocation2 + $0x30] sm:$0x1]
      %v3053 = vsel %vm3033, 0, %v3052
      %3054 = vst [vmem:[#allocation2 + $0x30] sm:$0x1] %v3053
      %v3055 = vld [vmem:[#allocation2 + $0x38] sm:$0x1]
      %v3056 = vsel %vm3033, 0, %v3055
      %3057 = vst [vmem:[#allocation2 + $0x38] sm:$0x1] %v3056
      %v3058 = vld [vmem:[#allocation2 + $0x40] sm:$0x1]
      %v3059 = vsel %vm3033, 0, %v3058
      %3060 = vst [vmem:[#allocation2 + $0x40] sm:$0x1] %v3059
      %v3061 = vld [vmem:[#allocation2 + $0x48] sm:$0x1]
      %v3062 = vsel %vm3033, 0, %v3061
      %3063 = vst [vmem:[#allocation2 + $0x48] sm:$0x1] %v3062
      %v3064 = vld [vmem:[#allocation2 + $0x50] sm:$0x1]
      %v3065 = vsel %vm3033, 0, %v3064
      %3066 = vst [vmem:[#allocation2 + $0x50] sm:$0x1] %v3065
      %v3067 = vld [vmem:[#allocation2 + $0x58] sm:$0x1]
      %v3068 = vsel %vm3033, 0, %v3067
      %3069 = vst [vmem:[#allocation2 + $0x58] sm:$0x1] %v3068
      %v3070 = vld [vmem:[#allocation2 + $0x60] sm:$0x1]
      %v3071 = vsel %vm3033, 0, %v3070
      %3072 = vst [vmem:[#allocation2 + $0x60] sm:$0x1] %v3071
      %v3073 = vld [vmem:[#allocation2 + $0x68] sm:$0x1]
      %v3074 = vsel %vm3033, 0, %v3073
      %3075 = vst [vmem:[#allocation2 + $0x68] sm:$0x1] %v3074
      %v3076 = vld [vmem:[#allocation2 + $0x70] sm:$0x1]
      %v3077 = vsel %vm3033, 0, %v3076
      %3078 = vst [vmem:[#allocation2 + $0x70] sm:$0x1] %v3077
      %v3079 = vld [vmem:[#allocation2 + $0x78] sm:$0x1]
      %v3080 = vsel %vm3033, 0, %v3079
      %3081 = vst [vmem:[#allocation2 + $0x78] sm:$0x1] %v3080
      %vm3082 = vcmask 294151
      %vm3083 = vmand %vm3082, %vm2882
      %v3084 = vld [vmem:[#allocation2] sm:$0x80]
      %v3085 = vsel %vm3083, 0, %v3084
      %3086 = vst [vmem:[#allocation2] sm:$0x80] %v3085
      %v3087 = vld [vmem:[#allocation2 + $0x8] sm:$0x80]
      %v3088 = vsel %vm3083, 0, %v3087
      %3089 = vst [vmem:[#allocation2 + $0x8] sm:$0x80] %v3088
      %v3090 = vld [vmem:[#allocation2 + $0x10] sm:$0x80]
      %v3091 = vsel %vm3083, 0, %v3090
      %3092 = vst [vmem:[#allocation2 + $0x10] sm:$0x80] %v3091
      %v3093 = vld [vmem:[#allocation2 + $0x18] sm:$0x80]
      %v3094 = vsel %vm3083, 0, %v3093
      %3095 = vst [vmem:[#allocation2 + $0x18] sm:$0x80] %v3094
      %v3096 = vld [vmem:[#allocation2 + $0x20] sm:$0x80]
      %v3097 = vsel %vm3083, 0, %v3096
      %3098 = vst [vmem:[#allocation2 + $0x20] sm:$0x80] %v3097
      %v3099 = vld [vmem:[#allocation2 + $0x28] sm:$0x80]
      %v3100 = vsel %vm3083, 0, %v3099
      %3101 = vst [vmem:[#allocation2 + $0x28] sm:$0x80] %v3100
      %v3102 = vld [vmem:[#allocation2 + $0x30] sm:$0x80]
      %v3103 = vsel %vm3083, 0, %v3102
      %3104 = vst [vmem:[#allocation2 + $0x30] sm:$0x80] %v3103
      %v3105 = vld [vmem:[#allocation2 + $0x38] sm:$0x80]
      %v3106 = vsel %vm3083, 0, %v3105
      %3107 = vst [vmem:[#allocation2 + $0x38] sm:$0x80] %v3106
      %v3108 = vld [vmem:[#allocation2 + $0x40] sm:$0x80]
      %v3109 = vsel %vm3083, 0, %v3108
      %3110 = vst [vmem:[#allocation2 + $0x40] sm:$0x80] %v3109
      %v3111 = vld [vmem:[#allocation2 + $0x48] sm:$0x80]
      %v3112 = vsel %vm3083, 0, %v3111
      %3113 = vst [vmem:[#allocation2 + $0x48] sm:$0x80] %v3112
      %v3114 = vld [vmem:[#allocation2 + $0x50] sm:$0x80]
      %v3115 = vsel %vm3083, 0, %v3114
      %3116 = vst [vmem:[#allocation2 + $0x50] sm:$0x80] %v3115
      %v3117 = vld [vmem:[#allocation2 + $0x58] sm:$0x80]
      %v3118 = vsel %vm3083, 0, %v3117
      %3119 = vst [vmem:[#allocation2 + $0x58] sm:$0x80] %v3118
      %v3120 = vld [vmem:[#allocation2 + $0x60] sm:$0x80]
      %v3121 = vsel %vm3083, 0, %v3120
      %3122 = vst [vmem:[#allocation2 + $0x60] sm:$0x80] %v3121
      %v3123 = vld [vmem:[#allocation2 + $0x68] sm:$0x80]
      %v3124 = vsel %vm3083, 0, %v3123
      %3125 = vst [vmem:[#allocation2 + $0x68] sm:$0x80] %v3124
      %v3126 = vld [vmem:[#allocation2 + $0x70] sm:$0x80]
      %v3127 = vsel %vm3083, 0, %v3126
      %3128 = vst [vmem:[#allocation2 + $0x70] sm:$0x80] %v3127
      %v3129 = vld [vmem:[#allocation2 + $0x78] sm:$0x80]
      %v3130 = vsel %vm3083, 0, %v3129
      %3131 = vst [vmem:[#allocation2 + $0x78] sm:$0x80] %v3130
      %p3132 = scmp.eq.s32.totalorder %s21, 0
      // Predicated region
      $region41: #{separable_conv_block.1} parent=39 // pred_check
        %p3133 = pneg %p3132
      $region42: #{separable_conv_block.1} parent=39 // pred_check_branch
        %3135 = sbr.rel (%p3133) target = $region44
      $region43: #{separable_conv_block.1} parent=39 // pred_region
        %vm3136 = vcmask 97280
        %3137 = vst.msk [vmem:[#allocation2] sm:$0xff] %vm3136, 0
        %vm3138 = vcmask 294080
        %3139 = vst.msk [vmem:[%s2327] sm:$0xff] %vm3138, 0
      $region44: #{separable_conv_block.1} parent=39 // pred_fallthru
        _
      %v3140 = vld [vmem:[#allocation2] sm:$0xff]
      %v3141 = vld [vmem:[#allocation2 + $0x8] sm:$0xff]
      %v3142 = vld [vmem:[#allocation2 + $0x10] sm:$0xff]
      %v3143 = vld [vmem:[#allocation2 + $0x18] sm:$0xff]
      %v3144 = vld [vmem:[#allocation2 + $0x20] sm:$0xff]
      %v3145 = vld [vmem:[#allocation2 + $0x28] sm:$0xff]
      %v3146 = vld [vmem:[#allocation2 + $0x30] sm:$0xff]
      %v3147 = vld [vmem:[#allocation2 + $0x38] sm:$0xff]
      %v3148 = vld [vmem:[#allocation2 + $0x40] sm:$0xff]
      %v3149 = vld [vmem:[#allocation2 + $0x48] sm:$0xff]
      %v3150 = vld [vmem:[#allocation2 + $0x50] sm:$0xff]
      %v3151 = vld [vmem:[#allocation2 + $0x58] sm:$0xff]
      %v3152 = vld [vmem:[#allocation2 + $0x60] sm:$0xff]
      %v3153 = vld [vmem:[#allocation2 + $0x68] sm:$0xff]
      %v3154 = vld [vmem:[#allocation2 + $0x70] sm:$0xff]
      %v3155 = vld [vmem:[#allocation2 + $0x78] sm:$0xff]
      %v3156 = vld [vmem:[%s3] sm:$0xf]
      %v3157 = vld [vmem:[%s3 + $0x4] sm:$0xf]
      %v3158 = vld [vmem:[%s3 + $0x8] sm:$0xf]
      %v3159 = vld [vmem:[%s3 + $0xc] sm:$0xf]
      %v3160 = vld [vmem:[%s3 + $0x10] sm:$0x3]
      %v3161 = vld [vmem:[%s4] sm:$0x1]
      %v3163 = vlaneseq
      %v3164 = vshrl.u32 %v3163, 7
      %v3165 = vsub.s32 0, %v3164
      %v3166 = vrot.slane %v3161, %v3165
      %v3173 = vunpack.c.l.b16 %v3156
      %v3174 = vunpack.c.l.b16 %v3157
      %v3175 = vunpack.c.l.b16 %v3158
      %v3176 = vunpack.c.l.b16 %v3159
      %v3177 = vunpack.c.l.b16 %v3160
      %v3178 = vpack.c.b16 %v3174, %v3173
      %v3179 = vpack.c.b16 %v3176, %v3175
      %v3180 = vpack.c.b16 %v3177, %v3177
      %vm3183 = vcmask 293888
      %v3185 = vsel %vm3183, %v3140, 0
      %v3188 = vsel %vm3183, %v3141, 0
      %v3191 = vsel %vm3183, %v3142, 0
      %v3194 = vsel %vm3183, %v3143, 0
      %v3197 = vsel %vm3183, %v3144, 0
      %v3200 = vsel %vm3183, %v3145, 0
      %v3203 = vsel %vm3183, %v3146, 0
      %v3206 = vsel %vm3183, %v3147, 0
      %v3209 = vsel %vm3183, %v3148, 0
      %v3212 = vsel %vm3183, %v3149, 0
      %v3215 = vsel %vm3183, %v3150, 0
      %v3218 = vsel %vm3183, %v3151, 0
      %v3221 = vsel %vm3183, %v3152, 0
      %v3224 = vsel %vm3183, %v3153, 0
      %v3227 = vsel %vm3183, %v3154, 0
      %v3230 = vsel %vm3183, %v3155, 0
      %vm3232 = vcmask 1041408
      %v3234 = vsel %vm3232, %v3180, 0
      %3236 = vmatprep.subr.bf16.mxu0 0
      %3237 = vmatpush1.bf16.msra.mxu0 %v3178
      %3238 = vmatprep.subr.bf16.mxu0 0
      %3239 = vmatpush1.bf16.msra.mxu0 %v3179
      %3240 = vmatprep.subr.bf16.mxu0 0
      %3241 = vmatpush1.bf16.msra.mxu0 %v3234
      %3242 = vmatprep.subr.bf16.mxu0 0
      %3243 = vmatpush1.bf16.msra.mxu0 0
      %3244 = vmatprep.subr.bf16.mxu0 0
      %3245 = vmatpush1.bf16.msra.mxu0 0
      %3246 = vmatprep.subr.bf16.mxu0 0
      %3247 = vmatpush1.bf16.msra.mxu0 0
      %3248 = vmatprep.subr.bf16.mxu0 0
      %3249 = vmatpush1.bf16.msra.mxu0 0
      %3250 = vmatprep.subr.bf16.mxu0 0
      %3251 = vmatpush1.bf16.msra.mxu0 0
      %3252 = vmatprep.subr.bf16.mxu0 0
      %3253 = vmatpush1.bf16.msra.mxu0 0
      %3254 = vmatprep.subr.bf16.mxu0 0
      %3255 = vmatpush1.bf16.msra.mxu0 0
      %3256 = vmatprep.subr.bf16.mxu0 0
      %3257 = vmatpush1.bf16.msra.mxu0 0
      %3258 = vmatprep.subr.bf16.mxu0 0
      %3259 = vmatpush1.bf16.msra.mxu0 0
      %3260 = vmatprep.subr.bf16.mxu0 0
      %3261 = vmatpush1.bf16.msra.mxu0 0
      %3262 = vmatprep.subr.bf16.mxu0 0
      %3263 = vmatpush1.bf16.msra.mxu0 0
      %3264 = vmatprep.subr.bf16.mxu0 0
      %3265 = vmatpush1.bf16.msra.mxu0 0
      %3266 = vmatprep.subr.bf16.mxu0 0
      %3267 = vmatpush1.bf16.msra.mxu0 0
      %3268 = vmatprep.mubr.bf16.mxu0 0
      %3269 = vmatmul.mubr.bf16.gmra.mrb[0].mxu0 %v3185
      %v3270 = vpop.f32.mrb[0].mxu0
      %v3271 = vadd.f32 %v3166, %v3270
      %v3272 = vpop.f32.mrb[0].mxu0
      %v3273 = vpop.f32.mrb[0].mxu0
      %v3274 = vadd.f32 %v3166, %v3273
      %v3275 = vpop.f32.mrb[0].mxu0
      %3276 = vmatprep.mubr.bf16.mxu0 0
      %3277 = vmatmul.mubr.bf16.gmra.mrb[0].mxu0 %v3188
      %v3278 = vpop.f32.mrb[0].mxu0
      %v3279 = vadd.f32 %v3166, %v3278
      %v3280 = vpop.f32.mrb[0].mxu0
      %v3281 = vpop.f32.mrb[0].mxu0
      %v3282 = vadd.f32 %v3166, %v3281
      %v3283 = vpop.f32.mrb[0].mxu0
      %3284 = vmatprep.mubr.bf16.mxu0 0
      %3285 = vmatmul.mubr.bf16.gmra.mrb[0].mxu0 %v3191
      %v3286 = vpop.f32.mrb[0].mxu0
      %v3287 = vadd.f32 %v3166, %v3286
      %v3288 = vpop.f32.mrb[0].mxu0
      %v3289 = vpop.f32.mrb[0].mxu0
      %v3290 = vadd.f32 %v3166, %v3289
      %v3291 = vpop.f32.mrb[0].mxu0
      %3292 = vmatprep.mubr.bf16.mxu0 0
      %3293 = vmatmul.mubr.bf16.gmra.mrb[0].mxu0 %v3194
      %v3294 = vpop.f32.mrb[0].mxu0
      %v3295 = vadd.f32 %v3166, %v3294
      %v3296 = vpop.f32.mrb[0].mxu0
      %v3297 = vpop.f32.mrb[0].mxu0
      %v3298 = vadd.f32 %v3166, %v3297
      %v3299 = vpop.f32.mrb[0].mxu0
      %3300 = vmatprep.mubr.bf16.mxu0 0
      %3301 = vmatmul.mubr.bf16.gmra.mrb[0].mxu0 %v3197
      %v3302 = vpop.f32.mrb[0].mxu0
      %v3303 = vadd.f32 %v3166, %v3302
      %v3304 = vpop.f32.mrb[0].mxu0
      %v3305 = vpop.f32.mrb[0].mxu0
      %v3306 = vadd.f32 %v3166, %v3305
      %v3307 = vpop.f32.mrb[0].mxu0
      %3308 = vmatprep.mubr.bf16.mxu0 0
      %3309 = vmatmul.mubr.bf16.gmra.mrb[0].mxu0 %v3200
      %v3310 = vpop.f32.mrb[0].mxu0
      %v3311 = vadd.f32 %v3166, %v3310
      %v3312 = vpop.f32.mrb[0].mxu0
      %v3313 = vpop.f32.mrb[0].mxu0
      %v3314 = vadd.f32 %v3166, %v3313
      %v3315 = vpop.f32.mrb[0].mxu0
      %3316 = vmatprep.mubr.bf16.mxu0 0
      %3317 = vmatmul.mubr.bf16.gmra.mrb[0].mxu0 %v3203
      %v3318 = vpop.f32.mrb[0].mxu0
      %v3319 = vadd.f32 %v3166, %v3318
      %v3320 = vpop.f32.mrb[0].mxu0
      %v3321 = vpop.f32.mrb[0].mxu0
      %v3322 = vadd.f32 %v3166, %v3321
      %v3323 = vpop.f32.mrb[0].mxu0
      %3324 = vmatprep.mubr.bf16.mxu0 0
      %3325 = vmatmul.mubr.bf16.gmra.mrb[0].mxu0 %v3206
      %v3326 = vpop.f32.mrb[0].mxu0
      %v3327 = vadd.f32 %v3166, %v3326
      %v3328 = vpop.f32.mrb[0].mxu0
      %v3329 = vpop.f32.mrb[0].mxu0
      %v3330 = vadd.f32 %v3166, %v3329
      %v3331 = vpop.f32.mrb[0].mxu0
      %3332 = vmatprep.mubr.bf16.mxu0 0
      %3333 = vmatmul.mubr.bf16.gmra.mrb[0].mxu0 %v3209
      %v3334 = vpop.f32.mrb[0].mxu0
      %v3335 = vadd.f32 %v3166, %v3334
      %v3336 = vpop.f32.mrb[0].mxu0
      %v3337 = vpop.f32.mrb[0].mxu0
      %v3338 = vadd.f32 %v3166, %v3337
      %v3339 = vpop.f32.mrb[0].mxu0
      %3340 = vmatprep.mubr.bf16.mxu0 0
      %3341 = vmatmul.mubr.bf16.gmra.mrb[0].mxu0 %v3212
      %v3342 = vpop.f32.mrb[0].mxu0
      %v3343 = vadd.f32 %v3166, %v3342
      %v3344 = vpop.f32.mrb[0].mxu0
      %v3345 = vpop.f32.mrb[0].mxu0
      %v3346 = vadd.f32 %v3166, %v3345
      %v3347 = vpop.f32.mrb[0].mxu0
      %3348 = vmatprep.mubr.bf16.mxu0 0
      %3349 = vmatmul.mubr.bf16.gmra.mrb[0].mxu0 %v3215
      %v3350 = vpop.f32.mrb[0].mxu0
      %v3351 = vadd.f32 %v3166, %v3350
      %v3352 = vpop.f32.mrb[0].mxu0
      %v3353 = vpop.f32.mrb[0].mxu0
      %v3354 = vadd.f32 %v3166, %v3353
      %v3355 = vpop.f32.mrb[0].mxu0
      %3356 = vmatprep.mubr.bf16.mxu0 0
      %3357 = vmatmul.mubr.bf16.gmra.mrb[0].mxu0 %v3218
      %v3358 = vpop.f32.mrb[0].mxu0
      %v3359 = vadd.f32 %v3166, %v3358
      %v3360 = vpop.f32.mrb[0].mxu0
      %v3361 = vpop.f32.mrb[0].mxu0
      %v3362 = vadd.f32 %v3166, %v3361
      %v3363 = vpop.f32.mrb[0].mxu0
      %3364 = vmatprep.mubr.bf16.mxu0 0
      %3365 = vmatmul.mubr.bf16.gmra.mrb[0].mxu0 %v3221
      %v3366 = vpop.f32.mrb[0].mxu0
      %v3367 = vadd.f32 %v3166, %v3366
      %v3368 = vpop.f32.mrb[0].mxu0
      %v3369 = vpop.f32.mrb[0].mxu0
      %v3370 = vadd.f32 %v3166, %v3369
      %v3371 = vpop.f32.mrb[0].mxu0
      %3372 = vmatprep.mubr.bf16.mxu0 0
      %3373 = vmatmul.mubr.bf16.gmra.mrb[0].mxu0 %v3224
      %v3374 = vpop.f32.mrb[0].mxu0
      %v3375 = vadd.f32 %v3166, %v3374
      %v3376 = vpop.f32.mrb[0].mxu0
      %v3377 = vpop.f32.mrb[0].mxu0
      %v3378 = vadd.f32 %v3166, %v3377
      %v3379 = vpop.f32.mrb[0].mxu0
      %3380 = vmatprep.mubr.bf16.mxu0 0
      %3381 = vmatmul.mubr.bf16.gmra.mrb[0].mxu0 %v3227
      %v3382 = vpop.f32.mrb[0].mxu0
      %v3383 = vadd.f32 %v3166, %v3382
      %v3384 = vpop.f32.mrb[0].mxu0
      %v3385 = vpop.f32.mrb[0].mxu0
      %v3386 = vadd.f32 %v3166, %v3385
      %v3387 = vpop.f32.mrb[0].mxu0
      %3388 = vmatprep.mubr.bf16.mxu0 0
      %3389 = vmatmul.mubr.bf16.gmra.mrb[0].mxu0 %v3230
      %v3390 = vpop.f32.mrb[0].mxu0
      %v3391 = vadd.f32 %v3166, %v3390
      %v3392 = vpop.f32.mrb[0].mxu0
      %v3393 = vpop.f32.mrb[0].mxu0
      %v3394 = vadd.f32 %v3166, %v3393
      %v3395 = vpop.f32.mrb[0].mxu0
      %3396 = vdwg.mxu0
      %3397 = vst [vmem:[%s391] sm:$0xff] %v3271
      %3398 = vst [vmem:[%s391 + $0x8] sm:$0xff] %v3274
      %3399 = vst [vmem:[%s391 + $0x10] sm:$0xff] %v3279
      %3400 = vst [vmem:[%s391 + $0x18] sm:$0xff] %v3282
      %3401 = vst [vmem:[%s391 + $0x20] sm:$0xff] %v3287
      %3402 = vst [vmem:[%s391 + $0x28] sm:$0xff] %v3290
      %3403 = vst [vmem:[%s391 + $0x30] sm:$0xff] %v3295
      %3404 = vst [vmem:[%s391 + $0x38] sm:$0xff] %v3298
      %3405 = vst [vmem:[%s391 + $0x40] sm:$0xff] %v3303
      %3406 = vst [vmem:[%s391 + $0x48] sm:$0xff] %v3306
      %3407 = vst [vmem:[%s391 + $0x50] sm:$0xff] %v3311
      %3408 = vst [vmem:[%s391 + $0x58] sm:$0xff] %v3314
      %3409 = vst [vmem:[%s391 + $0x60] sm:$0xff] %v3319
      %3410 = vst [vmem:[%s391 + $0x68] sm:$0xff] %v3322
      %3411 = vst [vmem:[%s391 + $0x70] sm:$0xff] %v3327
      %3412 = vst [vmem:[%s391 + $0x78] sm:$0xff] %v3330
      %3413 = vst [vmem:[%s391 + $0x80] sm:$0xff] %v3335
      %3414 = vst [vmem:[%s391 + $0x88] sm:$0xff] %v3338
      %3415 = vst [vmem:[%s391 + $0x90] sm:$0xff] %v3343
      %3416 = vst [vmem:[%s391 + $0x98] sm:$0xff] %v3346
      %3417 = vst [vmem:[%s391 + $0xa0] sm:$0xff] %v3351
      %3418 = vst [vmem:[%s391 + $0xa8] sm:$0xff] %v3354
      %3419 = vst [vmem:[%s391 + $0xb0] sm:$0xff] %v3359
      %3420 = vst [vmem:[%s391 + $0xb8] sm:$0xff] %v3362
      %3421 = vst [vmem:[%s391 + $0xc0] sm:$0xff] %v3367
      %3422 = vst [vmem:[%s391 + $0xc8] sm:$0xff] %v3370
      %3423 = vst [vmem:[%s391 + $0xd0] sm:$0xff] %v3375
      %3424 = vst [vmem:[%s391 + $0xd8] sm:$0xff] %v3378
      %3425 = vst [vmem:[%s391 + $0xe0] sm:$0xff] %v3383
      %3426 = vst [vmem:[%s391 + $0xe8] sm:$0xff] %v3386
      %3427 = vst [vmem:[%s391 + $0xf0] sm:$0xff] %v3391
      %3428 = vst [vmem:[%s391 + $0xf8] sm:$0xff] %v3394
      %s3429 = smul.u32 16, %s21
      %p3430 = scmp.lt.s32.totalorder %s20, 1
      %s3431 = scalar_select %p3430, %s20, 1
      %p3432 = scmp.lt.s32.totalorder %s3429, 15
      %s3433 = scalar_select %p3432, %s3429, 15
      %s3434 = smul.addr %s3433, 2
      %s3435 = smul.addr %s3431, 32
      %s3436 = sadd.s32 %s3434, %s3435
      %s3437 = smul.addr %s3436, 8
      %s3438 = scalar_lea.vmem %s5, %s3437
      // Predicated region
      $region45: #{separable_conv_block.1} parent=39 // pred_check
        %p3439 = pneg %p190
      $region46: #{separable_conv_block.1} parent=39 // pred_check_branch
        %3441 = sbr.rel (%p3439) target = $region48
      $region47: #{separable_conv_block.1} parent=39 // pred_region
        %s3442 = smul.u32 16, %s21
      $region48: #{separable_conv_block.1} parent=39 // pred_fallthru
        _
    $region40: #{separable_conv_block.1} parent=5 // pred_fallthru
      _
    %p3443 = scmp.le.s32.totalorder 2, %s11
    // Predicated region
    $region49: #{separable_conv_block.1} parent=5 // pred_check
      %p3444 = pneg %p3443
    $region50: #{separable_conv_block.1} parent=5 // pred_check_branch
      %3446 = sbr.rel (%p3444) target = $region52
    $region51: #{separable_conv_block.1} parent=5 // pred_region
      %s3447 = ssub.s32 %s11, 2
      // Predicated region
      $region53: #{separable_conv_block.1} parent=51 // pred_check
        %p3448 = pneg %p196
      $region54: #{separable_conv_block.1} parent=51 // pred_check_branch
        %3450 = sbr.rel (%p3448) target = $region56
      $region55: #{separable_conv_block.1} parent=51 // pred_region
        %s3451 = smul.u32 16, %s23
        %p3452 = scmp.lt.s32.totalorder %s22, 1
        %s3453 = scalar_select %p3452, %s22, 1
        %p3454 = scmp.lt.s32.totalorder %s3451, 15
        %s3455 = scalar_select %p3454, %s3451, 15
        %s3456 = smul.addr %s3455, 2
        %s3457 = smul.addr %s3453, 32
        %s3458 = sadd.s32 %s3456, %s3457
        %s3459 = smul.addr %s3458, 8
        %s3460 = scalar_lea.vmem %s5, %s3459
      $region56: #{separable_conv_block.1} parent=51 // pred_fallthru
        _
    $region52: #{separable_conv_block.1} parent=5 // pred_fallthru
      _
  $region6: #{separable_conv_block.1} parent=0 // loop_footer
    %s15 = sadd.s32 1, %s11
  $region7: #{separable_conv_block.1} parent=0 // loop_footer_branch
    %10 = sbr.rel target = $region3
  $region8: #{separable_conv_block.1} parent=0 // loop_exit
    _

</llo_original>
